<compile_context>
chip_gen: v5e
topology: v5e:2x2
jax: 0.10.0
libtpu: 0.0.40
codegen_flags: <defaults>
</compile_context>

<pallas_src>
import math

import numpy as np
import jax
import jax.numpy as jnp
from jax.experimental import pallas as pl
from jax.experimental.pallas import tpu as pltpu

# ----------------------------- problem sizes -----------------------------
DOF = 7          # robot_world.kinematics.get_dof()
N_SPHERES = 8    # link_spheres.shape[0]
BATCH = 4

Q_FEATURE_DIMS = 7
FINAL_FEATURE_DIMS = N_SPHERES * 5 + 7 + 1 + 1 + 7      # 56

LANES = 128       # lane tile
ROW_TILE_MAX = 256
NEG = -1.0e9

# ----------------- constant-pack row indices (one (32,512) f32 input) -----------------
ROW_B1, ROW_B2, ROW_B3, ROW_B4 = 0, 1, 2, 3      # feature-MLP biases
ROW_C1, ROW_C2, ROW_C3, ROW_C4 = 4, 5, 6, 7      # final-MLP biases
ROW_BSCALE = 8      # joint bound_scale              (lanes 0..6)
ROW_OBS = 9         # obstacle centre                (x in 0..7, y in 8..15, z in 16..23)
ROW_RADSDF = 10     # radii + obstacle radius        (lanes 0..7), -1e9 elsewhere
ROW_RADF = 11       # sphere radii placed at feature lanes 48..55
ROW_E0 = 12         # one-hot lane 0   (+[1,0,0,0] for the quaternion)
ROW_E39 = 13        # one-hot lane 39  (q_self feature slot)
ROW_E40 = 14        # one-hot lane 40  (pose-distance feature slot)
ROW_MCEN = 15       # mask lanes 0..23  (sphere centres)
ROW_MEEP = 16       # mask lanes 24..26 (ee position)
ROW_MQ4 = 17        # mask lanes 0..3   (quaternion)
ROW_MP3 = 18        # mask lanes 0..2   (position)
ROW_PAIR0 = 19      # rows 19..25: r_s + r_{s+k} for k=1..7, -1e9 on invalid lanes
N_CONST_ROWS = 32   # padded to a sublane multiple
CONST_W = 512


# ----------------------------- fused Pallas kernel -----------------------------
def _curobo_fused_kernel(x_ref, w1, w2_hbm, w3_hbm, w4, v1, v2_hbm, v3, v4,
                         akin, c_ref, o_ref, w2v, w3v, v2v, sem):
    """Whole CuroboTorch.forward in one kernel (weights bf16, math f32)."""
    step = pl.program_id(0)

    def crow(i, w=LANES):                       # (1, w) constant row (aligned lane slice)
        return c_ref[i:i + 1, :w]

    def roll(val, shift):                       # lane roll, jnp.roll semantics
        return pltpu.roll(val, shift % LANES, axis=1)

    def bdot(a, w_ref):                         # bf16 MXU matmul, f32 accumulation
        return jnp.dot(a.astype(jnp.bfloat16), w_ref[...],
                       preferred_element_type=jnp.float32)

    # Kick off the big, late-used weight DMAs immediately so the layer chain and the
    # geometry section below are hidden under them (first grid step only; the VMEM
    # scratch persists across grid steps).
    @pl.when(step == 0)
    def _():
        pltpu.make_async_copy(w2_hbm, w2v, sem.at[0]).start()
        pltpu.make_async_copy(w3_hbm, w3v, sem.at[1]).start()
        pltpu.make_async_copy(v2_hbm, v2v, sem.at[2]).start()

    x = x_ref[...]                              # (rows,128): des_pos lanes 0..2, des_quat 3..6
    rows = x.shape[0]

    # --------------- feature MLP (7 -> 512 -> 512 -> 512 -> dof, padded) ---------------
    h = jnp.clip(bdot(x, w1) + crow(ROW_B1, 512), 0.0, 6.0)            # ReLU6

    @pl.when(step == 0)
    def _():
        pltpu.make_async_copy(w2_hbm, w2v, sem.at[0]).wait()
    h = jnp.clip(bdot(h, w2v) + crow(ROW_B2, 512), 0.0, 6.0)

    @pl.when(step == 0)
    def _():
        pltpu.make_async_copy(w3_hbm, w3v, sem.at[1]).wait()
    h = jnp.clip(bdot(h, w3v) + crow(ROW_B3, 512), 0.0, 6.0)

    # bound_scale is folded into akin's rows, so q stays unscaled here.
    q = jnp.tanh(bdot(h, w4) + crow(ROW_B4))                           # (rows,128), lanes 0..6

    # --------------- synthetic robot-world features (in-kernel) ------------------------
    # TODO(synk): curobo's RobotWorld (CUDA forward kinematics, warp SDF, self-collision)
    # has no Pallas equivalent; a deterministic synthetic stand-in with identical feature
    # shapes is computed here instead.
    kin = bdot(q, akin)                                                 # (rows,128)
    sp = 0.5 * jnp.tanh(kin)     # sphere centres x|y|z at lanes 0..23, ee_pos at 24..26

    # obstacle SDF per sphere: relu((r_obs + r_s) - |c_s - c_obs|)
    d = sp - crow(ROW_OBS)
    d2 = d * d
    dist2 = d2 + roll(d2, -8) + roll(d2, -16)                           # lanes 0..7
    sdf = jnp.maximum(crow(ROW_RADSDF) - jnp.sqrt(dist2), 0.0)          # lanes 0..7

    # self-collision: relu(max_{i<j} (r_i + r_j - |c_i - c_j|))
    m = jnp.full((rows, LANES), NEG, dtype=jnp.float32)
    for k in range(1, N_SPHERES):
        dk = sp - roll(sp, -k)
        dk2 = dk * dk
        dist2k = dk2 + roll(dk2, -8) + roll(dk2, -16)
        m = jnp.maximum(m, crow(ROW_PAIR0 + k - 1) - jnp.sqrt(dist2k))
    q_self = jnp.maximum(jnp.max(m, axis=-1, keepdims=True), 0.0)       # (rows,1)

    # end-effector pose
    ee_pos = sp * crow(ROW_MEEP)                                        # lanes 24..26
    quat_pre = roll(kin, -27) * crow(ROW_MQ4) + crow(ROW_E0)            # lanes 0..3
    qn2 = jnp.sum(quat_pre * quat_pre, axis=-1, keepdims=True)
    ee_quat = quat_pre * jax.lax.rsqrt(qn2 + 1e-12)                     # eps: no NaN

    # pose distance to x_des
    dp = x - roll(ee_pos, -24)
    dpos2 = jnp.sum(dp * dp * crow(ROW_MP3), axis=-1, keepdims=True)
    dotq = jnp.sum(roll(x, -3) * ee_quat, axis=-1, keepdims=True)
    pdist = jnp.sqrt(dpos2) + 1.0 - jnp.abs(dotq)                       # (rows,1)

    # assemble the 56-wide feature slab (lane-disjoint pieces, zero elsewhere)
    feat = (sp * crow(ROW_MCEN)         # sphere centres   -> lanes  0..23
            + roll(sdf, 24)             # obstacle sdf     -> lanes 24..31
            + roll(ee_pos, 8)           # ee position      -> lanes 32..34
            + roll(ee_quat, 35)         # ee quaternion    -> lanes 35..38
            + q_self * crow(ROW_E39)    # self collision   -> lane  39
            + pdist * crow(ROW_E40)     # pose distance    -> lane  40
            + roll(x, 41)               # des pos+quat     -> lanes 41..47
            + crow(ROW_RADF))           # sphere radii     -> lanes 48..55

    # --------------- final MLP (56 -> 256 -> 256 -> 64 -> dof, padded) -----------------
    g = jnp.clip(bdot(feat, v1) + crow(ROW_C1, 256), 0.0, 6.0)

    @pl.when(step == 0)
    def _():
        pltpu.make_async_copy(v2_hbm, v2v, sem.at[2]).wait()
    g = jnp.clip(bdot(g, v2v) + crow(ROW_C2, 256), 0.0, 6.0)
    g = jnp.clip(bdot(g, v3) + crow(ROW_C3), 0.0, 6.0)
    o_ref[...] = crow(ROW_BSCALE) * jnp.tanh(bdot(g, v4) + crow(ROW_C4))


# -------------------------- parameter / constant construction --------------------------
def _uniform(key, shape, bound):
    return jax.random.uniform(key, shape, jnp.float32, -bound, bound)


def _linear(key, fan_in, fan_out):
    """PyTorch default Linear init (uniform +/- 1/sqrt(fan_in)), deterministic."""
    kw, kb = jax.random.split(key)
    bound = 1.0 / math.sqrt(fan_in)
    return _uniform(kw, (fan_in, fan_out), bound), _uniform(kb, (fan_out,), bound)


def _pad_bf16(w, shape):
    out = np.zeros(shape, np.float32)
    out[: w.shape[0], : w.shape[1]] = np.asarray(w)
    return jnp.asarray(out).astype(jnp.bfloat16)


def build_model(key):
    k = jax.random.split(key, 11)
    # feature MLP   (7 -> 512 -> 512 -> 512 -> DOF)
    w1f, b1 = _linear(k[0], Q_FEATURE_DIMS, 512)
    w2f, b2 = _linear(k[1], 512, 512)
    w3f, b3 = _linear(k[2], 512, 512)
    w4f, b4 = _linear(k[3], 512, DOF)
    # final MLP     (56 -> 256 -> 256 -> 64 -> DOF)
    v1f, c1 = _linear(k[4], FINAL_FEATURE_DIMS, 256)
    v2f, c2 = _linear(k[5], 256, 256)
    v3f, c3 = _linear(k[6], 256, 64)
    v4f, c4 = _linear(k[7], 64, DOF)

    # synthetic robot-world constants (deterministic stand-in for curobo RobotWorld)
    a_cent = 0.3 * jax.random.normal(k[8], (DOF, 3 * N_SPHERES), jnp.float32)
    a_pos = 0.3 * jax.random.normal(k[9], (DOF, 3), jnp.float32)
    a_quat = 0.3 * jax.random.normal(k[10], (DOF, 4), jnp.float32)
    radii = 0.05 + 0.01 * np.arange(N_SPHERES, dtype=np.float32)
    obstacle = np.array([0.4, 0.0, 0.3], np.float32)
    obstacle_r = np.float32(0.1)
    bound_scale = np.array([2.8, 1.7, 2.8, 3.0, 2.8, 3.7, 2.8], np.float32)

    # bf16 weights, zero-padded to lane-friendly shapes
    w1 = _pad_bf16(w1f, (LANES, 512))
    w2 = _pad_bf16(w2f, (512, 512))
    w3 = _pad_bf16(w3f, (512, 512))
    w4 = _pad_bf16(w4f, (512, LANES))
    v1 = _pad_bf16(v1f, (LANES, 256))     # rows 0..55 correspond to the feature-lane layout
    v2 = _pad_bf16(v2f, (256, 256))
    v3 = _pad_bf16(v3f, (256, LANES))
    v4 = _pad_bf16(v4f, (LANES, LANES))

    # kinematics map: q (lanes 0..6) -> [centres x|y|z (0..23), ee_pos (24..26), quat_raw (27..30)]
    # bound_scale is folded into its rows (q_scale = bound_scale * tanh(.) only feeds kin).
    akin_np = np.zeros((LANES, LANES), np.float32)
    akin_np[:DOF, 0:3 * N_SPHERES] = np.asarray(a_cent)
    akin_np[:DOF, 24:27] = np.asarray(a_pos)
    akin_np[:DOF, 27:31] = np.asarray(a_quat)
    akin_np[:DOF, :] *= bound_scale[:, None]
    akin = jnp.asarray(akin_np).astype(jnp.bfloat16)

    # single packed constant buffer (biases + scale + geometry rows + masks)
    c = np.zeros((N_CONST_ROWS, CONST_W), np.float32)
    c[ROW_B1, :512] = np.asarray(b1)
    c[ROW_B2, :512] = np.asarray(b2)
    c[ROW_B3, :512] = np.asarray(b3)
    c[ROW_B4, :DOF] = np.asarray(b4)
    c[ROW_C1, :256] = np.asarray(c1)
    c[ROW_C2, :256] = np.asarray(c2)
    c[ROW_C3, :64] = np.asarray(c3)
    c[ROW_C4, :DOF] = np.asarray(c4)
    c[ROW_BSCALE, :DOF] = bound_scale
    c[ROW_OBS, 0:8] = obstacle[0]
    c[ROW_OBS, 8:16] = obstacle[1]
    c[ROW_OBS, 16:24] = obstacle[2]
    c[ROW_RADSDF, :LANES] = NEG
    c[ROW_RADSDF, :N_SPHERES] = radii + obstacle_r
    c[ROW_RADF, 48:48 + N_SPHERES] = radii
    c[ROW_E0, 0] = 1.0
    c[ROW_E39, 39] = 1.0
    c[ROW_E40, 40] = 1.0
    c[ROW_MCEN, 0:24] = 1.0
    c[ROW_MEEP, 24:27] = 1.0
    c[ROW_MQ4, 0:4] = 1.0
    c[ROW_MP3, 0:3] = 1.0
    for kk in range(1, N_SPHERES):
        row = ROW_PAIR0 + kk - 1
        c[row, :LANES] = NEG
        ns = N_SPHERES - kk
        c[row, :ns] = radii[:ns] + radii[kk:]
    consts = jnp.asarray(c)

    return (w1, w2, w3, w4, v1, v2, v3, v4, akin, consts)


# ----------------------------------- forward wrapper -----------------------------------
def make_forward(model):
    (w1, w2, w3, w4, v1, v2, v3, v4, akin, consts) = model
    model_bytes = int(sum(int(np.prod(a.shape)) * a.dtype.itemsize for a in model))

    def _build_call(row_tile, grid):
        total_rows = row_tile * grid

        def cspec(shape):                       # constant-index VMEM weight block
            return pl.BlockSpec(shape, lambda i: (0, 0))

        in_specs = [
            pl.BlockSpec((row_tile, LANES), lambda i: (i, 0)),   # x (streamed rows)
            cspec((LANES, 512)),                                 # w1
            pl.BlockSpec(memory_space=pl.ANY),                   # w2  (HBM, manual copy)
            pl.BlockSpec(memory_space=pl.ANY),                   # w3  (HBM, manual copy)
            cspec((512, LANES)),                                 # w4
            cspec((LANES, 256)),                                 # v1
            pl.BlockSpec(memory_space=pl.ANY),                   # v2  (HBM, manual copy)
            cspec((256, LANES)),                                 # v3
            cspec((LANES, LANES)),                               # v4
            cspec((LANES, LANES)),                               # akin (bf16)
            cspec((N_CONST_ROWS, CONST_W)),                      # packed constants
        ]
        out_spec = pl.BlockSpec((row_tile, LANES), lambda i: (i, 0))

        flops = 2 * total_rows * (LANES * 512 + 2 * 512 * 512 + 512 * LANES
                                  + LANES * LANES        # kinematics map
                                  + LANES * 256 + 256 * 256 + 256 * LANES + LANES * LANES)
        bytes_accessed = model_bytes + 2 * total_rows * LANES * 4
        cost = pl.CostEstimate(flops=int(flops),
                               transcendentals=int(total_rows * 4 * LANES),
                               bytes_accessed=int(bytes_accessed))

        return pl.pallas_call(
            _curobo_fused_kernel,
            out_shape=jax.ShapeDtypeStruct((total_rows, LANES), jnp.float32),
            grid_spec=pltpu.PrefetchScalarGridSpec(
                num_scalar_prefetch=0,
                grid=(grid,),
                in_specs=in_specs,
                out_specs=out_spec,
                scratch_shapes=[
                    pltpu.VMEM((512, 512), jnp.bfloat16),        # w2 resident copy
                    pltpu.VMEM((512, 512), jnp.bfloat16),        # w3 resident copy
                    pltpu.VMEM((256, 256), jnp.bfloat16),        # v2 resident copy
                    pltpu.SemaphoreType.DMA((3,)),
                ]),
            # grid must stay sequential: the big-weight DMA runs only on step 0 and the
            # VMEM scratch copies are reused by every later row block.
            compiler_params=pltpu.CompilerParams(
                dimension_semantics=("arbitrary",)),
            cost_estimate=cost,
        )

    @jax.jit
    def forward(q, des_pos, des_quat):
        del q                       # accepted but unused, exactly like CuroboTorch.forward
        b = des_pos.shape[0]
        rows = max(8, ((b + 7) // 8) * 8)
        if rows <= ROW_TILE_MAX:
            row_tile, grid = rows, 1
        else:
            row_tile = ROW_TILE_MAX
            grid = (rows + ROW_TILE_MAX - 1) // ROW_TILE_MAX
            rows = row_tile * grid

        x_small = jnp.concatenate([des_pos, des_quat], axis=-1).astype(jnp.float32)
        x = jnp.pad(x_small, ((0, rows - b), (0, LANES - Q_FEATURE_DIMS)))

        out = _build_call(row_tile, grid)(
            x, w1, w2, w3, w4, v1, v2, v3, v4, akin, consts)
        return out[:b, :DOF]

    return forward


# ----------------------------------------- main -----------------------------------------
if __name__ == "__main__":
    key = jax.random.PRNGKey(0)
    k_model, k_q, k_pos, k_quat = jax.random.split(key, 4)

    model = build_model(k_model)
    forward = make_forward(model)

    # example inputs
    q = jax.random.uniform(k_q, (BATCH, DOF), jnp.float32, -1.0, 1.0)
    des_pos = jax.random.uniform(k_pos, (BATCH, 3), jnp.float32, -0.5, 0.5)
    quat_raw = jax.random.normal(k_quat, (BATCH, 4), jnp.float32)
    des_quat = quat_raw / jnp.linalg.norm(quat_raw, axis=-1, keepdims=True)

    q_out = forward(q, des_pos, des_quat)
    jax.block_until_ready(q_out)

    assert q_out.shape == (BATCH, DOF), q_out.shape
    assert q_out.dtype == jnp.float32
    assert bool(jnp.all(jnp.isfinite(q_out)))
    print("KERNEL_OK")
</pallas_src>

<mosaic_0001>
module attributes {stable_mosaic.version = 11 : i64} {
  func.func @_curobo_fused_kernel(%arg0: i32, %arg1: memref<8x128xf32, #tpu.memory_space<vmem>>, %arg2: memref<128x512xbf16, #tpu.memory_space<vmem>>, %arg3: memref<512x512xbf16, #tpu.memory_space<any>>, %arg4: memref<512x512xbf16, #tpu.memory_space<any>>, %arg5: memref<512x128xbf16, #tpu.memory_space<vmem>>, %arg6: memref<128x256xbf16, #tpu.memory_space<vmem>>, %arg7: memref<256x256xbf16, #tpu.memory_space<any>>, %arg8: memref<256x128xbf16, #tpu.memory_space<vmem>>, %arg9: memref<128x128xbf16, #tpu.memory_space<vmem>>, %arg10: memref<128x128xbf16, #tpu.memory_space<vmem>>, %arg11: memref<32x512xf32, #tpu.memory_space<vmem>>, %arg12: memref<8x128xf32, #tpu.memory_space<vmem>>, %arg13: memref<512x512xbf16, #tpu.memory_space<vmem>>, %arg14: memref<512x512xbf16, #tpu.memory_space<vmem>>, %arg15: memref<256x256xbf16, #tpu.memory_space<vmem>>, %arg16: memref<3x!tpu.dma_semaphore, #tpu.memory_space<semaphore_mem>>) attributes {dimension_semantics = [#tpu.dimension_semantics<arbitrary>], iteration_bounds = array<i64: 1>, scalar_prefetch = 0 : i64, scratch_operands = 4 : i64, tpu.core_type = #tpu.core_type<tc>, window_params = [{transform_indices = @transform_0, window_bounds = array<i64: 8, 128>}, {pipeline_mode = #tpu.pipeline_mode<synchronous>, transform_indices = @transform_1, window_bounds = array<i64: 128, 512>}, {}, {}, {pipeline_mode = #tpu.pipeline_mode<synchronous>, transform_indices = @transform_4, window_bounds = array<i64: 512, 128>}, {pipeline_mode = #tpu.pipeline_mode<synchronous>, transform_indices = @transform_5, window_bounds = array<i64: 128, 256>}, {}, {pipeline_mode = #tpu.pipeline_mode<synchronous>, transform_indices = @transform_7, window_bounds = array<i64: 256, 128>}, {pipeline_mode = #tpu.pipeline_mode<synchronous>, transform_indices = @transform_8, window_bounds = array<i64: 128, 128>}, {pipeline_mode = #tpu.pipeline_mode<synchronous>, transform_indices = @transform_9, window_bounds = array<i64: 128, 128>}, {pipeline_mode = #tpu.pipeline_mode<synchronous>, transform_indices = @transform_10, window_bounds = array<i64: 32, 512>}, {transform_indices = @transform_11, window_bounds = array<i64: 8, 128>}]} {
    %c0_i32 = arith.constant 0 : i32
    %0 = arith.cmpi eq, %arg0, %c0_i32 : i32
    %1 = arith.extui %0 : i1 to i32
    %c0_i32_0 = arith.constant 0 : i32
    %2 = arith.cmpi ne, %1, %c0_i32_0 : i32
    scf.if %2 {
      %c0_i32_100 = arith.constant 0 : i32
      %259 = tpu.memref_slice %arg16[%c0_i32_100] : memref<3x!tpu.dma_semaphore, #tpu.memory_space<semaphore_mem>> -> memref<1x!tpu.dma_semaphore, #tpu.memory_space<semaphore_mem>>
      %260 = tpu.memref_squeeze %259 : memref<1x!tpu.dma_semaphore, #tpu.memory_space<semaphore_mem>> -> memref<!tpu.dma_semaphore, #tpu.memory_space<semaphore_mem>>
      tpu.enqueue_dma source(%arg3 : memref<512x512xbf16, #tpu.memory_space<any>>) target(%arg13 : memref<512x512xbf16, #tpu.memory_space<vmem>>) target_semaphore(%260 : memref<!tpu.dma_semaphore, #tpu.memory_space<semaphore_mem>>)
      %c1_i32 = arith.constant 1 : i32
      %261 = tpu.memref_slice %arg16[%c1_i32] : memref<3x!tpu.dma_semaphore, #tpu.memory_space<semaphore_mem>> -> memref<1x!tpu.dma_semaphore, #tpu.memory_space<semaphore_mem>>
      %262 = tpu.memref_squeeze %261 : memref<1x!tpu.dma_semaphore, #tpu.memory_space<semaphore_mem>> -> memref<!tpu.dma_semaphore, #tpu.memory_space<semaphore_mem>>
      tpu.enqueue_dma source(%arg4 : memref<512x512xbf16, #tpu.memory_space<any>>) target(%arg14 : memref<512x512xbf16, #tpu.memory_space<vmem>>) target_semaphore(%262 : memref<!tpu.dma_semaphore, #tpu.memory_space<semaphore_mem>>)
      %c2_i32 = arith.constant 2 : i32
      %263 = tpu.memref_slice %arg16[%c2_i32] : memref<3x!tpu.dma_semaphore, #tpu.memory_space<semaphore_mem>> -> memref<1x!tpu.dma_semaphore, #tpu.memory_space<semaphore_mem>>
      %264 = tpu.memref_squeeze %263 : memref<1x!tpu.dma_semaphore, #tpu.memory_space<semaphore_mem>> -> memref<!tpu.dma_semaphore, #tpu.memory_space<semaphore_mem>>
      tpu.enqueue_dma source(%arg7 : memref<256x256xbf16, #tpu.memory_space<any>>) target(%arg15 : memref<256x256xbf16, #tpu.memory_space<vmem>>) target_semaphore(%264 : memref<!tpu.dma_semaphore, #tpu.memory_space<semaphore_mem>>)
    } else {
    }
    %c0 = arith.constant 0 : index
    %c0_1 = arith.constant 0 : index
    %3 = vector.load %arg1[%c0, %c0_1] : memref<8x128xf32, #tpu.memory_space<vmem>>, vector<8x128xf32>
    %4 = arith.truncf %3 : vector<8x128xf32> to vector<8x128xbf16>
    %c0_2 = arith.constant 0 : index
    %c0_3 = arith.constant 0 : index
    %5 = vector.load %arg2[%c0_2, %c0_3] : memref<128x512xbf16, #tpu.memory_space<vmem>>, vector<128x512xbf16>
    %cst = arith.constant dense<0.000000e+00> : vector<8x512xf32>
    %6 = tpu.matmul %4, %5, %cst {dimension_numbers = #tpu.dot_dimension_numbers<[1], [0], [0], [1], [0, 0, 1, 1], [], []>} : vector<8x128xbf16>, vector<128x512xbf16>, vector<8x512xf32> -> vector<8x512xf32>
    %c0_4 = arith.constant 0 : index
    %c0_5 = arith.constant 0 : index
    %7 = vector.load %arg11[%c0_4, %c0_5] : memref<32x512xf32, #tpu.memory_space<vmem>>, vector<1x512xf32>
    %8 = vector.broadcast %7 : vector<1x512xf32> to vector<8x512xf32>
    %9 = arith.addf %6, %8 : vector<8x512xf32>
    %cst_6 = arith.constant 0.000000e+00 : f32
    %cst_7 = arith.constant 6.000000e+00 : f32
    %10 = vector.broadcast %cst_6 : f32 to vector<8x512xf32>
    %11 = arith.maximumf %10, %9 : vector<8x512xf32>
    %12 = vector.broadcast %cst_7 : f32 to vector<8x512xf32>
    %13 = arith.minimumf %12, %11 : vector<8x512xf32>
    %c0_i32_8 = arith.constant 0 : i32
    %14 = arith.cmpi eq, %arg0, %c0_i32_8 : i32
    %15 = arith.extui %14 : i1 to i32
    %c0_i32_9 = arith.constant 0 : i32
    %16 = arith.cmpi ne, %15, %c0_i32_9 : i32
    scf.if %16 {
      %c0_i32_100 = arith.constant 0 : i32
      %259 = tpu.memref_slice %arg16[%c0_i32_100] : memref<3x!tpu.dma_semaphore, #tpu.memory_space<semaphore_mem>> -> memref<1x!tpu.dma_semaphore, #tpu.memory_space<semaphore_mem>>
      %260 = tpu.memref_squeeze %259 : memref<1x!tpu.dma_semaphore, #tpu.memory_space<semaphore_mem>> -> memref<!tpu.dma_semaphore, #tpu.memory_space<semaphore_mem>>
      tpu.wait_dma2 semaphore(%260 : memref<!tpu.dma_semaphore, #tpu.memory_space<semaphore_mem>>) src(%arg3 : memref<512x512xbf16, #tpu.memory_space<any>>) dst(%arg13 : memref<512x512xbf16, #tpu.memory_space<vmem>>)
    } else {
    }
    %17 = arith.truncf %13 : vector<8x512xf32> to vector<8x512xbf16>
    %c0_10 = arith.constant 0 : index
    %c0_11 = arith.constant 0 : index
    %18 = vector.load %arg13[%c0_10, %c0_11] : memref<512x512xbf16, #tpu.memory_space<vmem>>, vector<512x512xbf16>
    %cst_12 = arith.constant dense<0.000000e+00> : vector<8x512xf32>
    %19 = tpu.matmul %17, %18, %cst_12 {dimension_numbers = #tpu.dot_dimension_numbers<[1], [0], [0], [1], [0, 0, 1, 1], [], []>} : vector<8x512xbf16>, vector<512x512xbf16>, vector<8x512xf32> -> vector<8x512xf32>
    %c1 = arith.constant 1 : index
    %c0_13 = arith.constant 0 : index
    %20 = vector.load %arg11[%c1, %c0_13] : memref<32x512xf32, #tpu.memory_space<vmem>>, vector<1x512xf32>
    %21 = vector.broadcast %20 : vector<1x512xf32> to vector<8x512xf32>
    %22 = arith.addf %19, %21 : vector<8x512xf32>
    %cst_14 = arith.constant 0.000000e+00 : f32
    %cst_15 = arith.constant 6.000000e+00 : f32
    %23 = vector.broadcast %cst_14 : f32 to vector<8x512xf32>
    %24 = arith.maximumf %23, %22 : vector<8x512xf32>
    %25 = vector.broadcast %cst_15 : f32 to vector<8x512xf32>
    %26 = arith.minimumf %25, %24 : vector<8x512xf32>
    %c0_i32_16 = arith.constant 0 : i32
    %27 = arith.cmpi eq, %arg0, %c0_i32_16 : i32
    %28 = arith.extui %27 : i1 to i32
    %c0_i32_17 = arith.constant 0 : i32
    %29 = arith.cmpi ne, %28, %c0_i32_17 : i32
    scf.if %29 {
      %c1_i32 = arith.constant 1 : i32
      %259 = tpu.memref_slice %arg16[%c1_i32] : memref<3x!tpu.dma_semaphore, #tpu.memory_space<semaphore_mem>> -> memref<1x!tpu.dma_semaphore, #tpu.memory_space<semaphore_mem>>
      %260 = tpu.memref_squeeze %259 : memref<1x!tpu.dma_semaphore, #tpu.memory_space<semaphore_mem>> -> memref<!tpu.dma_semaphore, #tpu.memory_space<semaphore_mem>>
      tpu.wait_dma2 semaphore(%260 : memref<!tpu.dma_semaphore, #tpu.memory_space<semaphore_mem>>) src(%arg4 : memref<512x512xbf16, #tpu.memory_space<any>>) dst(%arg14 : memref<512x512xbf16, #tpu.memory_space<vmem>>)
    } else {
    }
    %30 = arith.truncf %26 : vector<8x512xf32> to vector<8x512xbf16>
    %c0_18 = arith.constant 0 : index
    %c0_19 = arith.constant 0 : index
    %31 = vector.load %arg14[%c0_18, %c0_19] : memref<512x512xbf16, #tpu.memory_space<vmem>>, vector<512x512xbf16>
    %cst_20 = arith.constant dense<0.000000e+00> : vector<8x512xf32>
    %32 = tpu.matmul %30, %31, %cst_20 {dimension_numbers = #tpu.dot_dimension_numbers<[1], [0], [0], [1], [0, 0, 1, 1], [], []>} : vector<8x512xbf16>, vector<512x512xbf16>, vector<8x512xf32> -> vector<8x512xf32>
    %c2 = arith.constant 2 : index
    %c0_21 = arith.constant 0 : index
    %33 = vector.load %arg11[%c2, %c0_21] : memref<32x512xf32, #tpu.memory_space<vmem>>, vector<1x512xf32>
    %34 = vector.broadcast %33 : vector<1x512xf32> to vector<8x512xf32>
    %35 = arith.addf %32, %34 : vector<8x512xf32>
    %cst_22 = arith.constant 0.000000e+00 : f32
    %cst_23 = arith.constant 6.000000e+00 : f32
    %36 = vector.broadcast %cst_22 : f32 to vector<8x512xf32>
    %37 = arith.maximumf %36, %35 : vector<8x512xf32>
    %38 = vector.broadcast %cst_23 : f32 to vector<8x512xf32>
    %39 = arith.minimumf %38, %37 : vector<8x512xf32>
    %40 = arith.truncf %39 : vector<8x512xf32> to vector<8x512xbf16>
    %c0_24 = arith.constant 0 : index
    %c0_25 = arith.constant 0 : index
    %41 = vector.load %arg5[%c0_24, %c0_25] : memref<512x128xbf16, #tpu.memory_space<vmem>>, vector<512x128xbf16>
    %cst_26 = arith.constant dense<0.000000e+00> : vector<8x128xf32>
    %42 = tpu.matmul %40, %41, %cst_26 {dimension_numbers = #tpu.dot_dimension_numbers<[1], [0], [0], [1], [0, 0, 1, 1], [], []>} : vector<8x512xbf16>, vector<512x128xbf16>, vector<8x128xf32> -> vector<8x128xf32>
    %c3 = arith.constant 3 : index
    %c0_27 = arith.constant 0 : index
    %43 = vector.load %arg11[%c3, %c0_27] : memref<32x512xf32, #tpu.memory_space<vmem>>, vector<1x128xf32>
    %44 = vector.broadcast %43 : vector<1x128xf32> to vector<8x128xf32>
    %45 = arith.addf %42, %44 : vector<8x128xf32>
    %46 = math.tanh %45 : vector<8x128xf32>
    %47 = arith.truncf %46 : vector<8x128xf32> to vector<8x128xbf16>
    %c0_28 = arith.constant 0 : index
    %c0_29 = arith.constant 0 : index
    %48 = vector.load %arg10[%c0_28, %c0_29] : memref<128x128xbf16, #tpu.memory_space<vmem>>, vector<128x128xbf16>
    %cst_30 = arith.constant dense<0.000000e+00> : vector<8x128xf32>
    %49 = tpu.matmul %47, %48, %cst_30 {dimension_numbers = #tpu.dot_dimension_numbers<[1], [0], [0], [1], [0, 0, 1, 1], [], []>} : vector<8x128xbf16>, vector<128x128xbf16>, vector<8x128xf32> -> vector<8x128xf32>
    %50 = math.tanh %49 : vector<8x128xf32>
    %cst_31 = arith.constant 5.000000e-01 : f32
    %51 = vector.broadcast %cst_31 : f32 to vector<8x128xf32>
    %52 = arith.mulf %51, %50 : vector<8x128xf32>
    %c9 = arith.constant 9 : index
    %c0_32 = arith.constant 0 : index
    %53 = vector.load %arg11[%c9, %c0_32] : memref<32x512xf32, #tpu.memory_space<vmem>>, vector<1x128xf32>
    %54 = vector.broadcast %53 : vector<1x128xf32> to vector<8x128xf32>
    %55 = arith.subf %52, %54 : vector<8x128xf32>
    %56 = arith.mulf %55, %55 : vector<8x128xf32>
    %c120_i32 = arith.constant 120 : i32
    %57 = tpu.dynamic_rotate %56 by %c120_i32 dim 1 : vector<8x128xf32>, i32 -> vector<8x128xf32>
    %58 = arith.addf %56, %57 : vector<8x128xf32>
    %c112_i32 = arith.constant 112 : i32
    %59 = tpu.dynamic_rotate %56 by %c112_i32 dim 1 : vector<8x128xf32>, i32 -> vector<8x128xf32>
    %60 = arith.addf %58, %59 : vector<8x128xf32>
    %c10 = arith.constant 10 : index
    %c0_33 = arith.constant 0 : index
    %61 = vector.load %arg11[%c10, %c0_33] : memref<32x512xf32, #tpu.memory_space<vmem>>, vector<1x128xf32>
    %62 = math.sqrt %60 : vector<8x128xf32>
    %63 = vector.broadcast %61 : vector<1x128xf32> to vector<8x128xf32>
    %64 = arith.subf %63, %62 : vector<8x128xf32>
    %cst_34 = arith.constant 0.000000e+00 : f32
    %65 = vector.broadcast %cst_34 : f32 to vector<8x128xf32>
    %66 = arith.maximumf %64, %65 : vector<8x128xf32>
    %cst_35 = arith.constant -1.000000e+09 : f32
    %67 = vector.broadcast %cst_35 : f32 to vector<8x128xf32>
    %c127_i32 = arith.constant 127 : i32
    %68 = tpu.dynamic_rotate %52 by %c127_i32 dim 1 : vector<8x128xf32>, i32 -> vector<8x128xf32>
    %69 = arith.subf %52, %68 : vector<8x128xf32>
    %70 = arith.mulf %69, %69 : vector<8x128xf32>
    %c120_i32_36 = arith.constant 120 : i32
    %71 = tpu.dynamic_rotate %70 by %c120_i32_36 dim 1 : vector<8x128xf32>, i32 -> vector<8x128xf32>
    %72 = arith.addf %70, %71 : vector<8x128xf32>
    %c112_i32_37 = arith.constant 112 : i32
    %73 = tpu.dynamic_rotate %70 by %c112_i32_37 dim 1 : vector<8x128xf32>, i32 -> vector<8x128xf32>
    %74 = arith.addf %72, %73 : vector<8x128xf32>
    %c19 = arith.constant 19 : index
    %c0_38 = arith.constant 0 : index
    %75 = vector.load %arg11[%c19, %c0_38] : memref<32x512xf32, #tpu.memory_space<vmem>>, vector<1x128xf32>
    %76 = math.sqrt %74 : vector<8x128xf32>
    %77 = vector.broadcast %75 : vector<1x128xf32> to vector<8x128xf32>
    %78 = arith.subf %77, %76 : vector<8x128xf32>
    %79 = arith.maximumf %67, %78 : vector<8x128xf32>
    %c126_i32 = arith.constant 126 : i32
    %80 = tpu.dynamic_rotate %52 by %c126_i32 dim 1 : vector<8x128xf32>, i32 -> vector<8x128xf32>
    %81 = arith.subf %52, %80 : vector<8x128xf32>
    %82 = arith.mulf %81, %81 : vector<8x128xf32>
    %c120_i32_39 = arith.constant 120 : i32
    %83 = tpu.dynamic_rotate %82 by %c120_i32_39 dim 1 : vector<8x128xf32>, i32 -> vector<8x128xf32>
    %84 = arith.addf %82, %83 : vector<8x128xf32>
    %c112_i32_40 = arith.constant 112 : i32
    %85 = tpu.dynamic_rotate %82 by %c112_i32_40 dim 1 : vector<8x128xf32>, i32 -> vector<8x128xf32>
    %86 = arith.addf %84, %85 : vector<8x128xf32>
    %c20 = arith.constant 20 : index
    %c0_41 = arith.constant 0 : index
    %87 = vector.load %arg11[%c20, %c0_41] : memref<32x512xf32, #tpu.memory_space<vmem>>, vector<1x128xf32>
    %88 = math.sqrt %86 : vector<8x128xf32>
    %89 = vector.broadcast %87 : vector<1x128xf32> to vector<8x128xf32>
    %90 = arith.subf %89, %88 : vector<8x128xf32>
    %91 = arith.maximumf %79, %90 : vector<8x128xf32>
    %c125_i32 = arith.constant 125 : i32
    %92 = tpu.dynamic_rotate %52 by %c125_i32 dim 1 : vector<8x128xf32>, i32 -> vector<8x128xf32>
    %93 = arith.subf %52, %92 : vector<8x128xf32>
    %94 = arith.mulf %93, %93 : vector<8x128xf32>
    %c120_i32_42 = arith.constant 120 : i32
    %95 = tpu.dynamic_rotate %94 by %c120_i32_42 dim 1 : vector<8x128xf32>, i32 -> vector<8x128xf32>
    %96 = arith.addf %94, %95 : vector<8x128xf32>
    %c112_i32_43 = arith.constant 112 : i32
    %97 = tpu.dynamic_rotate %94 by %c112_i32_43 dim 1 : vector<8x128xf32>, i32 -> vector<8x128xf32>
    %98 = arith.addf %96, %97 : vector<8x128xf32>
    %c21 = arith.constant 21 : index
    %c0_44 = arith.constant 0 : index
    %99 = vector.load %arg11[%c21, %c0_44] : memref<32x512xf32, #tpu.memory_space<vmem>>, vector<1x128xf32>
    %100 = math.sqrt %98 : vector<8x128xf32>
    %101 = vector.broadcast %99 : vector<1x128xf32> to vector<8x128xf32>
    %102 = arith.subf %101, %100 : vector<8x128xf32>
    %103 = arith.maximumf %91, %102 : vector<8x128xf32>
    %c124_i32 = arith.constant 124 : i32
    %104 = tpu.dynamic_rotate %52 by %c124_i32 dim 1 : vector<8x128xf32>, i32 -> vector<8x128xf32>
    %105 = arith.subf %52, %104 : vector<8x128xf32>
    %106 = arith.mulf %105, %105 : vector<8x128xf32>
    %c120_i32_45 = arith.constant 120 : i32
    %107 = tpu.dynamic_rotate %106 by %c120_i32_45 dim 1 : vector<8x128xf32>, i32 -> vector<8x128xf32>
    %108 = arith.addf %106, %107 : vector<8x128xf32>
    %c112_i32_46 = arith.constant 112 : i32
    %109 = tpu.dynamic_rotate %106 by %c112_i32_46 dim 1 : vector<8x128xf32>, i32 -> vector<8x128xf32>
    %110 = arith.addf %108, %109 : vector<8x128xf32>
    %c22 = arith.constant 22 : index
    %c0_47 = arith.constant 0 : index
    %111 = vector.load %arg11[%c22, %c0_47] : memref<32x512xf32, #tpu.memory_space<vmem>>, vector<1x128xf32>
    %112 = math.sqrt %110 : vector<8x128xf32>
    %113 = vector.broadcast %111 : vector<1x128xf32> to vector<8x128xf32>
    %114 = arith.subf %113, %112 : vector<8x128xf32>
    %115 = arith.maximumf %103, %114 : vector<8x128xf32>
    %c123_i32 = arith.constant 123 : i32
    %116 = tpu.dynamic_rotate %52 by %c123_i32 dim 1 : vector<8x128xf32>, i32 -> vector<8x128xf32>
    %117 = arith.subf %52, %116 : vector<8x128xf32>
    %118 = arith.mulf %117, %117 : vector<8x128xf32>
    %c120_i32_48 = arith.constant 120 : i32
    %119 = tpu.dynamic_rotate %118 by %c120_i32_48 dim 1 : vector<8x128xf32>, i32 -> vector<8x128xf32>
    %120 = arith.addf %118, %119 : vector<8x128xf32>
    %c112_i32_49 = arith.constant 112 : i32
    %121 = tpu.dynamic_rotate %118 by %c112_i32_49 dim 1 : vector<8x128xf32>, i32 -> vector<8x128xf32>
    %122 = arith.addf %120, %121 : vector<8x128xf32>
    %c23 = arith.constant 23 : index
    %c0_50 = arith.constant 0 : index
    %123 = vector.load %arg11[%c23, %c0_50] : memref<32x512xf32, #tpu.memory_space<vmem>>, vector<1x128xf32>
    %124 = math.sqrt %122 : vector<8x128xf32>
    %125 = vector.broadcast %123 : vector<1x128xf32> to vector<8x128xf32>
    %126 = arith.subf %125, %124 : vector<8x128xf32>
    %127 = arith.maximumf %115, %126 : vector<8x128xf32>
    %c122_i32 = arith.constant 122 : i32
    %128 = tpu.dynamic_rotate %52 by %c122_i32 dim 1 : vector<8x128xf32>, i32 -> vector<8x128xf32>
    %129 = arith.subf %52, %128 : vector<8x128xf32>
    %130 = arith.mulf %129, %129 : vector<8x128xf32>
    %c120_i32_51 = arith.constant 120 : i32
    %131 = tpu.dynamic_rotate %130 by %c120_i32_51 dim 1 : vector<8x128xf32>, i32 -> vector<8x128xf32>
    %132 = arith.addf %130, %131 : vector<8x128xf32>
    %c112_i32_52 = arith.constant 112 : i32
    %133 = tpu.dynamic_rotate %130 by %c112_i32_52 dim 1 : vector<8x128xf32>, i32 -> vector<8x128xf32>
    %134 = arith.addf %132, %133 : vector<8x128xf32>
    %c24 = arith.constant 24 : index
    %c0_53 = arith.constant 0 : index
    %135 = vector.load %arg11[%c24, %c0_53] : memref<32x512xf32, #tpu.memory_space<vmem>>, vector<1x128xf32>
    %136 = math.sqrt %134 : vector<8x128xf32>
    %137 = vector.broadcast %135 : vector<1x128xf32> to vector<8x128xf32>
    %138 = arith.subf %137, %136 : vector<8x128xf32>
    %139 = arith.maximumf %127, %138 : vector<8x128xf32>
    %c121_i32 = arith.constant 121 : i32
    %140 = tpu.dynamic_rotate %52 by %c121_i32 dim 1 : vector<8x128xf32>, i32 -> vector<8x128xf32>
    %141 = arith.subf %52, %140 : vector<8x128xf32>
    %142 = arith.mulf %141, %141 : vector<8x128xf32>
    %c120_i32_54 = arith.constant 120 : i32
    %143 = tpu.dynamic_rotate %142 by %c120_i32_54 dim 1 : vector<8x128xf32>, i32 -> vector<8x128xf32>
    %144 = arith.addf %142, %143 : vector<8x128xf32>
    %c112_i32_55 = arith.constant 112 : i32
    %145 = tpu.dynamic_rotate %142 by %c112_i32_55 dim 1 : vector<8x128xf32>, i32 -> vector<8x128xf32>
    %146 = arith.addf %144, %145 : vector<8x128xf32>
    %c25 = arith.constant 25 : index
    %c0_56 = arith.constant 0 : index
    %147 = vector.load %arg11[%c25, %c0_56] : memref<32x512xf32, #tpu.memory_space<vmem>>, vector<1x128xf32>
    %148 = math.sqrt %146 : vector<8x128xf32>
    %149 = vector.broadcast %147 : vector<1x128xf32> to vector<8x128xf32>
    %150 = arith.subf %149, %148 : vector<8x128xf32>
    %151 = arith.maximumf %139, %150 : vector<8x128xf32>
    %cst_57 = arith.constant dense<0xFF800000> : vector<8xf32>
    %152 = vector.multi_reduction <maximumf>, %151, %cst_57 [1] : vector<8x128xf32> to vector<8xf32>
    %153 = vector.shape_cast %152 : vector<8xf32> to vector<8x1xf32>
    %cst_58 = arith.constant 0.000000e+00 : f32
    %154 = vector.broadcast %cst_58 : f32 to vector<8x1xf32>
    %155 = arith.maximumf %153, %154 : vector<8x1xf32>
    %c16 = arith.constant 16 : index
    %c0_59 = arith.constant 0 : index
    %156 = vector.load %arg11[%c16, %c0_59] : memref<32x512xf32, #tpu.memory_space<vmem>>, vector<1x128xf32>
    %157 = vector.broadcast %156 : vector<1x128xf32> to vector<8x128xf32>
    %158 = arith.mulf %52, %157 : vector<8x128xf32>
    %c101_i32 = arith.constant 101 : i32
    %159 = tpu.dynamic_rotate %49 by %c101_i32 dim 1 : vector<8x128xf32>, i32 -> vector<8x128xf32>
    %c17 = arith.constant 17 : index
    %c0_60 = arith.constant 0 : index
    %160 = vector.load %arg11[%c17, %c0_60] : memref<32x512xf32, #tpu.memory_space<vmem>>, vector<1x128xf32>
    %161 = vector.broadcast %160 : vector<1x128xf32> to vector<8x128xf32>
    %162 = arith.mulf %159, %161 : vector<8x128xf32>
    %c12 = arith.constant 12 : index
    %c0_61 = arith.constant 0 : index
    %163 = vector.load %arg11[%c12, %c0_61] : memref<32x512xf32, #tpu.memory_space<vmem>>, vector<1x128xf32>
    %164 = vector.broadcast %163 : vector<1x128xf32> to vector<8x128xf32>
    %165 = arith.addf %162, %164 : vector<8x128xf32>
    %166 = arith.mulf %165, %165 : vector<8x128xf32>
    %cst_62 = arith.constant dense<0.000000e+00> : vector<8xf32>
    %167 = vector.multi_reduction <add>, %166, %cst_62 [1] : vector<8x128xf32> to vector<8xf32>
    %168 = vector.shape_cast %167 : vector<8xf32> to vector<8x1xf32>
    %cst_63 = arith.constant 9.99999996E-13 : f32
    %169 = vector.broadcast %cst_63 : f32 to vector<8x1xf32>
    %170 = arith.addf %168, %169 : vector<8x1xf32>
    %171 = math.rsqrt %170 : vector<8x1xf32>
    %172 = vector.broadcast %171 : vector<8x1xf32> to vector<8x128xf32>
    %173 = arith.mulf %165, %172 : vector<8x128xf32>
    %c104_i32 = arith.constant 104 : i32
    %174 = tpu.dynamic_rotate %158 by %c104_i32 dim 1 : vector<8x128xf32>, i32 -> vector<8x128xf32>
    %175 = arith.subf %3, %174 : vector<8x128xf32>
    %176 = arith.mulf %175, %175 : vector<8x128xf32>
    %c18 = arith.constant 18 : index
    %c0_64 = arith.constant 0 : index
    %177 = vector.load %arg11[%c18, %c0_64] : memref<32x512xf32, #tpu.memory_space<vmem>>, vector<1x128xf32>
    %178 = vector.broadcast %177 : vector<1x128xf32> to vector<8x128xf32>
    %179 = arith.mulf %176, %178 : vector<8x128xf32>
    %cst_65 = arith.constant dense<0.000000e+00> : vector<8xf32>
    %180 = vector.multi_reduction <add>, %179, %cst_65 [1] : vector<8x128xf32> to vector<8xf32>
    %181 = vector.shape_cast %180 : vector<8xf32> to vector<8x1xf32>
    %c125_i32_66 = arith.constant 125 : i32
    %182 = tpu.dynamic_rotate %3 by %c125_i32_66 dim 1 : vector<8x128xf32>, i32 -> vector<8x128xf32>
    %183 = arith.mulf %182, %173 : vector<8x128xf32>
    %cst_67 = arith.constant dense<0.000000e+00> : vector<8xf32>
    %184 = vector.multi_reduction <add>, %183, %cst_67 [1] : vector<8x128xf32> to vector<8xf32>
    %185 = vector.shape_cast %184 : vector<8xf32> to vector<8x1xf32>
    %186 = math.sqrt %181 : vector<8x1xf32>
    %cst_68 = arith.constant 1.000000e+00 : f32
    %187 = vector.broadcast %cst_68 : f32 to vector<8x1xf32>
    %188 = arith.addf %186, %187 : vector<8x1xf32>
    %189 = math.absf %185 : vector<8x1xf32>
    %190 = arith.subf %188, %189 : vector<8x1xf32>
    %c15 = arith.constant 15 : index
    %c0_69 = arith.constant 0 : index
    %191 = vector.load %arg11[%c15, %c0_69] : memref<32x512xf32, #tpu.memory_space<vmem>>, vector<1x128xf32>
    %192 = vector.broadcast %191 : vector<1x128xf32> to vector<8x128xf32>
    %193 = arith.mulf %52, %192 : vector<8x128xf32>
    %c24_i32 = arith.constant 24 : i32
    %194 = tpu.dynamic_rotate %66 by %c24_i32 dim 1 : vector<8x128xf32>, i32 -> vector<8x128xf32>
    %195 = arith.addf %193, %194 : vector<8x128xf32>
    %c8_i32 = arith.constant 8 : i32
    %196 = tpu.dynamic_rotate %158 by %c8_i32 dim 1 : vector<8x128xf32>, i32 -> vector<8x128xf32>
    %197 = arith.addf %195, %196 : vector<8x128xf32>
    %c35_i32 = arith.constant 35 : i32
    %198 = tpu.dynamic_rotate %173 by %c35_i32 dim 1 : vector<8x128xf32>, i32 -> vector<8x128xf32>
    %199 = arith.addf %197, %198 : vector<8x128xf32>
    %c13 = arith.constant 13 : index
    %c0_70 = arith.constant 0 : index
    %200 = vector.load %arg11[%c13, %c0_70] : memref<32x512xf32, #tpu.memory_space<vmem>>, vector<1x128xf32>
    %201 = vector.broadcast %155 : vector<8x1xf32> to vector<8x128xf32>
    %202 = vector.broadcast %200 : vector<1x128xf32> to vector<8x128xf32>
    %203 = arith.mulf %201, %202 : vector<8x128xf32>
    %204 = arith.addf %199, %203 : vector<8x128xf32>
    %c14 = arith.constant 14 : index
    %c0_71 = arith.constant 0 : index
    %205 = vector.load %arg11[%c14, %c0_71] : memref<32x512xf32, #tpu.memory_space<vmem>>, vector<1x128xf32>
    %206 = vector.broadcast %190 : vector<8x1xf32> to vector<8x128xf32>
    %207 = vector.broadcast %205 : vector<1x128xf32> to vector<8x128xf32>
    %208 = arith.mulf %206, %207 : vector<8x128xf32>
    %209 = arith.addf %204, %208 : vector<8x128xf32>
    %c41_i32 = arith.constant 41 : i32
    %210 = tpu.dynamic_rotate %3 by %c41_i32 dim 1 : vector<8x128xf32>, i32 -> vector<8x128xf32>
    %211 = arith.addf %209, %210 : vector<8x128xf32>
    %c11 = arith.constant 11 : index
    %c0_72 = arith.constant 0 : index
    %212 = vector.load %arg11[%c11, %c0_72] : memref<32x512xf32, #tpu.memory_space<vmem>>, vector<1x128xf32>
    %213 = vector.broadcast %212 : vector<1x128xf32> to vector<8x128xf32>
    %214 = arith.addf %211, %213 : vector<8x128xf32>
    %215 = arith.truncf %214 : vector<8x128xf32> to vector<8x128xbf16>
    %c0_73 = arith.constant 0 : index
    %c0_74 = arith.constant 0 : index
    %216 = vector.load %arg6[%c0_73, %c0_74] : memref<128x256xbf16, #tpu.memory_space<vmem>>, vector<128x256xbf16>
    %cst_75 = arith.constant dense<0.000000e+00> : vector<8x256xf32>
    %217 = tpu.matmul %215, %216, %cst_75 {dimension_numbers = #tpu.dot_dimension_numbers<[1], [0], [0], [1], [0, 0, 1, 1], [], []>} : vector<8x128xbf16>, vector<128x256xbf16>, vector<8x256xf32> -> vector<8x256xf32>
    %c4 = arith.constant 4 : index
    %c0_76 = arith.constant 0 : index
    %218 = vector.load %arg11[%c4, %c0_76] : memref<32x512xf32, #tpu.memory_space<vmem>>, vector<1x256xf32>
    %219 = vector.broadcast %218 : vector<1x256xf32> to vector<8x256xf32>
    %220 = arith.addf %217, %219 : vector<8x256xf32>
    %cst_77 = arith.constant 0.000000e+00 : f32
    %cst_78 = arith.constant 6.000000e+00 : f32
    %221 = vector.broadcast %cst_77 : f32 to vector<8x256xf32>
    %222 = arith.maximumf %221, %220 : vector<8x256xf32>
    %223 = vector.broadcast %cst_78 : f32 to vector<8x256xf32>
    %224 = arith.minimumf %223, %222 : vector<8x256xf32>
    %c0_i32_79 = arith.constant 0 : i32
    %225 = arith.cmpi eq, %arg0, %c0_i32_79 : i32
    %226 = arith.extui %225 : i1 to i32
    %c0_i32_80 = arith.constant 0 : i32
    %227 = arith.cmpi ne, %226, %c0_i32_80 : i32
    scf.if %227 {
      %c2_i32 = arith.constant 2 : i32
      %259 = tpu.memref_slice %arg16[%c2_i32] : memref<3x!tpu.dma_semaphore, #tpu.memory_space<semaphore_mem>> -> memref<1x!tpu.dma_semaphore, #tpu.memory_space<semaphore_mem>>
      %260 = tpu.memref_squeeze %259 : memref<1x!tpu.dma_semaphore, #tpu.memory_space<semaphore_mem>> -> memref<!tpu.dma_semaphore, #tpu.memory_space<semaphore_mem>>
      tpu.wait_dma2 semaphore(%260 : memref<!tpu.dma_semaphore, #tpu.memory_space<semaphore_mem>>) src(%arg7 : memref<256x256xbf16, #tpu.memory_space<any>>) dst(%arg15 : memref<256x256xbf16, #tpu.memory_space<vmem>>)
    } else {
    }
    %228 = arith.truncf %224 : vector<8x256xf32> to vector<8x256xbf16>
    %c0_81 = arith.constant 0 : index
    %c0_82 = arith.constant 0 : index
    %229 = vector.load %arg15[%c0_81, %c0_82] : memref<256x256xbf16, #tpu.memory_space<vmem>>, vector<256x256xbf16>
    %cst_83 = arith.constant dense<0.000000e+00> : vector<8x256xf32>
    %230 = tpu.matmul %228, %229, %cst_83 {dimension_numbers = #tpu.dot_dimension_numbers<[1], [0], [0], [1], [0, 0, 1, 1], [], []>} : vector<8x256xbf16>, vector<256x256xbf16>, vector<8x256xf32> -> vector<8x256xf32>
    %c5 = arith.constant 5 : index
    %c0_84 = arith.constant 0 : index
    %231 = vector.load %arg11[%c5, %c0_84] : memref<32x512xf32, #tpu.memory_space<vmem>>, vector<1x256xf32>
    %232 = vector.broadcast %231 : vector<1x256xf32> to vector<8x256xf32>
    %233 = arith.addf %230, %232 : vector<8x256xf32>
    %cst_85 = arith.constant 0.000000e+00 : f32
    %cst_86 = arith.constant 6.000000e+00 : f32
    %234 = vector.broadcast %cst_85 : f32 to vector<8x256xf32>
    %235 = arith.maximumf %234, %233 : vector<8x256xf32>
    %236 = vector.broadcast %cst_86 : f32 to vector<8x256xf32>
    %237 = arith.minimumf %236, %235 : vector<8x256xf32>
    %238 = arith.truncf %237 : vector<8x256xf32> to vector<8x256xbf16>
    %c0_87 = arith.constant 0 : index
    %c0_88 = arith.constant 0 : index
    %239 = vector.load %arg8[%c0_87, %c0_88] : memref<256x128xbf16, #tpu.memory_space<vmem>>, vector<256x128xbf16>
    %cst_89 = arith.constant dense<0.000000e+00> : vector<8x128xf32>
    %240 = tpu.matmul %238, %239, %cst_89 {dimension_numbers = #tpu.dot_dimension_numbers<[1], [0], [0], [1], [0, 0, 1, 1], [], []>} : vector<8x256xbf16>, vector<256x128xbf16>, vector<8x128xf32> -> vector<8x128xf32>
    %c6 = arith.constant 6 : index
    %c0_90 = arith.constant 0 : index
    %241 = vector.load %arg11[%c6, %c0_90] : memref<32x512xf32, #tpu.memory_space<vmem>>, vector<1x128xf32>
    %242 = vector.broadcast %241 : vector<1x128xf32> to vector<8x128xf32>
    %243 = arith.addf %240, %242 : vector<8x128xf32>
    %cst_91 = arith.constant 0.000000e+00 : f32
    %cst_92 = arith.constant 6.000000e+00 : f32
    %244 = vector.broadcast %cst_91 : f32 to vector<8x128xf32>
    %245 = arith.maximumf %244, %243 : vector<8x128xf32>
    %246 = vector.broadcast %cst_92 : f32 to vector<8x128xf32>
    %247 = arith.minimumf %246, %245 : vector<8x128xf32>
    %c8 = arith.constant 8 : index
    %c0_93 = arith.constant 0 : index
    %248 = vector.load %arg11[%c8, %c0_93] : memref<32x512xf32, #tpu.memory_space<vmem>>, vector<1x128xf32>
    %249 = arith.truncf %247 : vector<8x128xf32> to vector<8x128xbf16>
    %c0_94 = arith.constant 0 : index
    %c0_95 = arith.constant 0 : index
    %250 = vector.load %arg9[%c0_94, %c0_95] : memref<128x128xbf16, #tpu.memory_space<vmem>>, vector<128x128xbf16>
    %cst_96 = arith.constant dense<0.000000e+00> : vector<8x128xf32>
    %251 = tpu.matmul %249, %250, %cst_96 {dimension_numbers = #tpu.dot_dimension_numbers<[1], [0], [0], [1], [0, 0, 1, 1], [], []>} : vector<8x128xbf16>, vector<128x128xbf16>, vector<8x128xf32> -> vector<8x128xf32>
    %c7 = arith.constant 7 : index
    %c0_97 = arith.constant 0 : index
    %252 = vector.load %arg11[%c7, %c0_97] : memref<32x512xf32, #tpu.memory_space<vmem>>, vector<1x128xf32>
    %253 = vector.broadcast %252 : vector<1x128xf32> to vector<8x128xf32>
    %254 = arith.addf %251, %253 : vector<8x128xf32>
    %255 = math.tanh %254 : vector<8x128xf32>
    %256 = vector.broadcast %248 : vector<1x128xf32> to vector<8x128xf32>
    %257 = arith.mulf %256, %255 : vector<8x128xf32>
    %c0_98 = arith.constant 0 : index
    %c0_99 = arith.constant 0 : index
    %258 = vector.load %arg12[%c0_98, %c0_99] : memref<8x128xf32, #tpu.memory_space<vmem>>, vector<8x128xf32>
    tpu.vector_store %arg12[%c0_98, %c0_99], %257 {strides = array<i32>} : memref<8x128xf32, #tpu.memory_space<vmem>>, vector<8x128xf32>,
    return
  }
  func.func @transform_0(%arg0: i32) -> (i32, i32) {
    %c0_i32 = arith.constant 0 : i32
    %c0_i32_0 = arith.constant 0 : i32
    return %arg0, %c0_i32 : i32, i32
  }
  func.func @transform_1(%arg0: i32) -> (i32, i32) {
    %c0_i32 = arith.constant 0 : i32
    %c0_i32_0 = arith.constant 0 : i32
    %c0_i32_1 = arith.constant 0 : i32
    return %c0_i32, %c0_i32_0 : i32, i32
  }
  func.func @transform_4(%arg0: i32) -> (i32, i32) {
    %c0_i32 = arith.constant 0 : i32
    %c0_i32_0 = arith.constant 0 : i32
    %c0_i32_1 = arith.constant 0 : i32
    return %c0_i32, %c0_i32_0 : i32, i32
  }
  func.func @transform_5(%arg0: i32) -> (i32, i32) {
    %c0_i32 = arith.constant 0 : i32
    %c0_i32_0 = arith.constant 0 : i32
    %c0_i32_1 = arith.constant 0 : i32
    return %c0_i32, %c0_i32_0 : i32, i32
  }
  func.func @transform_7(%arg0: i32) -> (i32, i32) {
    %c0_i32 = arith.constant 0 : i32
    %c0_i32_0 = arith.constant 0 : i32
    %c0_i32_1 = arith.constant 0 : i32
    return %c0_i32, %c0_i32_0 : i32, i32
  }
  func.func @transform_8(%arg0: i32) -> (i32, i32) {
    %c0_i32 = arith.constant 0 : i32
    %c0_i32_0 = arith.constant 0 : i32
    %c0_i32_1 = arith.constant 0 : i32
    return %c0_i32, %c0_i32_0 : i32, i32
  }
  func.func @transform_9(%arg0: i32) -> (i32, i32) {
    %c0_i32 = arith.constant 0 : i32
    %c0_i32_0 = arith.constant 0 : i32
    %c0_i32_1 = arith.constant 0 : i32
    return %c0_i32, %c0_i32_0 : i32, i32
  }
  func.func @transform_10(%arg0: i32) -> (i32, i32) {
    %c0_i32 = arith.constant 0 : i32
    %c0_i32_0 = arith.constant 0 : i32
    %c0_i32_1 = arith.constant 0 : i32
    return %c0_i32, %c0_i32_0 : i32, i32
  }
  func.func @transform_11(%arg0: i32) -> (i32, i32) {
    %c0_i32 = arith.constant 0 : i32
    %c0_i32_0 = arith.constant 0 : i32
    return %arg0, %c0_i32 : i32, i32
  }
}

</mosaic_0001>

<llo_original>
// kernel: forward.1
$region0: #{forward.1}
  #allocation0 [shape = 'u32[]', space=smem, size = 0x4, offset = 0x4, fixed_abs, tag = 'smem constant byte address 0x4 - core index']
  #allocation1 [shape = 'u32[72,128]{1,0:T(1,128)}', space=vmem, size = 0x9000, scoped, tag = 'internal scratch']
  #allocation2 [shape = 'bf16[512,512]{1,0:T(8,128)(2,1)}', space=vmem, size = 0x80000, scoped, tag = 'scratch operand']
  #allocation3 [shape = 'bf16[512,512]{1,0:T(8,128)(2,1)}', space=vmem, size = 0x80000, scoped, tag = 'scratch operand']
  #allocation4 [shape = 'bf16[256,256]{1,0:T(8,128)(2,1)}', space=vmem, size = 0x20000, scoped, tag = 'scratch operand']
  #allocation5 [shape = 's32[3]{0}', space=sflag, size = 0xc, scoped, tag = 'scratch operand']
  #allocation17 [shape = 's32[]', space=sflag, size = 0x4, offset = 0, fixed_abs, tag = 'sflag constant byte address 0x0 - dummy sync flag']
  #allocation18 [shape = 's32[]', space=sflag, size = 0x4, offset = 0, fixed_abs, tag = 'sflag constant byte address 0x0 - dummy sync flag']
  #allocation19 [shape = 'u32[]', space=smem, size = 0x4, offset = 0x44, fixed_abs, tag = 'smem constant byte address 0x44 - assertion arg 0']
  #allocation20 [shape = 'u32[]', space=smem, size = 0x4, offset = 0x48, fixed_abs, tag = 'smem constant byte address 0x48 - assertion arg 1']
  #allocation21 [shape = 's32[]', space=sflag, size = 0x4, offset = 0, fixed_abs, tag = 'sflag constant byte address 0x0 - dummy sync flag']
  #allocation22 [shape = 's32[]', space=sflag, size = 0x4, offset = 0, fixed_abs, tag = 'sflag constant byte address 0x0 - dummy sync flag']
  #allocation23 [shape = 's32[]', space=sflag, size = 0x4, offset = 0, fixed_abs, tag = 'sflag constant byte address 0x0 - dummy sync flag']
  #allocation24 [shape = 's32[]', space=sflag, size = 0x4, offset = 0, fixed_abs, tag = 'sflag constant byte address 0x0 - dummy sync flag']
  %s0 = inlined_call_operand.vmem [shape: f32[8,128], index: 0, kind: input, shape index: {}]
  %s1 = inlined_call_operand.hbm [shape: bf16[128,512], index: 1, kind: input, shape index: {}]
  %s2 = inlined_call_operand.hbm [shape: bf16[512,512], index: 2, kind: input, shape index: {}]
  %s3 = inlined_call_operand.hbm [shape: bf16[512,512], index: 3, kind: input, shape index: {}]
  %s4 = inlined_call_operand.hbm [shape: bf16[512,128], index: 4, kind: input, shape index: {}]
  %s5 = inlined_call_operand.hbm [shape: bf16[128,256], index: 5, kind: input, shape index: {}]
  %s6 = inlined_call_operand.hbm [shape: bf16[256,256], index: 6, kind: input, shape index: {}]
  %s7 = inlined_call_operand.hbm [shape: bf16[256,128], index: 7, kind: input, shape index: {}]
  %s8 = inlined_call_operand.hbm [shape: bf16[128,128], index: 8, kind: input, shape index: {}]
  %s9 = inlined_call_operand.hbm [shape: bf16[128,128], index: 9, kind: input, shape index: {}]
  %s10 = inlined_call_operand.hbm [shape: f32[32,512], index: 10, kind: input, shape index: {}]
  %s11 = inlined_call_operand.vmem [shape: f32[8,128], index: 11, kind: output, shape index: {}]
  %s12 = sld [smem:[#allocation0]]
  $region98: #{forward.1} parent=0
    _
  %s14 = ssub.s32 1, %s12
  %s15 = scalar_select 0, %s14, %s12
  $region1: #{forward.1} parent=0
    #allocation6 [shape = 'u8[131072]{0}', space=vmem, size = 0x20000, scoped, tag = 'input window, operand 1, single buffered']
    #allocation7 [shape = 's32[1]{0}', space=sflag, size = 0x4, scoped, tag = 'scoped memory for forward.1']
    #allocation8 [shape = 'u8[131072]{0}', space=vmem, size = 0x20000, scoped, tag = 'input window, operand 4, single buffered']
    #allocation9 [shape = 's32[1]{0}', space=sflag, size = 0x4, scoped, tag = 'scoped memory for forward.1']
    #allocation10 [shape = 'u8[65536]{0}', space=vmem, size = 0x10000, scoped, tag = 'input window, operand 5, single buffered']
    #allocation11 [shape = 'u8[65536]{0}', space=vmem, size = 0x10000, scoped, tag = 'input window, operand 7, single buffered']
    #allocation12 [shape = 's32[1]{0}', space=sflag, size = 0x4, scoped, tag = 'scoped memory for forward.1']
    #allocation13 [shape = 'u8[32768]{0}', space=vmem, size = 0x8000, scoped, tag = 'input window, operand 8, single buffered']
    #allocation14 [shape = 'u8[32768]{0}', space=vmem, size = 0x8000, scoped, tag = 'input window, operand 9, single buffered']
    #allocation15 [shape = 's32[1]{0}', space=sflag, size = 0x4, scoped, tag = 'scoped memory for forward.1']
    #allocation16 [shape = 'u8[65536]{0}', space=vmem, size = 0x10000, scoped, tag = 'input window, operand 10, single buffered']
    %16 = vsyncpa [#allocation7], 0
    %17 = vsyncpa [#allocation9], 0
    %18 = vsyncpa [#allocation12], 0
    %19 = vsyncpa [#allocation15], 0
    // Predicated region
    $region2: #{forward.1} parent=1 // pred_check
      _
    $region3: #{forward.1} parent=1 // pred_check_branch
      %21 = sbr.rel (0) target = $region5
    $region4: #{forward.1} parent=1 // pred_region
      _
    $region5: #{forward.1} parent=1 // pred_fallthru
      _
    // Predicated region
    $region6: #{forward.1} parent=1 // pred_check
      _
    $region7: #{forward.1} parent=1 // pred_check_branch
      %23 = sbr.rel (0) target = $region9
    $region8: #{forward.1} parent=1 // pred_region
      %25 = vsyncadd [#allocation7], 0
      %s26 = sshll.u32 %s1, 4
      %s27 = int_to_ptr.hbm [resolvable:$true] %s26
      %s28 = sshll.u32 [#allocation6], 4
      %s29 = int_to_ptr.vmem [resolvable:$true] %s28
      %34 = dma.hbm_to_vmem [thread:$0]  %s27, 4096, %s29, [#allocation7], 256, 256, 16
    $region9: #{forward.1} parent=1 // pred_fallthru
      _
    // Predicated region
    $region10: #{forward.1} parent=1 // pred_check
      _
    $region11: #{forward.1} parent=1 // pred_check_branch
      %36 = sbr.rel (0) target = $region13
    $region12: #{forward.1} parent=1 // pred_region
      %38 = vsyncadd [#allocation9], 0
      %s39 = sshll.u32 %s4, 4
      %s40 = int_to_ptr.hbm [resolvable:$true] %s39
      %s41 = sshll.u32 [#allocation8], 4
      %s42 = int_to_ptr.vmem [resolvable:$true] %s41
      %47 = dma.hbm_to_vmem [thread:$0]  %s40, 4096, %s42, [#allocation9], 64, 64, 4
    $region13: #{forward.1} parent=1 // pred_fallthru
      _
    // Predicated region
    $region14: #{forward.1} parent=1 // pred_check
      _
    $region15: #{forward.1} parent=1 // pred_check_branch
      %49 = sbr.rel (0) target = $region17
    $region16: #{forward.1} parent=1 // pred_region
      %51 = vsyncadd [#allocation9], 0
      %s52 = sshll.u32 %s5, 4
      %s53 = int_to_ptr.hbm [resolvable:$true] %s52
      %s54 = sshll.u32 [#allocation10], 4
      %s55 = int_to_ptr.vmem [resolvable:$true] %s54
      %60 = dma.hbm_to_vmem [thread:$0]  %s53, 2048, %s55, [#allocation9], 128, 128, 8
    $region17: #{forward.1} parent=1 // pred_fallthru
      _
    // Predicated region
    $region18: #{forward.1} parent=1 // pred_check
      _
    $region19: #{forward.1} parent=1 // pred_check_branch
      %62 = sbr.rel (0) target = $region21
    $region20: #{forward.1} parent=1 // pred_region
      %64 = vsyncadd [#allocation12], 0
      %s65 = sshll.u32 %s7, 4
      %s66 = int_to_ptr.hbm [resolvable:$true] %s65
      %s67 = sshll.u32 [#allocation11], 4
      %s68 = int_to_ptr.vmem [resolvable:$true] %s67
      %73 = dma.hbm_to_vmem [thread:$0]  %s66, 2048, %s68, [#allocation12], 64, 64, 4
    $region21: #{forward.1} parent=1 // pred_fallthru
      _
    // Predicated region
    $region22: #{forward.1} parent=1 // pred_check
      _
    $region23: #{forward.1} parent=1 // pred_check_branch
      %75 = sbr.rel (0) target = $region25
    $region24: #{forward.1} parent=1 // pred_region
      %77 = vsyncadd [#allocation12], 0
      %s78 = sshll.u32 %s8, 4
      %s79 = int_to_ptr.hbm [resolvable:$true] %s78
      %s80 = sshll.u32 [#allocation13], 4
      %s81 = int_to_ptr.vmem [resolvable:$true] %s80
      %86 = dma.hbm_to_vmem [thread:$0]  %s79, 1024, %s81, [#allocation12], 64, 64, 4
    $region25: #{forward.1} parent=1 // pred_fallthru
      _
    // Predicated region
    $region26: #{forward.1} parent=1 // pred_check
      _
    $region27: #{forward.1} parent=1 // pred_check_branch
      %88 = sbr.rel (0) target = $region29
    $region28: #{forward.1} parent=1 // pred_region
      %90 = vsyncadd [#allocation15], 0
      %s91 = sshll.u32 %s9, 4
      %s92 = int_to_ptr.hbm [resolvable:$true] %s91
      %s93 = sshll.u32 [#allocation14], 4
      %s94 = int_to_ptr.vmem [resolvable:$true] %s93
      %99 = dma.hbm_to_vmem [thread:$0]  %s92, 1024, %s94, [#allocation15], 64, 64, 4
    $region29: #{forward.1} parent=1 // pred_fallthru
      _
    // Predicated region
    $region30: #{forward.1} parent=1 // pred_check
      _
    $region31: #{forward.1} parent=1 // pred_check_branch
      %101 = sbr.rel (0) target = $region33
    $region32: #{forward.1} parent=1 // pred_region
      %103 = vsyncadd [#allocation15], 0
      %s104 = sshll.u32 %s10, 4
      %s105 = int_to_ptr.hbm [resolvable:$true] %s104
      %s106 = sshll.u32 [#allocation16], 4
      %s107 = int_to_ptr.vmem [resolvable:$true] %s106
      %112 = dma.hbm_to_vmem [thread:$0]  %s105, 2048, %s107, [#allocation15], 512, 512, 32
    $region33: #{forward.1} parent=1 // pred_fallthru
      _
    // Predicated region
    $region34: #{forward.1} parent=1 // pred_check
      _
    $region35: #{forward.1} parent=1 // pred_check_branch
      %114 = sbr.rel (0) target = $region37
    $region36: #{forward.1} parent=1 // pred_region
      %116 = dma.done [#allocation7], 4096
    $region37: #{forward.1} parent=1 // pred_fallthru
      _
    // Predicated region
    $region38: #{forward.1} parent=1 // pred_check
      _
    $region39: #{forward.1} parent=1 // pred_check_branch
      %118 = sbr.rel (0) target = $region41
    $region40: #{forward.1} parent=1 // pred_region
      %120 = dma.done [#allocation9], 4096
    $region41: #{forward.1} parent=1 // pred_fallthru
      _
    // Predicated region
    $region42: #{forward.1} parent=1 // pred_check
      _
    $region43: #{forward.1} parent=1 // pred_check_branch
      %122 = sbr.rel (0) target = $region45
    $region44: #{forward.1} parent=1 // pred_region
      %124 = dma.done [#allocation9], 2048
    $region45: #{forward.1} parent=1 // pred_fallthru
      _
    // Predicated region
    $region46: #{forward.1} parent=1 // pred_check
      _
    $region47: #{forward.1} parent=1 // pred_check_branch
      %126 = sbr.rel (0) target = $region49
    $region48: #{forward.1} parent=1 // pred_region
      %128 = dma.done [#allocation12], 2048
    $region49: #{forward.1} parent=1 // pred_fallthru
      _
    // Predicated region
    $region50: #{forward.1} parent=1 // pred_check
      _
    $region51: #{forward.1} parent=1 // pred_check_branch
      %130 = sbr.rel (0) target = $region53
    $region52: #{forward.1} parent=1 // pred_region
      %132 = dma.done [#allocation12], 1024
    $region53: #{forward.1} parent=1 // pred_fallthru
      _
    // Predicated region
    $region54: #{forward.1} parent=1 // pred_check
      _
    $region55: #{forward.1} parent=1 // pred_check_branch
      %134 = sbr.rel (0) target = $region57
    $region56: #{forward.1} parent=1 // pred_region
      %136 = dma.done [#allocation15], 1024
    $region57: #{forward.1} parent=1 // pred_fallthru
      _
    // Predicated region
    $region58: #{forward.1} parent=1 // pred_check
      _
    $region59: #{forward.1} parent=1 // pred_check_branch
      %138 = sbr.rel (0) target = $region61
    $region60: #{forward.1} parent=1 // pred_region
      %140 = dma.done [#allocation15], 2048
    $region61: #{forward.1} parent=1 // pred_fallthru
      _
    %p141 = scmp.eq.s32.totalorder 0, 0
    // Predicated region
    $region62: #{forward.1} parent=1 // pred_check
      %p142 = pneg %p141
    $region63: #{forward.1} parent=1 // pred_check_branch
      %144 = sbr.rel (%p142) target = $region65
    $region64: #{forward.1} parent=1 // pred_region
      // Predicated region
      $region66: #{forward.1} parent=64 // pred_check
        _
      $region67: #{forward.1} parent=64 // pred_check_branch
        %146 = sbr.rel target = $region69
      $region68: #{forward.1} parent=64 // pred_region
        %147 = sst [smem:[#allocation19]] [#allocation18]
        %148 = sst [smem:[#allocation20]] [#allocation17]
      $region69: #{forward.1} parent=64 // pred_fallthru
        _
      %150 = shalt.err (0)
      %s152 = sshll.u32 %s2, 4
      %s153 = int_to_ptr.hbm [resolvable:$true] %s152
      %s154 = sshll.u32 [#allocation2], 4
      %s155 = int_to_ptr.vmem [resolvable:$true] %s154
      %157 = dma.hbm_to_vmem [thread:$0]  %s153, 16384, %s155, [#allocation5]
      %s158 = scalar_lea.sflag [#allocation5], 1
      // Predicated region
      $region70: #{forward.1} parent=64 // pred_check
        _
      $region71: #{forward.1} parent=64 // pred_check_branch
        %160 = sbr.rel target = $region73
      $region72: #{forward.1} parent=64 // pred_region
        %161 = sst [smem:[#allocation19]] [#allocation22]
        %162 = sst [smem:[#allocation20]] [#allocation21]
      $region73: #{forward.1} parent=64 // pred_fallthru
        _
      %164 = shalt.err (0)
      %s166 = sshll.u32 %s3, 4
      %s167 = int_to_ptr.hbm [resolvable:$true] %s166
      %s168 = sshll.u32 [#allocation3], 4
      %s169 = int_to_ptr.vmem [resolvable:$true] %s168
      %171 = dma.hbm_to_vmem [thread:$0]  %s167, 16384, %s169, %s158
      %s172 = scalar_lea.sflag [#allocation5], 2
      // Predicated region
      $region74: #{forward.1} parent=64 // pred_check
        _
      $region75: #{forward.1} parent=64 // pred_check_branch
        %174 = sbr.rel target = $region77
      $region76: #{forward.1} parent=64 // pred_region
        %175 = sst [smem:[#allocation19]] [#allocation24]
        %176 = sst [smem:[#allocation20]] [#allocation23]
      $region77: #{forward.1} parent=64 // pred_fallthru
        _
      %178 = shalt.err (0)
      %s180 = sshll.u32 %s6, 4
      %s181 = int_to_ptr.hbm [resolvable:$true] %s180
      %s182 = sshll.u32 [#allocation4], 4
      %s183 = int_to_ptr.vmem [resolvable:$true] %s182
      %185 = dma.hbm_to_vmem [thread:$0]  %s181, 4096, %s183, %s172
    $region65: #{forward.1} parent=1 // pred_fallthru
      _
    %v186 = vld [vmem:[%s0] sm:$0xff]
    %v187 = vpack.c.bf16 %v186, %v186
    %v188 = vld [vmem:[#allocation6] sm:$0xff]
    %v189 = vld [vmem:[#allocation6 + $0x8] sm:$0xff]
    %v190 = vld [vmem:[#allocation6 + $0x10] sm:$0xff]
    %v191 = vld [vmem:[#allocation6 + $0x18] sm:$0xff]
    %v192 = vld [vmem:[#allocation6 + $0x20] sm:$0xff]
    %v193 = vld [vmem:[#allocation6 + $0x28] sm:$0xff]
    %v194 = vld [vmem:[#allocation6 + $0x30] sm:$0xff]
    %v195 = vld [vmem:[#allocation6 + $0x38] sm:$0xff]
    %v196 = vld [vmem:[#allocation6 + $0x40] sm:$0xff]
    %v197 = vld [vmem:[#allocation6 + $0x48] sm:$0xff]
    %v198 = vld [vmem:[#allocation6 + $0x50] sm:$0xff]
    %v199 = vld [vmem:[#allocation6 + $0x58] sm:$0xff]
    %v200 = vld [vmem:[#allocation6 + $0x60] sm:$0xff]
    %v201 = vld [vmem:[#allocation6 + $0x68] sm:$0xff]
    %v202 = vld [vmem:[#allocation6 + $0x70] sm:$0xff]
    %v203 = vld [vmem:[#allocation6 + $0x78] sm:$0xff]
    %v204 = vld [vmem:[#allocation6 + $0x80] sm:$0xff]
    %v205 = vld [vmem:[#allocation6 + $0x88] sm:$0xff]
    %v206 = vld [vmem:[#allocation6 + $0x90] sm:$0xff]
    %v207 = vld [vmem:[#allocation6 + $0x98] sm:$0xff]
    %v208 = vld [vmem:[#allocation6 + $0xa0] sm:$0xff]
    %v209 = vld [vmem:[#allocation6 + $0xa8] sm:$0xff]
    %v210 = vld [vmem:[#allocation6 + $0xb0] sm:$0xff]
    %v211 = vld [vmem:[#allocation6 + $0xb8] sm:$0xff]
    %v212 = vld [vmem:[#allocation6 + $0xc0] sm:$0xff]
    %v213 = vld [vmem:[#allocation6 + $0xc8] sm:$0xff]
    %v214 = vld [vmem:[#allocation6 + $0xd0] sm:$0xff]
    %v215 = vld [vmem:[#allocation6 + $0xd8] sm:$0xff]
    %v216 = vld [vmem:[#allocation6 + $0xe0] sm:$0xff]
    %v217 = vld [vmem:[#allocation6 + $0xe8] sm:$0xff]
    %v218 = vld [vmem:[#allocation6 + $0xf0] sm:$0xff]
    %v219 = vld [vmem:[#allocation6 + $0xf8] sm:$0xff]
    %v220 = vld [vmem:[#allocation16] ss:$8 sm:$0xf]
    %v222 = vperm.slane %v220, 0
    %v223 = vperm.slane %v220, 1
    %v224 = vperm.slane %v220, 2
    %v225 = vperm.slane %v220, 3
    %v262 = vunpack.c.l.b16 %v188
    %v263 = vunpack.c.h.b16 %v188
    %v264 = vunpack.c.l.b16 %v189
    %v265 = vunpack.c.h.b16 %v189
    %v266 = vunpack.c.l.b16 %v190
    %v267 = vunpack.c.h.b16 %v190
    %v268 = vunpack.c.l.b16 %v191
    %v269 = vunpack.c.h.b16 %v191
    %v270 = vunpack.c.l.b16 %v192
    %v271 = vunpack.c.h.b16 %v192
    %v272 = vunpack.c.l.b16 %v193
    %v273 = vunpack.c.h.b16 %v193
    %v274 = vunpack.c.l.b16 %v194
    %v275 = vunpack.c.h.b16 %v194
    %v276 = vunpack.c.l.b16 %v195
    %v277 = vunpack.c.h.b16 %v195
    %v278 = vunpack.c.l.b16 %v196
    %v279 = vunpack.c.h.b16 %v196
    %v280 = vunpack.c.l.b16 %v197
    %v281 = vunpack.c.h.b16 %v197
    %v282 = vunpack.c.l.b16 %v198
    %v283 = vunpack.c.h.b16 %v198
    %v284 = vunpack.c.l.b16 %v199
    %v285 = vunpack.c.h.b16 %v199
    %v286 = vunpack.c.l.b16 %v200
    %v287 = vunpack.c.h.b16 %v200
    %v288 = vunpack.c.l.b16 %v201
    %v289 = vunpack.c.h.b16 %v201
    %v290 = vunpack.c.l.b16 %v202
    %v291 = vunpack.c.h.b16 %v202
    %v292 = vunpack.c.l.b16 %v203
    %v293 = vunpack.c.h.b16 %v203
    %v294 = vunpack.c.l.b16 %v204
    %v295 = vunpack.c.h.b16 %v204
    %v296 = vunpack.c.l.b16 %v205
    %v297 = vunpack.c.h.b16 %v205
    %v298 = vunpack.c.l.b16 %v206
    %v299 = vunpack.c.h.b16 %v206
    %v300 = vunpack.c.l.b16 %v207
    %v301 = vunpack.c.h.b16 %v207
    %v302 = vunpack.c.l.b16 %v208
    %v303 = vunpack.c.h.b16 %v208
    %v304 = vunpack.c.l.b16 %v209
    %v305 = vunpack.c.h.b16 %v209
    %v306 = vunpack.c.l.b16 %v210
    %v307 = vunpack.c.h.b16 %v210
    %v308 = vunpack.c.l.b16 %v211
    %v309 = vunpack.c.h.b16 %v211
    %v310 = vunpack.c.l.b16 %v212
    %v311 = vunpack.c.h.b16 %v212
    %v312 = vunpack.c.l.b16 %v213
    %v313 = vunpack.c.h.b16 %v213
    %v314 = vunpack.c.l.b16 %v214
    %v315 = vunpack.c.h.b16 %v214
    %v316 = vunpack.c.l.b16 %v215
    %v317 = vunpack.c.h.b16 %v215
    %v318 = vunpack.c.l.b16 %v216
    %v319 = vunpack.c.h.b16 %v216
    %v320 = vunpack.c.l.b16 %v217
    %v321 = vunpack.c.h.b16 %v217
    %v322 = vunpack.c.l.b16 %v218
    %v323 = vunpack.c.h.b16 %v218
    %v324 = vunpack.c.l.b16 %v219
    %v325 = vunpack.c.h.b16 %v219
    %v326 = vpack.c.b16 %v266, %v262
    %v327 = vpack.c.b16 %v267, %v263
    %v328 = vpack.c.b16 %v268, %v264
    %v329 = vpack.c.b16 %v269, %v265
    %v330 = vpack.c.b16 %v274, %v270
    %v331 = vpack.c.b16 %v275, %v271
    %v332 = vpack.c.b16 %v276, %v272
    %v333 = vpack.c.b16 %v277, %v273
    %v334 = vpack.c.b16 %v282, %v278
    %v335 = vpack.c.b16 %v283, %v279
    %v336 = vpack.c.b16 %v284, %v280
    %v337 = vpack.c.b16 %v285, %v281
    %v338 = vpack.c.b16 %v290, %v286
    %v339 = vpack.c.b16 %v291, %v287
    %v340 = vpack.c.b16 %v292, %v288
    %v341 = vpack.c.b16 %v293, %v289
    %v342 = vpack.c.b16 %v298, %v294
    %v343 = vpack.c.b16 %v299, %v295
    %v344 = vpack.c.b16 %v300, %v296
    %v345 = vpack.c.b16 %v301, %v297
    %v346 = vpack.c.b16 %v306, %v302
    %v347 = vpack.c.b16 %v307, %v303
    %v348 = vpack.c.b16 %v308, %v304
    %v349 = vpack.c.b16 %v309, %v305
    %v350 = vpack.c.b16 %v314, %v310
    %v351 = vpack.c.b16 %v315, %v311
    %v352 = vpack.c.b16 %v316, %v312
    %v353 = vpack.c.b16 %v317, %v313
    %v354 = vpack.c.b16 %v322, %v318
    %v355 = vpack.c.b16 %v323, %v319
    %v356 = vpack.c.b16 %v324, %v320
    %v357 = vpack.c.b16 %v325, %v321
    %390 = vmatpush.bf16.msra.mxu0 %v354
    %391 = vmatpush.bf16.msra.mxu0 %v350
    %392 = vmatpush.bf16.msra.mxu0 %v346
    %393 = vmatpush.bf16.msra.mxu0 %v342
    %394 = vmatpush.bf16.msra.mxu0 %v338
    %395 = vmatpush.bf16.msra.mxu0 %v334
    %396 = vmatpush.bf16.msra.mxu0 %v330
    %397 = vmatpush.bf16.msra.mxu0 %v326
    %398 = vmatmul.bf16.gmra.mxu0 %v187
    %v399 = vpop.f32.mrf.mxu0
    %v400 = vadd.f32 %v222, %v399
    %v401 = vpop.f32.mrf.mxu0
    %402 = vdwg.mxu0
    %403 = vmatpush.bf16.msra.mxu0 %v355
    %404 = vmatpush.bf16.msra.mxu0 %v351
    %405 = vmatpush.bf16.msra.mxu0 %v347
    %406 = vmatpush.bf16.msra.mxu0 %v343
    %407 = vmatpush.bf16.msra.mxu0 %v339
    %408 = vmatpush.bf16.msra.mxu0 %v335
    %409 = vmatpush.bf16.msra.mxu0 %v331
    %410 = vmatpush.bf16.msra.mxu0 %v327
    %411 = vmatmul.bf16.gmra.mxu0 %v187
    %v412 = vpop.f32.mrf.mxu0
    %v413 = vadd.f32 %v223, %v412
    %v414 = vpop.f32.mrf.mxu0
    %415 = vdwg.mxu0
    %416 = vmatpush.bf16.msra.mxu0 %v356
    %417 = vmatpush.bf16.msra.mxu0 %v352
    %418 = vmatpush.bf16.msra.mxu0 %v348
    %419 = vmatpush.bf16.msra.mxu0 %v344
    %420 = vmatpush.bf16.msra.mxu0 %v340
    %421 = vmatpush.bf16.msra.mxu0 %v336
    %422 = vmatpush.bf16.msra.mxu0 %v332
    %423 = vmatpush.bf16.msra.mxu0 %v328
    %424 = vmatmul.bf16.gmra.mxu0 %v187
    %v425 = vpop.f32.mrf.mxu0
    %v426 = vadd.f32 %v224, %v425
    %v427 = vpop.f32.mrf.mxu0
    %428 = vdwg.mxu0
    %429 = vmatpush.bf16.msra.mxu0 %v357
    %430 = vmatpush.bf16.msra.mxu0 %v353
    %431 = vmatpush.bf16.msra.mxu0 %v349
    %432 = vmatpush.bf16.msra.mxu0 %v345
    %433 = vmatpush.bf16.msra.mxu0 %v341
    %434 = vmatpush.bf16.msra.mxu0 %v337
    %435 = vmatpush.bf16.msra.mxu0 %v333
    %436 = vmatpush.bf16.msra.mxu0 %v329
    %437 = vmatmul.bf16.gmra.mxu0 %v187
    %v438 = vpop.f32.mrf.mxu0
    %v439 = vadd.f32 %v225, %v438
    %v440 = vpop.f32.mrf.mxu0
    %441 = vdwg.mxu0
    %v442 = vmax.f32 %v400, 0.0
    %v443 = vmax.f32 %v413, 0.0
    %v444 = vmax.f32 %v426, 0.0
    %v445 = vmax.f32 %v439, 0.0
    %v446 = vmin.f32 %v442, 6.0
    %v447 = vmin.f32 %v443, 6.0
    %v448 = vmin.f32 %v444, 6.0
    %v449 = vmin.f32 %v445, 6.0
    // Predicated region
    $region78: #{forward.1} parent=1 // pred_check
      %p450 = pneg %p141
    $region79: #{forward.1} parent=1 // pred_check_branch
      %452 = sbr.rel (%p450) target = $region81
    $region80: #{forward.1} parent=1 // pred_region
      %s453 = smul.u32 4, 64
      %s454 = smul.u32 %s453, 4
      %s455 = sshll.u32 %s454, 4
      %456 = dma.done [#allocation5], %s455
    $region81: #{forward.1} parent=1 // pred_fallthru
      _
    %v457 = vpack.c.bf16 %v446, %v446
    %v458 = vpack.c.bf16 %v447, %v447
    %v459 = vpack.c.bf16 %v448, %v448
    %v460 = vpack.c.bf16 %v449, %v449
    %v461 = vld [vmem:[#allocation2] sm:$0xff]
    %v462 = vld [vmem:[#allocation2 + $0x8] sm:$0xff]
    %v463 = vld [vmem:[#allocation2 + $0x10] sm:$0xff]
    %v464 = vld [vmem:[#allocation2 + $0x18] sm:$0xff]
    %v465 = vld [vmem:[#allocation2 + $0x20] sm:$0xff]
    %v466 = vld [vmem:[#allocation2 + $0x28] sm:$0xff]
    %v467 = vld [vmem:[#allocation2 + $0x30] sm:$0xff]
    %v468 = vld [vmem:[#allocation2 + $0x38] sm:$0xff]
    %v469 = vld [vmem:[#allocation2 + $0x40] sm:$0xff]
    %v470 = vld [vmem:[#allocation2 + $0x48] sm:$0xff]
    %v471 = vld [vmem:[#allocation2 + $0x50] sm:$0xff]
    %v472 = vld [vmem:[#allocation2 + $0x58] sm:$0xff]
    %v473 = vld [vmem:[#allocation2 + $0x60] sm:$0xff]
    %v474 = vld [vmem:[#allocation2 + $0x68] sm:$0xff]
    %v475 = vld [vmem:[#allocation2 + $0x70] sm:$0xff]
    %v476 = vld [vmem:[#allocation2 + $0x78] sm:$0xff]
    %v477 = vld [vmem:[#allocation2 + $0x80] sm:$0xff]
    %v478 = vld [vmem:[#allocation2 + $0x88] sm:$0xff]
    %v479 = vld [vmem:[#allocation2 + $0x90] sm:$0xff]
    %v480 = vld [vmem:[#allocation2 + $0x98] sm:$0xff]
    %v481 = vld [vmem:[#allocation2 + $0xa0] sm:$0xff]
    %v482 = vld [vmem:[#allocation2 + $0xa8] sm:$0xff]
    %v483 = vld [vmem:[#allocation2 + $0xb0] sm:$0xff]
    %v484 = vld [vmem:[#allocation2 + $0xb8] sm:$0xff]
    %v485 = vld [vmem:[#allocation2 + $0xc0] sm:$0xff]
    %v486 = vld [vmem:[#allocation2 + $0xc8] sm:$0xff]
    %v487 = vld [vmem:[#allocation2 + $0xd0] sm:$0xff]
    %v488 = vld [vmem:[#allocation2 + $0xd8] sm:$0xff]
    %v489 = vld [vmem:[#allocation2 + $0xe0] sm:$0xff]
    %v490 = vld [vmem:[#allocation2 + $0xe8] sm:$0xff]
    %v491 = vld [vmem:[#allocation2 + $0xf0] sm:$0xff]
    %v492 = vld [vmem:[#allocation2 + $0xf8] sm:$0xff]
    %v493 = vld [vmem:[#allocation2 + $0x100] sm:$0xff]
    %v494 = vld [vmem:[#allocation2 + $0x108] sm:$0xff]
    %v495 = vld [vmem:[#allocation2 + $0x110] sm:$0xff]
    %v496 = vld [vmem:[#allocation2 + $0x118] sm:$0xff]
    %v497 = vld [vmem:[#allocation2 + $0x120] sm:$0xff]
    %v498 = vld [vmem:[#allocation2 + $0x128] sm:$0xff]
    %v499 = vld [vmem:[#allocation2 + $0x130] sm:$0xff]
    %v500 = vld [vmem:[#allocation2 + $0x138] sm:$0xff]
    %v501 = vld [vmem:[#allocation2 + $0x140] sm:$0xff]
    %v502 = vld [vmem:[#allocation2 + $0x148] sm:$0xff]
    %v503 = vld [vmem:[#allocation2 + $0x150] sm:$0xff]
    %v504 = vld [vmem:[#allocation2 + $0x158] sm:$0xff]
    %v505 = vld [vmem:[#allocation2 + $0x160] sm:$0xff]
    %v506 = vld [vmem:[#allocation2 + $0x168] sm:$0xff]
    %v507 = vld [vmem:[#allocation2 + $0x170] sm:$0xff]
    %v508 = vld [vmem:[#allocation2 + $0x178] sm:$0xff]
    %v509 = vld [vmem:[#allocation2 + $0x180] sm:$0xff]
    %v510 = vld [vmem:[#allocation2 + $0x188] sm:$0xff]
    %v511 = vld [vmem:[#allocation2 + $0x190] sm:$0xff]
    %v512 = vld [vmem:[#allocation2 + $0x198] sm:$0xff]
    %v513 = vld [vmem:[#allocation2 + $0x1a0] sm:$0xff]
    %v514 = vld [vmem:[#allocation2 + $0x1a8] sm:$0xff]
    %v515 = vld [vmem:[#allocation2 + $0x1b0] sm:$0xff]
    %v516 = vld [vmem:[#allocation2 + $0x1b8] sm:$0xff]
    %v517 = vld [vmem:[#allocation2 + $0x1c0] sm:$0xff]
    %v518 = vld [vmem:[#allocation2 + $0x1c8] sm:$0xff]
    %v519 = vld [vmem:[#allocation2 + $0x1d0] sm:$0xff]
    %v520 = vld [vmem:[#allocation2 + $0x1d8] sm:$0xff]
    %v521 = vld [vmem:[#allocation2 + $0x1e0] sm:$0xff]
    %v522 = vld [vmem:[#allocation2 + $0x1e8] sm:$0xff]
    %v523 = vld [vmem:[#allocation2 + $0x1f0] sm:$0xff]
    %v524 = vld [vmem:[#allocation2 + $0x1f8] sm:$0xff]
    %v525 = vld [vmem:[#allocation2 + $0x200] sm:$0xff]
    %v526 = vld [vmem:[#allocation2 + $0x208] sm:$0xff]
    %v527 = vld [vmem:[#allocation2 + $0x210] sm:$0xff]
    %v528 = vld [vmem:[#allocation2 + $0x218] sm:$0xff]
    %v529 = vld [vmem:[#allocation2 + $0x220] sm:$0xff]
    %v530 = vld [vmem:[#allocation2 + $0x228] sm:$0xff]
    %v531 = vld [vmem:[#allocation2 + $0x230] sm:$0xff]
    %v532 = vld [vmem:[#allocation2 + $0x238] sm:$0xff]
    %v533 = vld [vmem:[#allocation2 + $0x240] sm:$0xff]
    %v534 = vld [vmem:[#allocation2 + $0x248] sm:$0xff]
    %v535 = vld [vmem:[#allocation2 + $0x250] sm:$0xff]
    %v536 = vld [vmem:[#allocation2 + $0x258] sm:$0xff]
    %v537 = vld [vmem:[#allocation2 + $0x260] sm:$0xff]
    %v538 = vld [vmem:[#allocation2 + $0x268] sm:$0xff]
    %v539 = vld [vmem:[#allocation2 + $0x270] sm:$0xff]
    %v540 = vld [vmem:[#allocation2 + $0x278] sm:$0xff]
    %v541 = vld [vmem:[#allocation2 + $0x280] sm:$0xff]
    %v542 = vld [vmem:[#allocation2 + $0x288] sm:$0xff]
    %v543 = vld [vmem:[#allocation2 + $0x290] sm:$0xff]
    %v544 = vld [vmem:[#allocation2 + $0x298] sm:$0xff]
    %v545 = vld [vmem:[#allocation2 + $0x2a0] sm:$0xff]
    %v546 = vld [vmem:[#allocation2 + $0x2a8] sm:$0xff]
    %v547 = vld [vmem:[#allocation2 + $0x2b0] sm:$0xff]
    %v548 = vld [vmem:[#allocation2 + $0x2b8] sm:$0xff]
    %v549 = vld [vmem:[#allocation2 + $0x2c0] sm:$0xff]
    %v550 = vld [vmem:[#allocation2 + $0x2c8] sm:$0xff]
    %v551 = vld [vmem:[#allocation2 + $0x2d0] sm:$0xff]
    %v552 = vld [vmem:[#allocation2 + $0x2d8] sm:$0xff]
    %v553 = vld [vmem:[#allocation2 + $0x2e0] sm:$0xff]
    %v554 = vld [vmem:[#allocation2 + $0x2e8] sm:$0xff]
    %v555 = vld [vmem:[#allocation2 + $0x2f0] sm:$0xff]
    %v556 = vld [vmem:[#allocation2 + $0x2f8] sm:$0xff]
    %v557 = vld [vmem:[#allocation2 + $0x300] sm:$0xff]
    %v558 = vld [vmem:[#allocation2 + $0x308] sm:$0xff]
    %v559 = vld [vmem:[#allocation2 + $0x310] sm:$0xff]
    %v560 = vld [vmem:[#allocation2 + $0x318] sm:$0xff]
    %v561 = vld [vmem:[#allocation2 + $0x320] sm:$0xff]
    %v562 = vld [vmem:[#allocation2 + $0x328] sm:$0xff]
    %v563 = vld [vmem:[#allocation2 + $0x330] sm:$0xff]
    %v564 = vld [vmem:[#allocation2 + $0x338] sm:$0xff]
    %v565 = vld [vmem:[#allocation2 + $0x340] sm:$0xff]
    %v566 = vld [vmem:[#allocation2 + $0x348] sm:$0xff]
    %v567 = vld [vmem:[#allocation2 + $0x350] sm:$0xff]
    %v568 = vld [vmem:[#allocation2 + $0x358] sm:$0xff]
    %v569 = vld [vmem:[#allocation2 + $0x360] sm:$0xff]
    %v570 = vld [vmem:[#allocation2 + $0x368] sm:$0xff]
    %v571 = vld [vmem:[#allocation2 + $0x370] sm:$0xff]
    %v572 = vld [vmem:[#allocation2 + $0x378] sm:$0xff]
    %v573 = vld [vmem:[#allocation2 + $0x380] sm:$0xff]
    %v574 = vld [vmem:[#allocation2 + $0x388] sm:$0xff]
    %v575 = vld [vmem:[#allocation2 + $0x390] sm:$0xff]
    %v576 = vld [vmem:[#allocation2 + $0x398] sm:$0xff]
    %v577 = vld [vmem:[#allocation2 + $0x3a0] sm:$0xff]
    %v578 = vld [vmem:[#allocation2 + $0x3a8] sm:$0xff]
    %v579 = vld [vmem:[#allocation2 + $0x3b0] sm:$0xff]
    %v580 = vld [vmem:[#allocation2 + $0x3b8] sm:$0xff]
    %v581 = vld [vmem:[#allocation2 + $0x3c0] sm:$0xff]
    %v582 = vld [vmem:[#allocation2 + $0x3c8] sm:$0xff]
    %v583 = vld [vmem:[#allocation2 + $0x3d0] sm:$0xff]
    %v584 = vld [vmem:[#allocation2 + $0x3d8] sm:$0xff]
    %v585 = vld [vmem:[#allocation2 + $0x3e0] sm:$0xff]
    %v586 = vld [vmem:[#allocation2 + $0x3e8] sm:$0xff]
    %v587 = vld [vmem:[#allocation2 + $0x3f0] sm:$0xff]
    %v588 = vld [vmem:[#allocation2 + $0x3f8] sm:$0xff]
    %s589 = scalar_lea.vmem [#allocation16], 1
    %v590 = vld [vmem:[%s589] ss:$8 sm:$0xf]
    %v592 = vperm.slane %v590, 0
    %v593 = vperm.slane %v590, 1
    %v594 = vperm.slane %v590, 2
    %v595 = vperm.slane %v590, 3
    %v728 = vunpack.c.l.b16 %v461
    %v729 = vunpack.c.h.b16 %v461
    %v730 = vunpack.c.l.b16 %v462
    %v731 = vunpack.c.h.b16 %v462
    %v732 = vunpack.c.l.b16 %v463
    %v733 = vunpack.c.h.b16 %v463
    %v734 = vunpack.c.l.b16 %v464
    %v735 = vunpack.c.h.b16 %v464
    %v736 = vunpack.c.l.b16 %v465
    %v737 = vunpack.c.h.b16 %v465
    %v738 = vunpack.c.l.b16 %v466
    %v739 = vunpack.c.h.b16 %v466
    %v740 = vunpack.c.l.b16 %v467
    %v741 = vunpack.c.h.b16 %v467
    %v742 = vunpack.c.l.b16 %v468
    %v743 = vunpack.c.h.b16 %v468
    %v744 = vunpack.c.l.b16 %v469
    %v745 = vunpack.c.h.b16 %v469
    %v746 = vunpack.c.l.b16 %v470
    %v747 = vunpack.c.h.b16 %v470
    %v748 = vunpack.c.l.b16 %v471
    %v749 = vunpack.c.h.b16 %v471
    %v750 = vunpack.c.l.b16 %v472
    %v751 = vunpack.c.h.b16 %v472
    %v752 = vunpack.c.l.b16 %v473
    %v753 = vunpack.c.h.b16 %v473
    %v754 = vunpack.c.l.b16 %v474
    %v755 = vunpack.c.h.b16 %v474
    %v756 = vunpack.c.l.b16 %v475
    %v757 = vunpack.c.h.b16 %v475
    %v758 = vunpack.c.l.b16 %v476
    %v759 = vunpack.c.h.b16 %v476
    %v760 = vunpack.c.l.b16 %v477
    %v761 = vunpack.c.h.b16 %v477
    %v762 = vunpack.c.l.b16 %v478
    %v763 = vunpack.c.h.b16 %v478
    %v764 = vunpack.c.l.b16 %v479
    %v765 = vunpack.c.h.b16 %v479
    %v766 = vunpack.c.l.b16 %v480
    %v767 = vunpack.c.h.b16 %v480
    %v768 = vunpack.c.l.b16 %v481
    %v769 = vunpack.c.h.b16 %v481
    %v770 = vunpack.c.l.b16 %v482
    %v771 = vunpack.c.h.b16 %v482
    %v772 = vunpack.c.l.b16 %v483
    %v773 = vunpack.c.h.b16 %v483
    %v774 = vunpack.c.l.b16 %v484
    %v775 = vunpack.c.h.b16 %v484
    %v776 = vunpack.c.l.b16 %v485
    %v777 = vunpack.c.h.b16 %v485
    %v778 = vunpack.c.l.b16 %v486
    %v779 = vunpack.c.h.b16 %v486
    %v780 = vunpack.c.l.b16 %v487
    %v781 = vunpack.c.h.b16 %v487
    %v782 = vunpack.c.l.b16 %v488
    %v783 = vunpack.c.h.b16 %v488
    %v784 = vunpack.c.l.b16 %v489
    %v785 = vunpack.c.h.b16 %v489
    %v786 = vunpack.c.l.b16 %v490
    %v787 = vunpack.c.h.b16 %v490
    %v788 = vunpack.c.l.b16 %v491
    %v789 = vunpack.c.h.b16 %v491
    %v790 = vunpack.c.l.b16 %v492
    %v791 = vunpack.c.h.b16 %v492
    %v792 = vunpack.c.l.b16 %v493
    %v793 = vunpack.c.h.b16 %v493
    %v794 = vunpack.c.l.b16 %v494
    %v795 = vunpack.c.h.b16 %v494
    %v796 = vunpack.c.l.b16 %v495
    %v797 = vunpack.c.h.b16 %v495
    %v798 = vunpack.c.l.b16 %v496
    %v799 = vunpack.c.h.b16 %v496
    %v800 = vunpack.c.l.b16 %v497
    %v801 = vunpack.c.h.b16 %v497
    %v802 = vunpack.c.l.b16 %v498
    %v803 = vunpack.c.h.b16 %v498
    %v804 = vunpack.c.l.b16 %v499
    %v805 = vunpack.c.h.b16 %v499
    %v806 = vunpack.c.l.b16 %v500
    %v807 = vunpack.c.h.b16 %v500
    %v808 = vunpack.c.l.b16 %v501
    %v809 = vunpack.c.h.b16 %v501
    %v810 = vunpack.c.l.b16 %v502
    %v811 = vunpack.c.h.b16 %v502
    %v812 = vunpack.c.l.b16 %v503
    %v813 = vunpack.c.h.b16 %v503
    %v814 = vunpack.c.l.b16 %v504
    %v815 = vunpack.c.h.b16 %v504
    %v816 = vunpack.c.l.b16 %v505
    %v817 = vunpack.c.h.b16 %v505
    %v818 = vunpack.c.l.b16 %v506
    %v819 = vunpack.c.h.b16 %v506
    %v820 = vunpack.c.l.b16 %v507
    %v821 = vunpack.c.h.b16 %v507
    %v822 = vunpack.c.l.b16 %v508
    %v823 = vunpack.c.h.b16 %v508
    %v824 = vunpack.c.l.b16 %v509
    %v825 = vunpack.c.h.b16 %v509
    %v826 = vunpack.c.l.b16 %v510
    %v827 = vunpack.c.h.b16 %v510
    %v828 = vunpack.c.l.b16 %v511
    %v829 = vunpack.c.h.b16 %v511
    %v830 = vunpack.c.l.b16 %v512
    %v831 = vunpack.c.h.b16 %v512
    %v832 = vunpack.c.l.b16 %v513
    %v833 = vunpack.c.h.b16 %v513
    %v834 = vunpack.c.l.b16 %v514
    %v835 = vunpack.c.h.b16 %v514
    %v836 = vunpack.c.l.b16 %v515
    %v837 = vunpack.c.h.b16 %v515
    %v838 = vunpack.c.l.b16 %v516
    %v839 = vunpack.c.h.b16 %v516
    %v840 = vunpack.c.l.b16 %v517
    %v841 = vunpack.c.h.b16 %v517
    %v842 = vunpack.c.l.b16 %v518
    %v843 = vunpack.c.h.b16 %v518
    %v844 = vunpack.c.l.b16 %v519
    %v845 = vunpack.c.h.b16 %v519
    %v846 = vunpack.c.l.b16 %v520
    %v847 = vunpack.c.h.b16 %v520
    %v848 = vunpack.c.l.b16 %v521
    %v849 = vunpack.c.h.b16 %v521
    %v850 = vunpack.c.l.b16 %v522
    %v851 = vunpack.c.h.b16 %v522
    %v852 = vunpack.c.l.b16 %v523
    %v853 = vunpack.c.h.b16 %v523
    %v854 = vunpack.c.l.b16 %v524
    %v855 = vunpack.c.h.b16 %v524
    %v856 = vunpack.c.l.b16 %v525
    %v857 = vunpack.c.h.b16 %v525
    %v858 = vunpack.c.l.b16 %v526
    %v859 = vunpack.c.h.b16 %v526
    %v860 = vunpack.c.l.b16 %v527
    %v861 = vunpack.c.h.b16 %v527
    %v862 = vunpack.c.l.b16 %v528
    %v863 = vunpack.c.h.b16 %v528
    %v864 = vunpack.c.l.b16 %v529
    %v865 = vunpack.c.h.b16 %v529
    %v866 = vunpack.c.l.b16 %v530
    %v867 = vunpack.c.h.b16 %v530
    %v868 = vunpack.c.l.b16 %v531
    %v869 = vunpack.c.h.b16 %v531
    %v870 = vunpack.c.l.b16 %v532
    %v871 = vunpack.c.h.b16 %v532
    %v872 = vunpack.c.l.b16 %v533
    %v873 = vunpack.c.h.b16 %v533
    %v874 = vunpack.c.l.b16 %v534
    %v875 = vunpack.c.h.b16 %v534
    %v876 = vunpack.c.l.b16 %v535
    %v877 = vunpack.c.h.b16 %v535
    %v878 = vunpack.c.l.b16 %v536
    %v879 = vunpack.c.h.b16 %v536
    %v880 = vunpack.c.l.b16 %v537
    %v881 = vunpack.c.h.b16 %v537
    %v882 = vunpack.c.l.b16 %v538
    %v883 = vunpack.c.h.b16 %v538
    %v884 = vunpack.c.l.b16 %v539
    %v885 = vunpack.c.h.b16 %v539
    %v886 = vunpack.c.l.b16 %v540
    %v887 = vunpack.c.h.b16 %v540
    %v888 = vunpack.c.l.b16 %v541
    %v889 = vunpack.c.h.b16 %v541
    %v890 = vunpack.c.l.b16 %v542
    %v891 = vunpack.c.h.b16 %v542
    %v892 = vunpack.c.l.b16 %v543
    %v893 = vunpack.c.h.b16 %v543
    %v894 = vunpack.c.l.b16 %v544
    %v895 = vunpack.c.h.b16 %v544
    %v896 = vunpack.c.l.b16 %v545
    %v897 = vunpack.c.h.b16 %v545
    %v898 = vunpack.c.l.b16 %v546
    %v899 = vunpack.c.h.b16 %v546
    %v900 = vunpack.c.l.b16 %v547
    %v901 = vunpack.c.h.b16 %v547
    %v902 = vunpack.c.l.b16 %v548
    %v903 = vunpack.c.h.b16 %v548
    %v904 = vunpack.c.l.b16 %v549
    %v905 = vunpack.c.h.b16 %v549
    %v906 = vunpack.c.l.b16 %v550
    %v907 = vunpack.c.h.b16 %v550
    %v908 = vunpack.c.l.b16 %v551
    %v909 = vunpack.c.h.b16 %v551
    %v910 = vunpack.c.l.b16 %v552
    %v911 = vunpack.c.h.b16 %v552
    %v912 = vunpack.c.l.b16 %v553
    %v913 = vunpack.c.h.b16 %v553
    %v914 = vunpack.c.l.b16 %v554
    %v915 = vunpack.c.h.b16 %v554
    %v916 = vunpack.c.l.b16 %v555
    %v917 = vunpack.c.h.b16 %v555
    %v918 = vunpack.c.l.b16 %v556
    %v919 = vunpack.c.h.b16 %v556
    %v920 = vunpack.c.l.b16 %v557
    %v921 = vunpack.c.h.b16 %v557
    %v922 = vunpack.c.l.b16 %v558
    %v923 = vunpack.c.h.b16 %v558
    %v924 = vunpack.c.l.b16 %v559
    %v925 = vunpack.c.h.b16 %v559
    %v926 = vunpack.c.l.b16 %v560
    %v927 = vunpack.c.h.b16 %v560
    %v928 = vunpack.c.l.b16 %v561
    %v929 = vunpack.c.h.b16 %v561
    %v930 = vunpack.c.l.b16 %v562
    %v931 = vunpack.c.h.b16 %v562
    %v932 = vunpack.c.l.b16 %v563
    %v933 = vunpack.c.h.b16 %v563
    %v934 = vunpack.c.l.b16 %v564
    %v935 = vunpack.c.h.b16 %v564
    %v936 = vunpack.c.l.b16 %v565
    %v937 = vunpack.c.h.b16 %v565
    %v938 = vunpack.c.l.b16 %v566
    %v939 = vunpack.c.h.b16 %v566
    %v940 = vunpack.c.l.b16 %v567
    %v941 = vunpack.c.h.b16 %v567
    %v942 = vunpack.c.l.b16 %v568
    %v943 = vunpack.c.h.b16 %v568
    %v944 = vunpack.c.l.b16 %v569
    %v945 = vunpack.c.h.b16 %v569
    %v946 = vunpack.c.l.b16 %v570
    %v947 = vunpack.c.h.b16 %v570
    %v948 = vunpack.c.l.b16 %v571
    %v949 = vunpack.c.h.b16 %v571
    %v950 = vunpack.c.l.b16 %v572
    %v951 = vunpack.c.h.b16 %v572
    %v952 = vunpack.c.l.b16 %v573
    %v953 = vunpack.c.h.b16 %v573
    %v954 = vunpack.c.l.b16 %v574
    %v955 = vunpack.c.h.b16 %v574
    %v956 = vunpack.c.l.b16 %v575
    %v957 = vunpack.c.h.b16 %v575
    %v958 = vunpack.c.l.b16 %v576
    %v959 = vunpack.c.h.b16 %v576
    %v960 = vunpack.c.l.b16 %v577
    %v961 = vunpack.c.h.b16 %v577
    %v962 = vunpack.c.l.b16 %v578
    %v963 = vunpack.c.h.b16 %v578
    %v964 = vunpack.c.l.b16 %v579
    %v965 = vunpack.c.h.b16 %v579
    %v966 = vunpack.c.l.b16 %v580
    %v967 = vunpack.c.h.b16 %v580
    %v968 = vunpack.c.l.b16 %v581
    %v969 = vunpack.c.h.b16 %v581
    %v970 = vunpack.c.l.b16 %v582
    %v971 = vunpack.c.h.b16 %v582
    %v972 = vunpack.c.l.b16 %v583
    %v973 = vunpack.c.h.b16 %v583
    %v974 = vunpack.c.l.b16 %v584
    %v975 = vunpack.c.h.b16 %v584
    %v976 = vunpack.c.l.b16 %v585
    %v977 = vunpack.c.h.b16 %v585
    %v978 = vunpack.c.l.b16 %v586
    %v979 = vunpack.c.h.b16 %v586
    %v980 = vunpack.c.l.b16 %v587
    %v981 = vunpack.c.h.b16 %v587
    %v982 = vunpack.c.l.b16 %v588
    %v983 = vunpack.c.h.b16 %v588
    %v984 = vpack.c.b16 %v732, %v728
    %v985 = vpack.c.b16 %v733, %v729
    %v986 = vpack.c.b16 %v734, %v730
    %v987 = vpack.c.b16 %v735, %v731
    %v988 = vpack.c.b16 %v740, %v736
    %v989 = vpack.c.b16 %v741, %v737
    %v990 = vpack.c.b16 %v742, %v738
    %v991 = vpack.c.b16 %v743, %v739
    %v992 = vpack.c.b16 %v748, %v744
    %v993 = vpack.c.b16 %v749, %v745
    %v994 = vpack.c.b16 %v750, %v746
    %v995 = vpack.c.b16 %v751, %v747
    %v996 = vpack.c.b16 %v756, %v752
    %v997 = vpack.c.b16 %v757, %v753
    %v998 = vpack.c.b16 %v758, %v754
    %v999 = vpack.c.b16 %v759, %v755
    %v1000 = vpack.c.b16 %v764, %v760
    %v1001 = vpack.c.b16 %v765, %v761
    %v1002 = vpack.c.b16 %v766, %v762
    %v1003 = vpack.c.b16 %v767, %v763
    %v1004 = vpack.c.b16 %v772, %v768
    %v1005 = vpack.c.b16 %v773, %v769
    %v1006 = vpack.c.b16 %v774, %v770
    %v1007 = vpack.c.b16 %v775, %v771
    %v1008 = vpack.c.b16 %v780, %v776
    %v1009 = vpack.c.b16 %v781, %v777
    %v1010 = vpack.c.b16 %v782, %v778
    %v1011 = vpack.c.b16 %v783, %v779
    %v1012 = vpack.c.b16 %v788, %v784
    %v1013 = vpack.c.b16 %v789, %v785
    %v1014 = vpack.c.b16 %v790, %v786
    %v1015 = vpack.c.b16 %v791, %v787
    %v1016 = vpack.c.b16 %v796, %v792
    %v1017 = vpack.c.b16 %v797, %v793
    %v1018 = vpack.c.b16 %v798, %v794
    %v1019 = vpack.c.b16 %v799, %v795
    %v1020 = vpack.c.b16 %v804, %v800
    %v1021 = vpack.c.b16 %v805, %v801
    %v1022 = vpack.c.b16 %v806, %v802
    %v1023 = vpack.c.b16 %v807, %v803
    %v1024 = vpack.c.b16 %v812, %v808
    %v1025 = vpack.c.b16 %v813, %v809
    %v1026 = vpack.c.b16 %v814, %v810
    %v1027 = vpack.c.b16 %v815, %v811
    %v1028 = vpack.c.b16 %v820, %v816
    %v1029 = vpack.c.b16 %v821, %v817
    %v1030 = vpack.c.b16 %v822, %v818
    %v1031 = vpack.c.b16 %v823, %v819
    %v1032 = vpack.c.b16 %v828, %v824
    %v1033 = vpack.c.b16 %v829, %v825
    %v1034 = vpack.c.b16 %v830, %v826
    %v1035 = vpack.c.b16 %v831, %v827
    %v1036 = vpack.c.b16 %v836, %v832
    %v1037 = vpack.c.b16 %v837, %v833
    %v1038 = vpack.c.b16 %v838, %v834
    %v1039 = vpack.c.b16 %v839, %v835
    %v1040 = vpack.c.b16 %v844, %v840
    %v1041 = vpack.c.b16 %v845, %v841
    %v1042 = vpack.c.b16 %v846, %v842
    %v1043 = vpack.c.b16 %v847, %v843
    %v1044 = vpack.c.b16 %v852, %v848
    %v1045 = vpack.c.b16 %v853, %v849
    %v1046 = vpack.c.b16 %v854, %v850
    %v1047 = vpack.c.b16 %v855, %v851
    %v1048 = vpack.c.b16 %v860, %v856
    %v1049 = vpack.c.b16 %v861, %v857
    %v1050 = vpack.c.b16 %v862, %v858
    %v1051 = vpack.c.b16 %v863, %v859
    %v1052 = vpack.c.b16 %v868, %v864
    %v1053 = vpack.c.b16 %v869, %v865
    %v1054 = vpack.c.b16 %v870, %v866
    %v1055 = vpack.c.b16 %v871, %v867
    %v1056 = vpack.c.b16 %v876, %v872
    %v1057 = vpack.c.b16 %v877, %v873
    %v1058 = vpack.c.b16 %v878, %v874
    %v1059 = vpack.c.b16 %v879, %v875
    %v1060 = vpack.c.b16 %v884, %v880
    %v1061 = vpack.c.b16 %v885, %v881
    %v1062 = vpack.c.b16 %v886, %v882
    %v1063 = vpack.c.b16 %v887, %v883
    %v1064 = vpack.c.b16 %v892, %v888
    %v1065 = vpack.c.b16 %v893, %v889
    %v1066 = vpack.c.b16 %v894, %v890
    %v1067 = vpack.c.b16 %v895, %v891
    %v1068 = vpack.c.b16 %v900, %v896
    %v1069 = vpack.c.b16 %v901, %v897
    %v1070 = vpack.c.b16 %v902, %v898
    %v1071 = vpack.c.b16 %v903, %v899
    %v1072 = vpack.c.b16 %v908, %v904
    %v1073 = vpack.c.b16 %v909, %v905
    %v1074 = vpack.c.b16 %v910, %v906
    %v1075 = vpack.c.b16 %v911, %v907
    %v1076 = vpack.c.b16 %v916, %v912
    %v1077 = vpack.c.b16 %v917, %v913
    %v1078 = vpack.c.b16 %v918, %v914
    %v1079 = vpack.c.b16 %v919, %v915
    %v1080 = vpack.c.b16 %v924, %v920
    %v1081 = vpack.c.b16 %v925, %v921
    %v1082 = vpack.c.b16 %v926, %v922
    %v1083 = vpack.c.b16 %v927, %v923
    %v1084 = vpack.c.b16 %v932, %v928
    %v1085 = vpack.c.b16 %v933, %v929
    %v1086 = vpack.c.b16 %v934, %v930
    %v1087 = vpack.c.b16 %v935, %v931
    %v1088 = vpack.c.b16 %v940, %v936
    %v1089 = vpack.c.b16 %v941, %v937
    %v1090 = vpack.c.b16 %v942, %v938
    %v1091 = vpack.c.b16 %v943, %v939
    %v1092 = vpack.c.b16 %v948, %v944
    %v1093 = vpack.c.b16 %v949, %v945
    %v1094 = vpack.c.b16 %v950, %v946
    %v1095 = vpack.c.b16 %v951, %v947
    %v1096 = vpack.c.b16 %v956, %v952
    %v1097 = vpack.c.b16 %v957, %v953
    %v1098 = vpack.c.b16 %v958, %v954
    %v1099 = vpack.c.b16 %v959, %v955
    %v1100 = vpack.c.b16 %v964, %v960
    %v1101 = vpack.c.b16 %v965, %v961
    %v1102 = vpack.c.b16 %v966, %v962
    %v1103 = vpack.c.b16 %v967, %v963
    %v1104 = vpack.c.b16 %v972, %v968
    %v1105 = vpack.c.b16 %v973, %v969
    %v1106 = vpack.c.b16 %v974, %v970
    %v1107 = vpack.c.b16 %v975, %v971
    %v1108 = vpack.c.b16 %v980, %v976
    %v1109 = vpack.c.b16 %v981, %v977
    %v1110 = vpack.c.b16 %v982, %v978
    %v1111 = vpack.c.b16 %v983, %v979
    %1240 = vmatpush.bf16.msra.mxu0 %v1012
    %1241 = vmatpush.bf16.msra.mxu0 %v1008
    %1242 = vmatpush.bf16.msra.mxu0 %v1004
    %1243 = vmatpush.bf16.msra.mxu0 %v1000
    %1244 = vmatpush.bf16.msra.mxu0 %v996
    %1245 = vmatpush.bf16.msra.mxu0 %v992
    %1246 = vmatpush.bf16.msra.mxu0 %v988
    %1247 = vmatpush.bf16.msra.mxu0 %v984
    %1248 = vmatmul.bf16.gmra.mxu0 %v457
    %v1249 = vpop.f32.mrf.mxu0
    %v1250 = vadd.f32 %v592, %v1249
    %v1251 = vpop.f32.mrf.mxu0
    %1252 = vdwg.mxu0
    %1253 = vmatpush.bf16.msra.mxu0 %v1044
    %1254 = vmatpush.bf16.msra.mxu0 %v1040
    %1255 = vmatpush.bf16.msra.mxu0 %v1036
    %1256 = vmatpush.bf16.msra.mxu0 %v1032
    %1257 = vmatpush.bf16.msra.mxu0 %v1028
    %1258 = vmatpush.bf16.msra.mxu0 %v1024
    %1259 = vmatpush.bf16.msra.mxu0 %v1020
    %1260 = vmatpush.bf16.msra.mxu0 %v1016
    %1261 = vmatmul.bf16.gmra.mxu0 %v458
    %v1262 = vpop.f32.mrf.mxu0
    %v1263 = vadd.f32 %v1250, %v1262
    %v1264 = vpop.f32.mrf.mxu0
    %1265 = vdwg.mxu0
    %1266 = vmatpush.bf16.msra.mxu0 %v1076
    %1267 = vmatpush.bf16.msra.mxu0 %v1072
    %1268 = vmatpush.bf16.msra.mxu0 %v1068
    %1269 = vmatpush.bf16.msra.mxu0 %v1064
    %1270 = vmatpush.bf16.msra.mxu0 %v1060
    %1271 = vmatpush.bf16.msra.mxu0 %v1056
    %1272 = vmatpush.bf16.msra.mxu0 %v1052
    %1273 = vmatpush.bf16.msra.mxu0 %v1048
    %1274 = vmatmul.bf16.gmra.mxu0 %v459
    %v1275 = vpop.f32.mrf.mxu0
    %v1276 = vadd.f32 %v1263, %v1275
    %v1277 = vpop.f32.mrf.mxu0
    %1278 = vdwg.mxu0
    %1279 = vmatpush.bf16.msra.mxu0 %v1108
    %1280 = vmatpush.bf16.msra.mxu0 %v1104
    %1281 = vmatpush.bf16.msra.mxu0 %v1100
    %1282 = vmatpush.bf16.msra.mxu0 %v1096
    %1283 = vmatpush.bf16.msra.mxu0 %v1092
    %1284 = vmatpush.bf16.msra.mxu0 %v1088
    %1285 = vmatpush.bf16.msra.mxu0 %v1084
    %1286 = vmatpush.bf16.msra.mxu0 %v1080
    %1287 = vmatmul.bf16.gmra.mxu0 %v460
    %v1288 = vpop.f32.mrf.mxu0
    %v1289 = vadd.f32 %v1276, %v1288
    %v1290 = vpop.f32.mrf.mxu0
    %1291 = vdwg.mxu0
    %1292 = vmatpush.bf16.msra.mxu0 %v1013
    %1293 = vmatpush.bf16.msra.mxu0 %v1009
    %1294 = vmatpush.bf16.msra.mxu0 %v1005
    %1295 = vmatpush.bf16.msra.mxu0 %v1001
    %1296 = vmatpush.bf16.msra.mxu0 %v997
    %1297 = vmatpush.bf16.msra.mxu0 %v993
    %1298 = vmatpush.bf16.msra.mxu0 %v989
    %1299 = vmatpush.bf16.msra.mxu0 %v985
    %1300 = vmatmul.bf16.gmra.mxu0 %v457
    %v1301 = vpop.f32.mrf.mxu0
    %v1302 = vadd.f32 %v593, %v1301
    %v1303 = vpop.f32.mrf.mxu0
    %1304 = vdwg.mxu0
    %1305 = vmatpush.bf16.msra.mxu0 %v1045
    %1306 = vmatpush.bf16.msra.mxu0 %v1041
    %1307 = vmatpush.bf16.msra.mxu0 %v1037
    %1308 = vmatpush.bf16.msra.mxu0 %v1033
    %1309 = vmatpush.bf16.msra.mxu0 %v1029
    %1310 = vmatpush.bf16.msra.mxu0 %v1025
    %1311 = vmatpush.bf16.msra.mxu0 %v1021
    %1312 = vmatpush.bf16.msra.mxu0 %v1017
    %1313 = vmatmul.bf16.gmra.mxu0 %v458
    %v1314 = vpop.f32.mrf.mxu0
    %v1315 = vadd.f32 %v1302, %v1314
    %v1316 = vpop.f32.mrf.mxu0
    %1317 = vdwg.mxu0
    %1318 = vmatpush.bf16.msra.mxu0 %v1077
    %1319 = vmatpush.bf16.msra.mxu0 %v1073
    %1320 = vmatpush.bf16.msra.mxu0 %v1069
    %1321 = vmatpush.bf16.msra.mxu0 %v1065
    %1322 = vmatpush.bf16.msra.mxu0 %v1061
    %1323 = vmatpush.bf16.msra.mxu0 %v1057
    %1324 = vmatpush.bf16.msra.mxu0 %v1053
    %1325 = vmatpush.bf16.msra.mxu0 %v1049
    %1326 = vmatmul.bf16.gmra.mxu0 %v459
    %v1327 = vpop.f32.mrf.mxu0
    %v1328 = vadd.f32 %v1315, %v1327
    %v1329 = vpop.f32.mrf.mxu0
    %1330 = vdwg.mxu0
    %1331 = vmatpush.bf16.msra.mxu0 %v1109
    %1332 = vmatpush.bf16.msra.mxu0 %v1105
    %1333 = vmatpush.bf16.msra.mxu0 %v1101
    %1334 = vmatpush.bf16.msra.mxu0 %v1097
    %1335 = vmatpush.bf16.msra.mxu0 %v1093
    %1336 = vmatpush.bf16.msra.mxu0 %v1089
    %1337 = vmatpush.bf16.msra.mxu0 %v1085
    %1338 = vmatpush.bf16.msra.mxu0 %v1081
    %1339 = vmatmul.bf16.gmra.mxu0 %v460
    %v1340 = vpop.f32.mrf.mxu0
    %v1341 = vadd.f32 %v1328, %v1340
    %v1342 = vpop.f32.mrf.mxu0
    %1343 = vdwg.mxu0
    %1344 = vmatpush.bf16.msra.mxu0 %v1014
    %1345 = vmatpush.bf16.msra.mxu0 %v1010
    %1346 = vmatpush.bf16.msra.mxu0 %v1006
    %1347 = vmatpush.bf16.msra.mxu0 %v1002
    %1348 = vmatpush.bf16.msra.mxu0 %v998
    %1349 = vmatpush.bf16.msra.mxu0 %v994
    %1350 = vmatpush.bf16.msra.mxu0 %v990
    %1351 = vmatpush.bf16.msra.mxu0 %v986
    %1352 = vmatmul.bf16.gmra.mxu0 %v457
    %v1353 = vpop.f32.mrf.mxu0
    %v1354 = vadd.f32 %v594, %v1353
    %v1355 = vpop.f32.mrf.mxu0
    %1356 = vdwg.mxu0
    %1357 = vmatpush.bf16.msra.mxu0 %v1046
    %1358 = vmatpush.bf16.msra.mxu0 %v1042
    %1359 = vmatpush.bf16.msra.mxu0 %v1038
    %1360 = vmatpush.bf16.msra.mxu0 %v1034
    %1361 = vmatpush.bf16.msra.mxu0 %v1030
    %1362 = vmatpush.bf16.msra.mxu0 %v1026
    %1363 = vmatpush.bf16.msra.mxu0 %v1022
    %1364 = vmatpush.bf16.msra.mxu0 %v1018
    %1365 = vmatmul.bf16.gmra.mxu0 %v458
    %v1366 = vpop.f32.mrf.mxu0
    %v1367 = vadd.f32 %v1354, %v1366
    %v1368 = vpop.f32.mrf.mxu0
    %1369 = vdwg.mxu0
    %1370 = vmatpush.bf16.msra.mxu0 %v1078
    %1371 = vmatpush.bf16.msra.mxu0 %v1074
    %1372 = vmatpush.bf16.msra.mxu0 %v1070
    %1373 = vmatpush.bf16.msra.mxu0 %v1066
    %1374 = vmatpush.bf16.msra.mxu0 %v1062
    %1375 = vmatpush.bf16.msra.mxu0 %v1058
    %1376 = vmatpush.bf16.msra.mxu0 %v1054
    %1377 = vmatpush.bf16.msra.mxu0 %v1050
    %1378 = vmatmul.bf16.gmra.mxu0 %v459
    %v1379 = vpop.f32.mrf.mxu0
    %v1380 = vadd.f32 %v1367, %v1379
    %v1381 = vpop.f32.mrf.mxu0
    %1382 = vdwg.mxu0
    %1383 = vmatpush.bf16.msra.mxu0 %v1110
    %1384 = vmatpush.bf16.msra.mxu0 %v1106
    %1385 = vmatpush.bf16.msra.mxu0 %v1102
    %1386 = vmatpush.bf16.msra.mxu0 %v1098
    %1387 = vmatpush.bf16.msra.mxu0 %v1094
    %1388 = vmatpush.bf16.msra.mxu0 %v1090
    %1389 = vmatpush.bf16.msra.mxu0 %v1086
    %1390 = vmatpush.bf16.msra.mxu0 %v1082
    %1391 = vmatmul.bf16.gmra.mxu0 %v460
    %v1392 = vpop.f32.mrf.mxu0
    %v1393 = vadd.f32 %v1380, %v1392
    %v1394 = vpop.f32.mrf.mxu0
    %1395 = vdwg.mxu0
    %1396 = vmatpush.bf16.msra.mxu0 %v1015
    %1397 = vmatpush.bf16.msra.mxu0 %v1011
    %1398 = vmatpush.bf16.msra.mxu0 %v1007
    %1399 = vmatpush.bf16.msra.mxu0 %v1003
    %1400 = vmatpush.bf16.msra.mxu0 %v999
    %1401 = vmatpush.bf16.msra.mxu0 %v995
    %1402 = vmatpush.bf16.msra.mxu0 %v991
    %1403 = vmatpush.bf16.msra.mxu0 %v987
    %1404 = vmatmul.bf16.gmra.mxu0 %v457
    %v1405 = vpop.f32.mrf.mxu0
    %v1406 = vadd.f32 %v595, %v1405
    %v1407 = vpop.f32.mrf.mxu0
    %1408 = vdwg.mxu0
    %1409 = vmatpush.bf16.msra.mxu0 %v1047
    %1410 = vmatpush.bf16.msra.mxu0 %v1043
    %1411 = vmatpush.bf16.msra.mxu0 %v1039
    %1412 = vmatpush.bf16.msra.mxu0 %v1035
    %1413 = vmatpush.bf16.msra.mxu0 %v1031
    %1414 = vmatpush.bf16.msra.mxu0 %v1027
    %1415 = vmatpush.bf16.msra.mxu0 %v1023
    %1416 = vmatpush.bf16.msra.mxu0 %v1019
    %1417 = vmatmul.bf16.gmra.mxu0 %v458
    %v1418 = vpop.f32.mrf.mxu0
    %v1419 = vadd.f32 %v1406, %v1418
    %v1420 = vpop.f32.mrf.mxu0
    %1421 = vdwg.mxu0
    %1422 = vmatpush.bf16.msra.mxu0 %v1079
    %1423 = vmatpush.bf16.msra.mxu0 %v1075
    %1424 = vmatpush.bf16.msra.mxu0 %v1071
    %1425 = vmatpush.bf16.msra.mxu0 %v1067
    %1426 = vmatpush.bf16.msra.mxu0 %v1063
    %1427 = vmatpush.bf16.msra.mxu0 %v1059
    %1428 = vmatpush.bf16.msra.mxu0 %v1055
    %1429 = vmatpush.bf16.msra.mxu0 %v1051
    %1430 = vmatmul.bf16.gmra.mxu0 %v459
    %v1431 = vpop.f32.mrf.mxu0
    %v1432 = vadd.f32 %v1419, %v1431
    %v1433 = vpop.f32.mrf.mxu0
    %1434 = vdwg.mxu0
    %1435 = vmatpush.bf16.msra.mxu0 %v1111
    %1436 = vmatpush.bf16.msra.mxu0 %v1107
    %1437 = vmatpush.bf16.msra.mxu0 %v1103
    %1438 = vmatpush.bf16.msra.mxu0 %v1099
    %1439 = vmatpush.bf16.msra.mxu0 %v1095
    %1440 = vmatpush.bf16.msra.mxu0 %v1091
    %1441 = vmatpush.bf16.msra.mxu0 %v1087
    %1442 = vmatpush.bf16.msra.mxu0 %v1083
    %1443 = vmatmul.bf16.gmra.mxu0 %v460
    %v1444 = vpop.f32.mrf.mxu0
    %v1445 = vadd.f32 %v1432, %v1444
    %v1446 = vpop.f32.mrf.mxu0
    %1447 = vdwg.mxu0
    %v1448 = vmax.f32 %v1289, 0.0
    %v1449 = vmax.f32 %v1341, 0.0
    %v1450 = vmax.f32 %v1393, 0.0
    %v1451 = vmax.f32 %v1445, 0.0
    %v1452 = vmin.f32 %v1448, 6.0
    %v1453 = vmin.f32 %v1449, 6.0
    %v1454 = vmin.f32 %v1450, 6.0
    %v1455 = vmin.f32 %v1451, 6.0
    // Predicated region
    $region82: #{forward.1} parent=1 // pred_check
      %p1456 = pneg %p141
    $region83: #{forward.1} parent=1 // pred_check_branch
      %1458 = sbr.rel (%p1456) target = $region85
    $region84: #{forward.1} parent=1 // pred_region
      %s1459 = scalar_lea.sflag [#allocation5], 1
      %s1460 = smul.u32 4, 64
      %s1461 = smul.u32 %s1460, 4
      %s1462 = sshll.u32 %s1461, 4
      %1463 = dma.done %s1459, %s1462
    $region85: #{forward.1} parent=1 // pred_fallthru
      _
    %v1464 = vpack.c.bf16 %v1452, %v1452
    %v1465 = vpack.c.bf16 %v1453, %v1453
    %v1466 = vpack.c.bf16 %v1454, %v1454
    %v1467 = vpack.c.bf16 %v1455, %v1455
    %v1468 = vld [vmem:[#allocation3] sm:$0xff]
    %v1469 = vld [vmem:[#allocation3 + $0x8] sm:$0xff]
    %v1470 = vld [vmem:[#allocation3 + $0x10] sm:$0xff]
    %v1471 = vld [vmem:[#allocation3 + $0x18] sm:$0xff]
    %v1472 = vld [vmem:[#allocation3 + $0x20] sm:$0xff]
    %v1473 = vld [vmem:[#allocation3 + $0x28] sm:$0xff]
    %v1474 = vld [vmem:[#allocation3 + $0x30] sm:$0xff]
    %v1475 = vld [vmem:[#allocation3 + $0x38] sm:$0xff]
    %v1476 = vld [vmem:[#allocation3 + $0x40] sm:$0xff]
    %v1477 = vld [vmem:[#allocation3 + $0x48] sm:$0xff]
    %v1478 = vld [vmem:[#allocation3 + $0x50] sm:$0xff]
    %v1479 = vld [vmem:[#allocation3 + $0x58] sm:$0xff]
    %v1480 = vld [vmem:[#allocation3 + $0x60] sm:$0xff]
    %v1481 = vld [vmem:[#allocation3 + $0x68] sm:$0xff]
    %v1482 = vld [vmem:[#allocation3 + $0x70] sm:$0xff]
    %v1483 = vld [vmem:[#allocation3 + $0x78] sm:$0xff]
    %v1484 = vld [vmem:[#allocation3 + $0x80] sm:$0xff]
    %v1485 = vld [vmem:[#allocation3 + $0x88] sm:$0xff]
    %v1486 = vld [vmem:[#allocation3 + $0x90] sm:$0xff]
    %v1487 = vld [vmem:[#allocation3 + $0x98] sm:$0xff]
    %v1488 = vld [vmem:[#allocation3 + $0xa0] sm:$0xff]
    %v1489 = vld [vmem:[#allocation3 + $0xa8] sm:$0xff]
    %v1490 = vld [vmem:[#allocation3 + $0xb0] sm:$0xff]
    %v1491 = vld [vmem:[#allocation3 + $0xb8] sm:$0xff]
    %v1492 = vld [vmem:[#allocation3 + $0xc0] sm:$0xff]
    %v1493 = vld [vmem:[#allocation3 + $0xc8] sm:$0xff]
    %v1494 = vld [vmem:[#allocation3 + $0xd0] sm:$0xff]
    %v1495 = vld [vmem:[#allocation3 + $0xd8] sm:$0xff]
    %v1496 = vld [vmem:[#allocation3 + $0xe0] sm:$0xff]
    %v1497 = vld [vmem:[#allocation3 + $0xe8] sm:$0xff]
    %v1498 = vld [vmem:[#allocation3 + $0xf0] sm:$0xff]
    %v1499 = vld [vmem:[#allocation3 + $0xf8] sm:$0xff]
    %v1500 = vld [vmem:[#allocation3 + $0x100] sm:$0xff]
    %v1501 = vld [vmem:[#allocation3 + $0x108] sm:$0xff]
    %v1502 = vld [vmem:[#allocation3 + $0x110] sm:$0xff]
    %v1503 = vld [vmem:[#allocation3 + $0x118] sm:$0xff]
    %v1504 = vld [vmem:[#allocation3 + $0x120] sm:$0xff]
    %v1505 = vld [vmem:[#allocation3 + $0x128] sm:$0xff]
    %v1506 = vld [vmem:[#allocation3 + $0x130] sm:$0xff]
    %v1507 = vld [vmem:[#allocation3 + $0x138] sm:$0xff]
    %v1508 = vld [vmem:[#allocation3 + $0x140] sm:$0xff]
    %v1509 = vld [vmem:[#allocation3 + $0x148] sm:$0xff]
    %v1510 = vld [vmem:[#allocation3 + $0x150] sm:$0xff]
    %v1511 = vld [vmem:[#allocation3 + $0x158] sm:$0xff]
    %v1512 = vld [vmem:[#allocation3 + $0x160] sm:$0xff]
    %v1513 = vld [vmem:[#allocation3 + $0x168] sm:$0xff]
    %v1514 = vld [vmem:[#allocation3 + $0x170] sm:$0xff]
    %v1515 = vld [vmem:[#allocation3 + $0x178] sm:$0xff]
    %v1516 = vld [vmem:[#allocation3 + $0x180] sm:$0xff]
    %v1517 = vld [vmem:[#allocation3 + $0x188] sm:$0xff]
    %v1518 = vld [vmem:[#allocation3 + $0x190] sm:$0xff]
    %v1519 = vld [vmem:[#allocation3 + $0x198] sm:$0xff]
    %v1520 = vld [vmem:[#allocation3 + $0x1a0] sm:$0xff]
    %v1521 = vld [vmem:[#allocation3 + $0x1a8] sm:$0xff]
    %v1522 = vld [vmem:[#allocation3 + $0x1b0] sm:$0xff]
    %v1523 = vld [vmem:[#allocation3 + $0x1b8] sm:$0xff]
    %v1524 = vld [vmem:[#allocation3 + $0x1c0] sm:$0xff]
    %v1525 = vld [vmem:[#allocation3 + $0x1c8] sm:$0xff]
    %v1526 = vld [vmem:[#allocation3 + $0x1d0] sm:$0xff]
    %v1527 = vld [vmem:[#allocation3 + $0x1d8] sm:$0xff]
    %v1528 = vld [vmem:[#allocation3 + $0x1e0] sm:$0xff]
    %v1529 = vld [vmem:[#allocation3 + $0x1e8] sm:$0xff]
    %v1530 = vld [vmem:[#allocation3 + $0x1f0] sm:$0xff]
    %v1531 = vld [vmem:[#allocation3 + $0x1f8] sm:$0xff]
    %v1532 = vld [vmem:[#allocation3 + $0x200] sm:$0xff]
    %v1533 = vld [vmem:[#allocation3 + $0x208] sm:$0xff]
    %v1534 = vld [vmem:[#allocation3 + $0x210] sm:$0xff]
    %v1535 = vld [vmem:[#allocation3 + $0x218] sm:$0xff]
    %v1536 = vld [vmem:[#allocation3 + $0x220] sm:$0xff]
    %v1537 = vld [vmem:[#allocation3 + $0x228] sm:$0xff]
    %v1538 = vld [vmem:[#allocation3 + $0x230] sm:$0xff]
    %v1539 = vld [vmem:[#allocation3 + $0x238] sm:$0xff]
    %v1540 = vld [vmem:[#allocation3 + $0x240] sm:$0xff]
    %v1541 = vld [vmem:[#allocation3 + $0x248] sm:$0xff]
    %v1542 = vld [vmem:[#allocation3 + $0x250] sm:$0xff]
    %v1543 = vld [vmem:[#allocation3 + $0x258] sm:$0xff]
    %v1544 = vld [vmem:[#allocation3 + $0x260] sm:$0xff]
    %v1545 = vld [vmem:[#allocation3 + $0x268] sm:$0xff]
    %v1546 = vld [vmem:[#allocation3 + $0x270] sm:$0xff]
    %v1547 = vld [vmem:[#allocation3 + $0x278] sm:$0xff]
    %v1548 = vld [vmem:[#allocation3 + $0x280] sm:$0xff]
    %v1549 = vld [vmem:[#allocation3 + $0x288] sm:$0xff]
    %v1550 = vld [vmem:[#allocation3 + $0x290] sm:$0xff]
    %v1551 = vld [vmem:[#allocation3 + $0x298] sm:$0xff]
    %v1552 = vld [vmem:[#allocation3 + $0x2a0] sm:$0xff]
    %v1553 = vld [vmem:[#allocation3 + $0x2a8] sm:$0xff]
    %v1554 = vld [vmem:[#allocation3 + $0x2b0] sm:$0xff]
    %v1555 = vld [vmem:[#allocation3 + $0x2b8] sm:$0xff]
    %v1556 = vld [vmem:[#allocation3 + $0x2c0] sm:$0xff]
    %v1557 = vld [vmem:[#allocation3 + $0x2c8] sm:$0xff]
    %v1558 = vld [vmem:[#allocation3 + $0x2d0] sm:$0xff]
    %v1559 = vld [vmem:[#allocation3 + $0x2d8] sm:$0xff]
    %v1560 = vld [vmem:[#allocation3 + $0x2e0] sm:$0xff]
    %v1561 = vld [vmem:[#allocation3 + $0x2e8] sm:$0xff]
    %v1562 = vld [vmem:[#allocation3 + $0x2f0] sm:$0xff]
    %v1563 = vld [vmem:[#allocation3 + $0x2f8] sm:$0xff]
    %v1564 = vld [vmem:[#allocation3 + $0x300] sm:$0xff]
    %v1565 = vld [vmem:[#allocation3 + $0x308] sm:$0xff]
    %v1566 = vld [vmem:[#allocation3 + $0x310] sm:$0xff]
    %v1567 = vld [vmem:[#allocation3 + $0x318] sm:$0xff]
    %v1568 = vld [vmem:[#allocation3 + $0x320] sm:$0xff]
    %v1569 = vld [vmem:[#allocation3 + $0x328] sm:$0xff]
    %v1570 = vld [vmem:[#allocation3 + $0x330] sm:$0xff]
    %v1571 = vld [vmem:[#allocation3 + $0x338] sm:$0xff]
    %v1572 = vld [vmem:[#allocation3 + $0x340] sm:$0xff]
    %v1573 = vld [vmem:[#allocation3 + $0x348] sm:$0xff]
    %v1574 = vld [vmem:[#allocation3 + $0x350] sm:$0xff]
    %v1575 = vld [vmem:[#allocation3 + $0x358] sm:$0xff]
    %v1576 = vld [vmem:[#allocation3 + $0x360] sm:$0xff]
    %v1577 = vld [vmem:[#allocation3 + $0x368] sm:$0xff]
    %v1578 = vld [vmem:[#allocation3 + $0x370] sm:$0xff]
    %v1579 = vld [vmem:[#allocation3 + $0x378] sm:$0xff]
    %v1580 = vld [vmem:[#allocation3 + $0x380] sm:$0xff]
    %v1581 = vld [vmem:[#allocation3 + $0x388] sm:$0xff]
    %v1582 = vld [vmem:[#allocation3 + $0x390] sm:$0xff]
    %v1583 = vld [vmem:[#allocation3 + $0x398] sm:$0xff]
    %v1584 = vld [vmem:[#allocation3 + $0x3a0] sm:$0xff]
    %v1585 = vld [vmem:[#allocation3 + $0x3a8] sm:$0xff]
    %v1586 = vld [vmem:[#allocation3 + $0x3b0] sm:$0xff]
    %v1587 = vld [vmem:[#allocation3 + $0x3b8] sm:$0xff]
    %v1588 = vld [vmem:[#allocation3 + $0x3c0] sm:$0xff]
    %v1589 = vld [vmem:[#allocation3 + $0x3c8] sm:$0xff]
    %v1590 = vld [vmem:[#allocation3 + $0x3d0] sm:$0xff]
    %v1591 = vld [vmem:[#allocation3 + $0x3d8] sm:$0xff]
    %v1592 = vld [vmem:[#allocation3 + $0x3e0] sm:$0xff]
    %v1593 = vld [vmem:[#allocation3 + $0x3e8] sm:$0xff]
    %v1594 = vld [vmem:[#allocation3 + $0x3f0] sm:$0xff]
    %v1595 = vld [vmem:[#allocation3 + $0x3f8] sm:$0xff]
    %s1596 = scalar_lea.vmem [#allocation16], 2
    %v1597 = vld [vmem:[%s1596] ss:$8 sm:$0xf]
    %v1599 = vperm.slane %v1597, 0
    %v1600 = vperm.slane %v1597, 1
    %v1601 = vperm.slane %v1597, 2
    %v1602 = vperm.slane %v1597, 3
    %v1735 = vunpack.c.l.b16 %v1468
    %v1736 = vunpack.c.h.b16 %v1468
    %v1737 = vunpack.c.l.b16 %v1469
    %v1738 = vunpack.c.h.b16 %v1469
    %v1739 = vunpack.c.l.b16 %v1470
    %v1740 = vunpack.c.h.b16 %v1470
    %v1741 = vunpack.c.l.b16 %v1471
    %v1742 = vunpack.c.h.b16 %v1471
    %v1743 = vunpack.c.l.b16 %v1472
    %v1744 = vunpack.c.h.b16 %v1472
    %v1745 = vunpack.c.l.b16 %v1473
    %v1746 = vunpack.c.h.b16 %v1473
    %v1747 = vunpack.c.l.b16 %v1474
    %v1748 = vunpack.c.h.b16 %v1474
    %v1749 = vunpack.c.l.b16 %v1475
    %v1750 = vunpack.c.h.b16 %v1475
    %v1751 = vunpack.c.l.b16 %v1476
    %v1752 = vunpack.c.h.b16 %v1476
    %v1753 = vunpack.c.l.b16 %v1477
    %v1754 = vunpack.c.h.b16 %v1477
    %v1755 = vunpack.c.l.b16 %v1478
    %v1756 = vunpack.c.h.b16 %v1478
    %v1757 = vunpack.c.l.b16 %v1479
    %v1758 = vunpack.c.h.b16 %v1479
    %v1759 = vunpack.c.l.b16 %v1480
    %v1760 = vunpack.c.h.b16 %v1480
    %v1761 = vunpack.c.l.b16 %v1481
    %v1762 = vunpack.c.h.b16 %v1481
    %v1763 = vunpack.c.l.b16 %v1482
    %v1764 = vunpack.c.h.b16 %v1482
    %v1765 = vunpack.c.l.b16 %v1483
    %v1766 = vunpack.c.h.b16 %v1483
    %v1767 = vunpack.c.l.b16 %v1484
    %v1768 = vunpack.c.h.b16 %v1484
    %v1769 = vunpack.c.l.b16 %v1485
    %v1770 = vunpack.c.h.b16 %v1485
    %v1771 = vunpack.c.l.b16 %v1486
    %v1772 = vunpack.c.h.b16 %v1486
    %v1773 = vunpack.c.l.b16 %v1487
    %v1774 = vunpack.c.h.b16 %v1487
    %v1775 = vunpack.c.l.b16 %v1488
    %v1776 = vunpack.c.h.b16 %v1488
    %v1777 = vunpack.c.l.b16 %v1489
    %v1778 = vunpack.c.h.b16 %v1489
    %v1779 = vunpack.c.l.b16 %v1490
    %v1780 = vunpack.c.h.b16 %v1490
    %v1781 = vunpack.c.l.b16 %v1491
    %v1782 = vunpack.c.h.b16 %v1491
    %v1783 = vunpack.c.l.b16 %v1492
    %v1784 = vunpack.c.h.b16 %v1492
    %v1785 = vunpack.c.l.b16 %v1493
    %v1786 = vunpack.c.h.b16 %v1493
    %v1787 = vunpack.c.l.b16 %v1494
    %v1788 = vunpack.c.h.b16 %v1494
    %v1789 = vunpack.c.l.b16 %v1495
    %v1790 = vunpack.c.h.b16 %v1495
    %v1791 = vunpack.c.l.b16 %v1496
    %v1792 = vunpack.c.h.b16 %v1496
    %v1793 = vunpack.c.l.b16 %v1497
    %v1794 = vunpack.c.h.b16 %v1497
    %v1795 = vunpack.c.l.b16 %v1498
    %v1796 = vunpack.c.h.b16 %v1498
    %v1797 = vunpack.c.l.b16 %v1499
    %v1798 = vunpack.c.h.b16 %v1499
    %v1799 = vunpack.c.l.b16 %v1500
    %v1800 = vunpack.c.h.b16 %v1500
    %v1801 = vunpack.c.l.b16 %v1501
    %v1802 = vunpack.c.h.b16 %v1501
    %v1803 = vunpack.c.l.b16 %v1502
    %v1804 = vunpack.c.h.b16 %v1502
    %v1805 = vunpack.c.l.b16 %v1503
    %v1806 = vunpack.c.h.b16 %v1503
    %v1807 = vunpack.c.l.b16 %v1504
    %v1808 = vunpack.c.h.b16 %v1504
    %v1809 = vunpack.c.l.b16 %v1505
    %v1810 = vunpack.c.h.b16 %v1505
    %v1811 = vunpack.c.l.b16 %v1506
    %v1812 = vunpack.c.h.b16 %v1506
    %v1813 = vunpack.c.l.b16 %v1507
    %v1814 = vunpack.c.h.b16 %v1507
    %v1815 = vunpack.c.l.b16 %v1508
    %v1816 = vunpack.c.h.b16 %v1508
    %v1817 = vunpack.c.l.b16 %v1509
    %v1818 = vunpack.c.h.b16 %v1509
    %v1819 = vunpack.c.l.b16 %v1510
    %v1820 = vunpack.c.h.b16 %v1510
    %v1821 = vunpack.c.l.b16 %v1511
    %v1822 = vunpack.c.h.b16 %v1511
    %v1823 = vunpack.c.l.b16 %v1512
    %v1824 = vunpack.c.h.b16 %v1512
    %v1825 = vunpack.c.l.b16 %v1513
    %v1826 = vunpack.c.h.b16 %v1513
    %v1827 = vunpack.c.l.b16 %v1514
    %v1828 = vunpack.c.h.b16 %v1514
    %v1829 = vunpack.c.l.b16 %v1515
    %v1830 = vunpack.c.h.b16 %v1515
    %v1831 = vunpack.c.l.b16 %v1516
    %v1832 = vunpack.c.h.b16 %v1516
    %v1833 = vunpack.c.l.b16 %v1517
    %v1834 = vunpack.c.h.b16 %v1517
    %v1835 = vunpack.c.l.b16 %v1518
    %v1836 = vunpack.c.h.b16 %v1518
    %v1837 = vunpack.c.l.b16 %v1519
    %v1838 = vunpack.c.h.b16 %v1519
    %v1839 = vunpack.c.l.b16 %v1520
    %v1840 = vunpack.c.h.b16 %v1520
    %v1841 = vunpack.c.l.b16 %v1521
    %v1842 = vunpack.c.h.b16 %v1521
    %v1843 = vunpack.c.l.b16 %v1522
    %v1844 = vunpack.c.h.b16 %v1522
    %v1845 = vunpack.c.l.b16 %v1523
    %v1846 = vunpack.c.h.b16 %v1523
    %v1847 = vunpack.c.l.b16 %v1524
    %v1848 = vunpack.c.h.b16 %v1524
    %v1849 = vunpack.c.l.b16 %v1525
    %v1850 = vunpack.c.h.b16 %v1525
    %v1851 = vunpack.c.l.b16 %v1526
    %v1852 = vunpack.c.h.b16 %v1526
    %v1853 = vunpack.c.l.b16 %v1527
    %v1854 = vunpack.c.h.b16 %v1527
    %v1855 = vunpack.c.l.b16 %v1528
    %v1856 = vunpack.c.h.b16 %v1528
    %v1857 = vunpack.c.l.b16 %v1529
    %v1858 = vunpack.c.h.b16 %v1529
    %v1859 = vunpack.c.l.b16 %v1530
    %v1860 = vunpack.c.h.b16 %v1530
    %v1861 = vunpack.c.l.b16 %v1531
    %v1862 = vunpack.c.h.b16 %v1531
    %v1863 = vunpack.c.l.b16 %v1532
    %v1864 = vunpack.c.h.b16 %v1532
    %v1865 = vunpack.c.l.b16 %v1533
    %v1866 = vunpack.c.h.b16 %v1533
    %v1867 = vunpack.c.l.b16 %v1534
    %v1868 = vunpack.c.h.b16 %v1534
    %v1869 = vunpack.c.l.b16 %v1535
    %v1870 = vunpack.c.h.b16 %v1535
    %v1871 = vunpack.c.l.b16 %v1536
    %v1872 = vunpack.c.h.b16 %v1536
    %v1873 = vunpack.c.l.b16 %v1537
    %v1874 = vunpack.c.h.b16 %v1537
    %v1875 = vunpack.c.l.b16 %v1538
    %v1876 = vunpack.c.h.b16 %v1538
    %v1877 = vunpack.c.l.b16 %v1539
    %v1878 = vunpack.c.h.b16 %v1539
    %v1879 = vunpack.c.l.b16 %v1540
    %v1880 = vunpack.c.h.b16 %v1540
    %v1881 = vunpack.c.l.b16 %v1541
    %v1882 = vunpack.c.h.b16 %v1541
    %v1883 = vunpack.c.l.b16 %v1542
    %v1884 = vunpack.c.h.b16 %v1542
    %v1885 = vunpack.c.l.b16 %v1543
    %v1886 = vunpack.c.h.b16 %v1543
    %v1887 = vunpack.c.l.b16 %v1544
    %v1888 = vunpack.c.h.b16 %v1544
    %v1889 = vunpack.c.l.b16 %v1545
    %v1890 = vunpack.c.h.b16 %v1545
    %v1891 = vunpack.c.l.b16 %v1546
    %v1892 = vunpack.c.h.b16 %v1546
    %v1893 = vunpack.c.l.b16 %v1547
    %v1894 = vunpack.c.h.b16 %v1547
    %v1895 = vunpack.c.l.b16 %v1548
    %v1896 = vunpack.c.h.b16 %v1548
    %v1897 = vunpack.c.l.b16 %v1549
    %v1898 = vunpack.c.h.b16 %v1549
    %v1899 = vunpack.c.l.b16 %v1550
    %v1900 = vunpack.c.h.b16 %v1550
    %v1901 = vunpack.c.l.b16 %v1551
    %v1902 = vunpack.c.h.b16 %v1551
    %v1903 = vunpack.c.l.b16 %v1552
    %v1904 = vunpack.c.h.b16 %v1552
    %v1905 = vunpack.c.l.b16 %v1553
    %v1906 = vunpack.c.h.b16 %v1553
    %v1907 = vunpack.c.l.b16 %v1554
    %v1908 = vunpack.c.h.b16 %v1554
    %v1909 = vunpack.c.l.b16 %v1555
    %v1910 = vunpack.c.h.b16 %v1555
    %v1911 = vunpack.c.l.b16 %v1556
    %v1912 = vunpack.c.h.b16 %v1556
    %v1913 = vunpack.c.l.b16 %v1557
    %v1914 = vunpack.c.h.b16 %v1557
    %v1915 = vunpack.c.l.b16 %v1558
    %v1916 = vunpack.c.h.b16 %v1558
    %v1917 = vunpack.c.l.b16 %v1559
    %v1918 = vunpack.c.h.b16 %v1559
    %v1919 = vunpack.c.l.b16 %v1560
    %v1920 = vunpack.c.h.b16 %v1560
    %v1921 = vunpack.c.l.b16 %v1561
    %v1922 = vunpack.c.h.b16 %v1561
    %v1923 = vunpack.c.l.b16 %v1562
    %v1924 = vunpack.c.h.b16 %v1562
    %v1925 = vunpack.c.l.b16 %v1563
    %v1926 = vunpack.c.h.b16 %v1563
    %v1927 = vunpack.c.l.b16 %v1564
    %v1928 = vunpack.c.h.b16 %v1564
    %v1929 = vunpack.c.l.b16 %v1565
    %v1930 = vunpack.c.h.b16 %v1565
    %v1931 = vunpack.c.l.b16 %v1566
    %v1932 = vunpack.c.h.b16 %v1566
    %v1933 = vunpack.c.l.b16 %v1567
    %v1934 = vunpack.c.h.b16 %v1567
    %v1935 = vunpack.c.l.b16 %v1568
    %v1936 = vunpack.c.h.b16 %v1568
    %v1937 = vunpack.c.l.b16 %v1569
    %v1938 = vunpack.c.h.b16 %v1569
    %v1939 = vunpack.c.l.b16 %v1570
    %v1940 = vunpack.c.h.b16 %v1570
    %v1941 = vunpack.c.l.b16 %v1571
    %v1942 = vunpack.c.h.b16 %v1571
    %v1943 = vunpack.c.l.b16 %v1572
    %v1944 = vunpack.c.h.b16 %v1572
    %v1945 = vunpack.c.l.b16 %v1573
    %v1946 = vunpack.c.h.b16 %v1573
    %v1947 = vunpack.c.l.b16 %v1574
    %v1948 = vunpack.c.h.b16 %v1574
    %v1949 = vunpack.c.l.b16 %v1575
    %v1950 = vunpack.c.h.b16 %v1575
    %v1951 = vunpack.c.l.b16 %v1576
    %v1952 = vunpack.c.h.b16 %v1576
    %v1953 = vunpack.c.l.b16 %v1577
    %v1954 = vunpack.c.h.b16 %v1577
    %v1955 = vunpack.c.l.b16 %v1578
    %v1956 = vunpack.c.h.b16 %v1578
    %v1957 = vunpack.c.l.b16 %v1579
    %v1958 = vunpack.c.h.b16 %v1579
    %v1959 = vunpack.c.l.b16 %v1580
    %v1960 = vunpack.c.h.b16 %v1580
    %v1961 = vunpack.c.l.b16 %v1581
    %v1962 = vunpack.c.h.b16 %v1581
    %v1963 = vunpack.c.l.b16 %v1582
    %v1964 = vunpack.c.h.b16 %v1582
    %v1965 = vunpack.c.l.b16 %v1583
    %v1966 = vunpack.c.h.b16 %v1583
    %v1967 = vunpack.c.l.b16 %v1584
    %v1968 = vunpack.c.h.b16 %v1584
    %v1969 = vunpack.c.l.b16 %v1585
    %v1970 = vunpack.c.h.b16 %v1585
    %v1971 = vunpack.c.l.b16 %v1586
    %v1972 = vunpack.c.h.b16 %v1586
    %v1973 = vunpack.c.l.b16 %v1587
    %v1974 = vunpack.c.h.b16 %v1587
    %v1975 = vunpack.c.l.b16 %v1588
    %v1976 = vunpack.c.h.b16 %v1588
    %v1977 = vunpack.c.l.b16 %v1589
    %v1978 = vunpack.c.h.b16 %v1589
    %v1979 = vunpack.c.l.b16 %v1590
    %v1980 = vunpack.c.h.b16 %v1590
    %v1981 = vunpack.c.l.b16 %v1591
    %v1982 = vunpack.c.h.b16 %v1591
    %v1983 = vunpack.c.l.b16 %v1592
    %v1984 = vunpack.c.h.b16 %v1592
    %v1985 = vunpack.c.l.b16 %v1593
    %v1986 = vunpack.c.h.b16 %v1593
    %v1987 = vunpack.c.l.b16 %v1594
    %v1988 = vunpack.c.h.b16 %v1594
    %v1989 = vunpack.c.l.b16 %v1595
    %v1990 = vunpack.c.h.b16 %v1595
    %v1991 = vpack.c.b16 %v1739, %v1735
    %v1992 = vpack.c.b16 %v1740, %v1736
    %v1993 = vpack.c.b16 %v1741, %v1737
    %v1994 = vpack.c.b16 %v1742, %v1738
    %v1995 = vpack.c.b16 %v1747, %v1743
    %v1996 = vpack.c.b16 %v1748, %v1744
    %v1997 = vpack.c.b16 %v1749, %v1745
    %v1998 = vpack.c.b16 %v1750, %v1746
    %v1999 = vpack.c.b16 %v1755, %v1751
    %v2000 = vpack.c.b16 %v1756, %v1752
    %v2001 = vpack.c.b16 %v1757, %v1753
    %v2002 = vpack.c.b16 %v1758, %v1754
    %v2003 = vpack.c.b16 %v1763, %v1759
    %v2004 = vpack.c.b16 %v1764, %v1760
    %v2005 = vpack.c.b16 %v1765, %v1761
    %v2006 = vpack.c.b16 %v1766, %v1762
    %v2007 = vpack.c.b16 %v1771, %v1767
    %v2008 = vpack.c.b16 %v1772, %v1768
    %v2009 = vpack.c.b16 %v1773, %v1769
    %v2010 = vpack.c.b16 %v1774, %v1770
    %v2011 = vpack.c.b16 %v1779, %v1775
    %v2012 = vpack.c.b16 %v1780, %v1776
    %v2013 = vpack.c.b16 %v1781, %v1777
    %v2014 = vpack.c.b16 %v1782, %v1778
    %v2015 = vpack.c.b16 %v1787, %v1783
    %v2016 = vpack.c.b16 %v1788, %v1784
    %v2017 = vpack.c.b16 %v1789, %v1785
    %v2018 = vpack.c.b16 %v1790, %v1786
    %v2019 = vpack.c.b16 %v1795, %v1791
    %v2020 = vpack.c.b16 %v1796, %v1792
    %v2021 = vpack.c.b16 %v1797, %v1793
    %v2022 = vpack.c.b16 %v1798, %v1794
    %v2023 = vpack.c.b16 %v1803, %v1799
    %v2024 = vpack.c.b16 %v1804, %v1800
    %v2025 = vpack.c.b16 %v1805, %v1801
    %v2026 = vpack.c.b16 %v1806, %v1802
    %v2027 = vpack.c.b16 %v1811, %v1807
    %v2028 = vpack.c.b16 %v1812, %v1808
    %v2029 = vpack.c.b16 %v1813, %v1809
    %v2030 = vpack.c.b16 %v1814, %v1810
    %v2031 = vpack.c.b16 %v1819, %v1815
    %v2032 = vpack.c.b16 %v1820, %v1816
    %v2033 = vpack.c.b16 %v1821, %v1817
    %v2034 = vpack.c.b16 %v1822, %v1818
    %v2035 = vpack.c.b16 %v1827, %v1823
    %v2036 = vpack.c.b16 %v1828, %v1824
    %v2037 = vpack.c.b16 %v1829, %v1825
    %v2038 = vpack.c.b16 %v1830, %v1826
    %v2039 = vpack.c.b16 %v1835, %v1831
    %v2040 = vpack.c.b16 %v1836, %v1832
    %v2041 = vpack.c.b16 %v1837, %v1833
    %v2042 = vpack.c.b16 %v1838, %v1834
    %v2043 = vpack.c.b16 %v1843, %v1839
    %v2044 = vpack.c.b16 %v1844, %v1840
    %v2045 = vpack.c.b16 %v1845, %v1841
    %v2046 = vpack.c.b16 %v1846, %v1842
    %v2047 = vpack.c.b16 %v1851, %v1847
    %v2048 = vpack.c.b16 %v1852, %v1848
    %v2049 = vpack.c.b16 %v1853, %v1849
    %v2050 = vpack.c.b16 %v1854, %v1850
    %v2051 = vpack.c.b16 %v1859, %v1855
    %v2052 = vpack.c.b16 %v1860, %v1856
    %v2053 = vpack.c.b16 %v1861, %v1857
    %v2054 = vpack.c.b16 %v1862, %v1858
    %v2055 = vpack.c.b16 %v1867, %v1863
    %v2056 = vpack.c.b16 %v1868, %v1864
    %v2057 = vpack.c.b16 %v1869, %v1865
    %v2058 = vpack.c.b16 %v1870, %v1866
    %v2059 = vpack.c.b16 %v1875, %v1871
    %v2060 = vpack.c.b16 %v1876, %v1872
    %v2061 = vpack.c.b16 %v1877, %v1873
    %v2062 = vpack.c.b16 %v1878, %v1874
    %v2063 = vpack.c.b16 %v1883, %v1879
    %v2064 = vpack.c.b16 %v1884, %v1880
    %v2065 = vpack.c.b16 %v1885, %v1881
    %v2066 = vpack.c.b16 %v1886, %v1882
    %v2067 = vpack.c.b16 %v1891, %v1887
    %v2068 = vpack.c.b16 %v1892, %v1888
    %v2069 = vpack.c.b16 %v1893, %v1889
    %v2070 = vpack.c.b16 %v1894, %v1890
    %v2071 = vpack.c.b16 %v1899, %v1895
    %v2072 = vpack.c.b16 %v1900, %v1896
    %v2073 = vpack.c.b16 %v1901, %v1897
    %v2074 = vpack.c.b16 %v1902, %v1898
    %v2075 = vpack.c.b16 %v1907, %v1903
    %v2076 = vpack.c.b16 %v1908, %v1904
    %v2077 = vpack.c.b16 %v1909, %v1905
    %v2078 = vpack.c.b16 %v1910, %v1906
    %v2079 = vpack.c.b16 %v1915, %v1911
    %v2080 = vpack.c.b16 %v1916, %v1912
    %v2081 = vpack.c.b16 %v1917, %v1913
    %v2082 = vpack.c.b16 %v1918, %v1914
    %v2083 = vpack.c.b16 %v1923, %v1919
    %v2084 = vpack.c.b16 %v1924, %v1920
    %v2085 = vpack.c.b16 %v1925, %v1921
    %v2086 = vpack.c.b16 %v1926, %v1922
    %v2087 = vpack.c.b16 %v1931, %v1927
    %v2088 = vpack.c.b16 %v1932, %v1928
    %v2089 = vpack.c.b16 %v1933, %v1929
    %v2090 = vpack.c.b16 %v1934, %v1930
    %v2091 = vpack.c.b16 %v1939, %v1935
    %v2092 = vpack.c.b16 %v1940, %v1936
    %v2093 = vpack.c.b16 %v1941, %v1937
    %v2094 = vpack.c.b16 %v1942, %v1938
    %v2095 = vpack.c.b16 %v1947, %v1943
    %v2096 = vpack.c.b16 %v1948, %v1944
    %v2097 = vpack.c.b16 %v1949, %v1945
    %v2098 = vpack.c.b16 %v1950, %v1946
    %v2099 = vpack.c.b16 %v1955, %v1951
    %v2100 = vpack.c.b16 %v1956, %v1952
    %v2101 = vpack.c.b16 %v1957, %v1953
    %v2102 = vpack.c.b16 %v1958, %v1954
    %v2103 = vpack.c.b16 %v1963, %v1959
    %v2104 = vpack.c.b16 %v1964, %v1960
    %v2105 = vpack.c.b16 %v1965, %v1961
    %v2106 = vpack.c.b16 %v1966, %v1962
    %v2107 = vpack.c.b16 %v1971, %v1967
    %v2108 = vpack.c.b16 %v1972, %v1968
    %v2109 = vpack.c.b16 %v1973, %v1969
    %v2110 = vpack.c.b16 %v1974, %v1970
    %v2111 = vpack.c.b16 %v1979, %v1975
    %v2112 = vpack.c.b16 %v1980, %v1976
    %v2113 = vpack.c.b16 %v1981, %v1977
    %v2114 = vpack.c.b16 %v1982, %v1978
    %v2115 = vpack.c.b16 %v1987, %v1983
    %v2116 = vpack.c.b16 %v1988, %v1984
    %v2117 = vpack.c.b16 %v1989, %v1985
    %v2118 = vpack.c.b16 %v1990, %v1986
    %2247 = vmatpush.bf16.msra.mxu0 %v2019
    %2248 = vmatpush.bf16.msra.mxu0 %v2015
    %2249 = vmatpush.bf16.msra.mxu0 %v2011
    %2250 = vmatpush.bf16.msra.mxu0 %v2007
    %2251 = vmatpush.bf16.msra.mxu0 %v2003
    %2252 = vmatpush.bf16.msra.mxu0 %v1999
    %2253 = vmatpush.bf16.msra.mxu0 %v1995
    %2254 = vmatpush.bf16.msra.mxu0 %v1991
    %2255 = vmatmul.bf16.gmra.mxu0 %v1464
    %v2256 = vpop.f32.mrf.mxu0
    %v2257 = vadd.f32 %v1599, %v2256
    %v2258 = vpop.f32.mrf.mxu0
    %2259 = vdwg.mxu0
    %2260 = vmatpush.bf16.msra.mxu0 %v2051
    %2261 = vmatpush.bf16.msra.mxu0 %v2047
    %2262 = vmatpush.bf16.msra.mxu0 %v2043
    %2263 = vmatpush.bf16.msra.mxu0 %v2039
    %2264 = vmatpush.bf16.msra.mxu0 %v2035
    %2265 = vmatpush.bf16.msra.mxu0 %v2031
    %2266 = vmatpush.bf16.msra.mxu0 %v2027
    %2267 = vmatpush.bf16.msra.mxu0 %v2023
    %2268 = vmatmul.bf16.gmra.mxu0 %v1465
    %v2269 = vpop.f32.mrf.mxu0
    %v2270 = vadd.f32 %v2257, %v2269
    %v2271 = vpop.f32.mrf.mxu0
    %2272 = vdwg.mxu0
    %2273 = vmatpush.bf16.msra.mxu0 %v2083
    %2274 = vmatpush.bf16.msra.mxu0 %v2079
    %2275 = vmatpush.bf16.msra.mxu0 %v2075
    %2276 = vmatpush.bf16.msra.mxu0 %v2071
    %2277 = vmatpush.bf16.msra.mxu0 %v2067
    %2278 = vmatpush.bf16.msra.mxu0 %v2063
    %2279 = vmatpush.bf16.msra.mxu0 %v2059
    %2280 = vmatpush.bf16.msra.mxu0 %v2055
    %2281 = vmatmul.bf16.gmra.mxu0 %v1466
    %v2282 = vpop.f32.mrf.mxu0
    %v2283 = vadd.f32 %v2270, %v2282
    %v2284 = vpop.f32.mrf.mxu0
    %2285 = vdwg.mxu0
    %2286 = vmatpush.bf16.msra.mxu0 %v2115
    %2287 = vmatpush.bf16.msra.mxu0 %v2111
    %2288 = vmatpush.bf16.msra.mxu0 %v2107
    %2289 = vmatpush.bf16.msra.mxu0 %v2103
    %2290 = vmatpush.bf16.msra.mxu0 %v2099
    %2291 = vmatpush.bf16.msra.mxu0 %v2095
    %2292 = vmatpush.bf16.msra.mxu0 %v2091
    %2293 = vmatpush.bf16.msra.mxu0 %v2087
    %2294 = vmatmul.bf16.gmra.mxu0 %v1467
    %v2295 = vpop.f32.mrf.mxu0
    %v2296 = vadd.f32 %v2283, %v2295
    %v2297 = vpop.f32.mrf.mxu0
    %2298 = vdwg.mxu0
    %2299 = vmatpush.bf16.msra.mxu0 %v2020
    %2300 = vmatpush.bf16.msra.mxu0 %v2016
    %2301 = vmatpush.bf16.msra.mxu0 %v2012
    %2302 = vmatpush.bf16.msra.mxu0 %v2008
    %2303 = vmatpush.bf16.msra.mxu0 %v2004
    %2304 = vmatpush.bf16.msra.mxu0 %v2000
    %2305 = vmatpush.bf16.msra.mxu0 %v1996
    %2306 = vmatpush.bf16.msra.mxu0 %v1992
    %2307 = vmatmul.bf16.gmra.mxu0 %v1464
    %v2308 = vpop.f32.mrf.mxu0
    %v2309 = vadd.f32 %v1600, %v2308
    %v2310 = vpop.f32.mrf.mxu0
    %2311 = vdwg.mxu0
    %2312 = vmatpush.bf16.msra.mxu0 %v2052
    %2313 = vmatpush.bf16.msra.mxu0 %v2048
    %2314 = vmatpush.bf16.msra.mxu0 %v2044
    %2315 = vmatpush.bf16.msra.mxu0 %v2040
    %2316 = vmatpush.bf16.msra.mxu0 %v2036
    %2317 = vmatpush.bf16.msra.mxu0 %v2032
    %2318 = vmatpush.bf16.msra.mxu0 %v2028
    %2319 = vmatpush.bf16.msra.mxu0 %v2024
    %2320 = vmatmul.bf16.gmra.mxu0 %v1465
    %v2321 = vpop.f32.mrf.mxu0
    %v2322 = vadd.f32 %v2309, %v2321
    %v2323 = vpop.f32.mrf.mxu0
    %2324 = vdwg.mxu0
    %2325 = vmatpush.bf16.msra.mxu0 %v2084
    %2326 = vmatpush.bf16.msra.mxu0 %v2080
    %2327 = vmatpush.bf16.msra.mxu0 %v2076
    %2328 = vmatpush.bf16.msra.mxu0 %v2072
    %2329 = vmatpush.bf16.msra.mxu0 %v2068
    %2330 = vmatpush.bf16.msra.mxu0 %v2064
    %2331 = vmatpush.bf16.msra.mxu0 %v2060
    %2332 = vmatpush.bf16.msra.mxu0 %v2056
    %2333 = vmatmul.bf16.gmra.mxu0 %v1466
    %v2334 = vpop.f32.mrf.mxu0
    %v2335 = vadd.f32 %v2322, %v2334
    %v2336 = vpop.f32.mrf.mxu0
    %2337 = vdwg.mxu0
    %2338 = vmatpush.bf16.msra.mxu0 %v2116
    %2339 = vmatpush.bf16.msra.mxu0 %v2112
    %2340 = vmatpush.bf16.msra.mxu0 %v2108
    %2341 = vmatpush.bf16.msra.mxu0 %v2104
    %2342 = vmatpush.bf16.msra.mxu0 %v2100
    %2343 = vmatpush.bf16.msra.mxu0 %v2096
    %2344 = vmatpush.bf16.msra.mxu0 %v2092
    %2345 = vmatpush.bf16.msra.mxu0 %v2088
    %2346 = vmatmul.bf16.gmra.mxu0 %v1467
    %v2347 = vpop.f32.mrf.mxu0
    %v2348 = vadd.f32 %v2335, %v2347
    %v2349 = vpop.f32.mrf.mxu0
    %2350 = vdwg.mxu0
    %2351 = vmatpush.bf16.msra.mxu0 %v2021
    %2352 = vmatpush.bf16.msra.mxu0 %v2017
    %2353 = vmatpush.bf16.msra.mxu0 %v2013
    %2354 = vmatpush.bf16.msra.mxu0 %v2009
    %2355 = vmatpush.bf16.msra.mxu0 %v2005
    %2356 = vmatpush.bf16.msra.mxu0 %v2001
    %2357 = vmatpush.bf16.msra.mxu0 %v1997
    %2358 = vmatpush.bf16.msra.mxu0 %v1993
    %2359 = vmatmul.bf16.gmra.mxu0 %v1464
    %v2360 = vpop.f32.mrf.mxu0
    %v2361 = vadd.f32 %v1601, %v2360
    %v2362 = vpop.f32.mrf.mxu0
    %2363 = vdwg.mxu0
    %2364 = vmatpush.bf16.msra.mxu0 %v2053
    %2365 = vmatpush.bf16.msra.mxu0 %v2049
    %2366 = vmatpush.bf16.msra.mxu0 %v2045
    %2367 = vmatpush.bf16.msra.mxu0 %v2041
    %2368 = vmatpush.bf16.msra.mxu0 %v2037
    %2369 = vmatpush.bf16.msra.mxu0 %v2033
    %2370 = vmatpush.bf16.msra.mxu0 %v2029
    %2371 = vmatpush.bf16.msra.mxu0 %v2025
    %2372 = vmatmul.bf16.gmra.mxu0 %v1465
    %v2373 = vpop.f32.mrf.mxu0
    %v2374 = vadd.f32 %v2361, %v2373
    %v2375 = vpop.f32.mrf.mxu0
    %2376 = vdwg.mxu0
    %2377 = vmatpush.bf16.msra.mxu0 %v2085
    %2378 = vmatpush.bf16.msra.mxu0 %v2081
    %2379 = vmatpush.bf16.msra.mxu0 %v2077
    %2380 = vmatpush.bf16.msra.mxu0 %v2073
    %2381 = vmatpush.bf16.msra.mxu0 %v2069
    %2382 = vmatpush.bf16.msra.mxu0 %v2065
    %2383 = vmatpush.bf16.msra.mxu0 %v2061
    %2384 = vmatpush.bf16.msra.mxu0 %v2057
    %2385 = vmatmul.bf16.gmra.mxu0 %v1466
    %v2386 = vpop.f32.mrf.mxu0
    %v2387 = vadd.f32 %v2374, %v2386
    %v2388 = vpop.f32.mrf.mxu0
    %2389 = vdwg.mxu0
    %2390 = vmatpush.bf16.msra.mxu0 %v2117
    %2391 = vmatpush.bf16.msra.mxu0 %v2113
    %2392 = vmatpush.bf16.msra.mxu0 %v2109
    %2393 = vmatpush.bf16.msra.mxu0 %v2105
    %2394 = vmatpush.bf16.msra.mxu0 %v2101
    %2395 = vmatpush.bf16.msra.mxu0 %v2097
    %2396 = vmatpush.bf16.msra.mxu0 %v2093
    %2397 = vmatpush.bf16.msra.mxu0 %v2089
    %2398 = vmatmul.bf16.gmra.mxu0 %v1467
    %v2399 = vpop.f32.mrf.mxu0
    %v2400 = vadd.f32 %v2387, %v2399
    %v2401 = vpop.f32.mrf.mxu0
    %2402 = vdwg.mxu0
    %2403 = vmatpush.bf16.msra.mxu0 %v2022
    %2404 = vmatpush.bf16.msra.mxu0 %v2018
    %2405 = vmatpush.bf16.msra.mxu0 %v2014
    %2406 = vmatpush.bf16.msra.mxu0 %v2010
    %2407 = vmatpush.bf16.msra.mxu0 %v2006
    %2408 = vmatpush.bf16.msra.mxu0 %v2002
    %2409 = vmatpush.bf16.msra.mxu0 %v1998
    %2410 = vmatpush.bf16.msra.mxu0 %v1994
    %2411 = vmatmul.bf16.gmra.mxu0 %v1464
    %v2412 = vpop.f32.mrf.mxu0
    %v2413 = vadd.f32 %v1602, %v2412
    %v2414 = vpop.f32.mrf.mxu0
    %2415 = vdwg.mxu0
    %2416 = vmatpush.bf16.msra.mxu0 %v2054
    %2417 = vmatpush.bf16.msra.mxu0 %v2050
    %2418 = vmatpush.bf16.msra.mxu0 %v2046
    %2419 = vmatpush.bf16.msra.mxu0 %v2042
    %2420 = vmatpush.bf16.msra.mxu0 %v2038
    %2421 = vmatpush.bf16.msra.mxu0 %v2034
    %2422 = vmatpush.bf16.msra.mxu0 %v2030
    %2423 = vmatpush.bf16.msra.mxu0 %v2026
    %2424 = vmatmul.bf16.gmra.mxu0 %v1465
    %v2425 = vpop.f32.mrf.mxu0
    %v2426 = vadd.f32 %v2413, %v2425
    %v2427 = vpop.f32.mrf.mxu0
    %2428 = vdwg.mxu0
    %2429 = vmatpush.bf16.msra.mxu0 %v2086
    %2430 = vmatpush.bf16.msra.mxu0 %v2082
    %2431 = vmatpush.bf16.msra.mxu0 %v2078
    %2432 = vmatpush.bf16.msra.mxu0 %v2074
    %2433 = vmatpush.bf16.msra.mxu0 %v2070
    %2434 = vmatpush.bf16.msra.mxu0 %v2066
    %2435 = vmatpush.bf16.msra.mxu0 %v2062
    %2436 = vmatpush.bf16.msra.mxu0 %v2058
    %2437 = vmatmul.bf16.gmra.mxu0 %v1466
    %v2438 = vpop.f32.mrf.mxu0
    %v2439 = vadd.f32 %v2426, %v2438
    %v2440 = vpop.f32.mrf.mxu0
    %2441 = vdwg.mxu0
    %2442 = vmatpush.bf16.msra.mxu0 %v2118
    %2443 = vmatpush.bf16.msra.mxu0 %v2114
    %2444 = vmatpush.bf16.msra.mxu0 %v2110
    %2445 = vmatpush.bf16.msra.mxu0 %v2106
    %2446 = vmatpush.bf16.msra.mxu0 %v2102
    %2447 = vmatpush.bf16.msra.mxu0 %v2098
    %2448 = vmatpush.bf16.msra.mxu0 %v2094
    %2449 = vmatpush.bf16.msra.mxu0 %v2090
    %2450 = vmatmul.bf16.gmra.mxu0 %v1467
    %v2451 = vpop.f32.mrf.mxu0
    %v2452 = vadd.f32 %v2439, %v2451
    %v2453 = vpop.f32.mrf.mxu0
    %2454 = vdwg.mxu0
    %v2455 = vmax.f32 %v2296, 0.0
    %v2456 = vmax.f32 %v2348, 0.0
    %v2457 = vmax.f32 %v2400, 0.0
    %v2458 = vmax.f32 %v2452, 0.0
    %v2459 = vmin.f32 %v2455, 6.0
    %v2460 = vmin.f32 %v2456, 6.0
    %v2461 = vmin.f32 %v2457, 6.0
    %v2462 = vmin.f32 %v2458, 6.0
    %v2463 = vpack.c.bf16 %v2459, %v2459
    %v2464 = vpack.c.bf16 %v2460, %v2460
    %v2465 = vpack.c.bf16 %v2461, %v2461
    %v2466 = vpack.c.bf16 %v2462, %v2462
    %v2467 = vld [vmem:[#allocation8] sm:$0xf]
    %v2468 = vld [vmem:[#allocation8 + $0x4] sm:$0xf]
    %v2469 = vld [vmem:[#allocation8 + $0x8] sm:$0xf]
    %v2470 = vld [vmem:[#allocation8 + $0xc] sm:$0xf]
    %v2471 = vld [vmem:[#allocation8 + $0x10] sm:$0xf]
    %v2472 = vld [vmem:[#allocation8 + $0x14] sm:$0xf]
    %v2473 = vld [vmem:[#allocation8 + $0x18] sm:$0xf]
    %v2474 = vld [vmem:[#allocation8 + $0x1c] sm:$0xf]
    %v2475 = vld [vmem:[#allocation8 + $0x20] sm:$0xf]
    %v2476 = vld [vmem:[#allocation8 + $0x24] sm:$0xf]
    %v2477 = vld [vmem:[#allocation8 + $0x28] sm:$0xf]
    %v2478 = vld [vmem:[#allocation8 + $0x2c] sm:$0xf]
    %v2479 = vld [vmem:[#allocation8 + $0x30] sm:$0xf]
    %v2480 = vld [vmem:[#allocation8 + $0x34] sm:$0xf]
    %v2481 = vld [vmem:[#allocation8 + $0x38] sm:$0xf]
    %v2482 = vld [vmem:[#allocation8 + $0x3c] sm:$0xf]
    %v2483 = vld [vmem:[#allocation8 + $0x40] sm:$0xf]
    %v2484 = vld [vmem:[#allocation8 + $0x44] sm:$0xf]
    %v2485 = vld [vmem:[#allocation8 + $0x48] sm:$0xf]
    %v2486 = vld [vmem:[#allocation8 + $0x4c] sm:$0xf]
    %v2487 = vld [vmem:[#allocation8 + $0x50] sm:$0xf]
    %v2488 = vld [vmem:[#allocation8 + $0x54] sm:$0xf]
    %v2489 = vld [vmem:[#allocation8 + $0x58] sm:$0xf]
    %v2490 = vld [vmem:[#allocation8 + $0x5c] sm:$0xf]
    %v2491 = vld [vmem:[#allocation8 + $0x60] sm:$0xf]
    %v2492 = vld [vmem:[#allocation8 + $0x64] sm:$0xf]
    %v2493 = vld [vmem:[#allocation8 + $0x68] sm:$0xf]
    %v2494 = vld [vmem:[#allocation8 + $0x6c] sm:$0xf]
    %v2495 = vld [vmem:[#allocation8 + $0x70] sm:$0xf]
    %v2496 = vld [vmem:[#allocation8 + $0x74] sm:$0xf]
    %v2497 = vld [vmem:[#allocation8 + $0x78] sm:$0xf]
    %v2498 = vld [vmem:[#allocation8 + $0x7c] sm:$0xf]
    %v2499 = vld [vmem:[#allocation8 + $0x80] sm:$0xf]
    %v2500 = vld [vmem:[#allocation8 + $0x84] sm:$0xf]
    %v2501 = vld [vmem:[#allocation8 + $0x88] sm:$0xf]
    %v2502 = vld [vmem:[#allocation8 + $0x8c] sm:$0xf]
    %v2503 = vld [vmem:[#allocation8 + $0x90] sm:$0xf]
    %v2504 = vld [vmem:[#allocation8 + $0x94] sm:$0xf]
    %v2505 = vld [vmem:[#allocation8 + $0x98] sm:$0xf]
    %v2506 = vld [vmem:[#allocation8 + $0x9c] sm:$0xf]
    %v2507 = vld [vmem:[#allocation8 + $0xa0] sm:$0xf]
    %v2508 = vld [vmem:[#allocation8 + $0xa4] sm:$0xf]
    %v2509 = vld [vmem:[#allocation8 + $0xa8] sm:$0xf]
    %v2510 = vld [vmem:[#allocation8 + $0xac] sm:$0xf]
    %v2511 = vld [vmem:[#allocation8 + $0xb0] sm:$0xf]
    %v2512 = vld [vmem:[#allocation8 + $0xb4] sm:$0xf]
    %v2513 = vld [vmem:[#allocation8 + $0xb8] sm:$0xf]
    %v2514 = vld [vmem:[#allocation8 + $0xbc] sm:$0xf]
    %v2515 = vld [vmem:[#allocation8 + $0xc0] sm:$0xf]
    %v2516 = vld [vmem:[#allocation8 + $0xc4] sm:$0xf]
    %v2517 = vld [vmem:[#allocation8 + $0xc8] sm:$0xf]
    %v2518 = vld [vmem:[#allocation8 + $0xcc] sm:$0xf]
    %v2519 = vld [vmem:[#allocation8 + $0xd0] sm:$0xf]
    %v2520 = vld [vmem:[#allocation8 + $0xd4] sm:$0xf]
    %v2521 = vld [vmem:[#allocation8 + $0xd8] sm:$0xf]
    %v2522 = vld [vmem:[#allocation8 + $0xdc] sm:$0xf]
    %v2523 = vld [vmem:[#allocation8 + $0xe0] sm:$0xf]
    %v2524 = vld [vmem:[#allocation8 + $0xe4] sm:$0xf]
    %v2525 = vld [vmem:[#allocation8 + $0xe8] sm:$0xf]
    %v2526 = vld [vmem:[#allocation8 + $0xec] sm:$0xf]
    %v2527 = vld [vmem:[#allocation8 + $0xf0] sm:$0xf]
    %v2528 = vld [vmem:[#allocation8 + $0xf4] sm:$0xf]
    %v2529 = vld [vmem:[#allocation8 + $0xf8] sm:$0xf]
    %v2530 = vld [vmem:[#allocation8 + $0xfc] sm:$0xf]
    %v2531 = vld [vmem:[#allocation16 + $0x3] ss:$0 sm:$0xff]
    %v2596 = vunpack.c.l.b16 %v2467
    %v2597 = vunpack.c.l.b16 %v2468
    %v2598 = vunpack.c.l.b16 %v2469
    %v2599 = vunpack.c.l.b16 %v2470
    %v2600 = vunpack.c.l.b16 %v2471
    %v2601 = vunpack.c.l.b16 %v2472
    %v2602 = vunpack.c.l.b16 %v2473
    %v2603 = vunpack.c.l.b16 %v2474
    %v2604 = vunpack.c.l.b16 %v2475
    %v2605 = vunpack.c.l.b16 %v2476
    %v2606 = vunpack.c.l.b16 %v2477
    %v2607 = vunpack.c.l.b16 %v2478
    %v2608 = vunpack.c.l.b16 %v2479
    %v2609 = vunpack.c.l.b16 %v2480
    %v2610 = vunpack.c.l.b16 %v2481
    %v2611 = vunpack.c.l.b16 %v2482
    %v2612 = vunpack.c.l.b16 %v2483
    %v2613 = vunpack.c.l.b16 %v2484
    %v2614 = vunpack.c.l.b16 %v2485
    %v2615 = vunpack.c.l.b16 %v2486
    %v2616 = vunpack.c.l.b16 %v2487
    %v2617 = vunpack.c.l.b16 %v2488
    %v2618 = vunpack.c.l.b16 %v2489
    %v2619 = vunpack.c.l.b16 %v2490
    %v2620 = vunpack.c.l.b16 %v2491
    %v2621 = vunpack.c.l.b16 %v2492
    %v2622 = vunpack.c.l.b16 %v2493
    %v2623 = vunpack.c.l.b16 %v2494
    %v2624 = vunpack.c.l.b16 %v2495
    %v2625 = vunpack.c.l.b16 %v2496
    %v2626 = vunpack.c.l.b16 %v2497
    %v2627 = vunpack.c.l.b16 %v2498
    %v2628 = vunpack.c.l.b16 %v2499
    %v2629 = vunpack.c.l.b16 %v2500
    %v2630 = vunpack.c.l.b16 %v2501
    %v2631 = vunpack.c.l.b16 %v2502
    %v2632 = vunpack.c.l.b16 %v2503
    %v2633 = vunpack.c.l.b16 %v2504
    %v2634 = vunpack.c.l.b16 %v2505
    %v2635 = vunpack.c.l.b16 %v2506
    %v2636 = vunpack.c.l.b16 %v2507
    %v2637 = vunpack.c.l.b16 %v2508
    %v2638 = vunpack.c.l.b16 %v2509
    %v2639 = vunpack.c.l.b16 %v2510
    %v2640 = vunpack.c.l.b16 %v2511
    %v2641 = vunpack.c.l.b16 %v2512
    %v2642 = vunpack.c.l.b16 %v2513
    %v2643 = vunpack.c.l.b16 %v2514
    %v2644 = vunpack.c.l.b16 %v2515
    %v2645 = vunpack.c.l.b16 %v2516
    %v2646 = vunpack.c.l.b16 %v2517
    %v2647 = vunpack.c.l.b16 %v2518
    %v2648 = vunpack.c.l.b16 %v2519
    %v2649 = vunpack.c.l.b16 %v2520
    %v2650 = vunpack.c.l.b16 %v2521
    %v2651 = vunpack.c.l.b16 %v2522
    %v2652 = vunpack.c.l.b16 %v2523
    %v2653 = vunpack.c.l.b16 %v2524
    %v2654 = vunpack.c.l.b16 %v2525
    %v2655 = vunpack.c.l.b16 %v2526
    %v2656 = vunpack.c.l.b16 %v2527
    %v2657 = vunpack.c.l.b16 %v2528
    %v2658 = vunpack.c.l.b16 %v2529
    %v2659 = vunpack.c.l.b16 %v2530
    %v2660 = vpack.c.b16 %v2597, %v2596
    %v2661 = vpack.c.b16 %v2599, %v2598
    %v2662 = vpack.c.b16 %v2601, %v2600
    %v2663 = vpack.c.b16 %v2603, %v2602
    %v2664 = vpack.c.b16 %v2605, %v2604
    %v2665 = vpack.c.b16 %v2607, %v2606
    %v2666 = vpack.c.b16 %v2609, %v2608
    %v2667 = vpack.c.b16 %v2611, %v2610
    %v2668 = vpack.c.b16 %v2613, %v2612
    %v2669 = vpack.c.b16 %v2615, %v2614
    %v2670 = vpack.c.b16 %v2617, %v2616
    %v2671 = vpack.c.b16 %v2619, %v2618
    %v2672 = vpack.c.b16 %v2621, %v2620
    %v2673 = vpack.c.b16 %v2623, %v2622
    %v2674 = vpack.c.b16 %v2625, %v2624
    %v2675 = vpack.c.b16 %v2627, %v2626
    %v2676 = vpack.c.b16 %v2629, %v2628
    %v2677 = vpack.c.b16 %v2631, %v2630
    %v2678 = vpack.c.b16 %v2633, %v2632
    %v2679 = vpack.c.b16 %v2635, %v2634
    %v2680 = vpack.c.b16 %v2637, %v2636
    %v2681 = vpack.c.b16 %v2639, %v2638
    %v2682 = vpack.c.b16 %v2641, %v2640
    %v2683 = vpack.c.b16 %v2643, %v2642
    %v2684 = vpack.c.b16 %v2645, %v2644
    %v2685 = vpack.c.b16 %v2647, %v2646
    %v2686 = vpack.c.b16 %v2649, %v2648
    %v2687 = vpack.c.b16 %v2651, %v2650
    %v2688 = vpack.c.b16 %v2653, %v2652
    %v2689 = vpack.c.b16 %v2655, %v2654
    %v2690 = vpack.c.b16 %v2657, %v2656
    %v2691 = vpack.c.b16 %v2659, %v2658
    %2724 = vmatpush.bf16.msra.mxu0 %v2667
    %2725 = vmatpush.bf16.msra.mxu0 %v2666
    %2726 = vmatpush.bf16.msra.mxu0 %v2665
    %2727 = vmatpush.bf16.msra.mxu0 %v2664
    %2728 = vmatpush.bf16.msra.mxu0 %v2663
    %2729 = vmatpush.bf16.msra.mxu0 %v2662
    %2730 = vmatpush.bf16.msra.mxu0 %v2661
    %2731 = vmatpush.bf16.msra.mxu0 %v2660
    %2732 = vmatmul.bf16.gmra.mxu0 %v2463
    %v2733 = vpop.f32.mrf.mxu0
    %v2734 = vadd.f32 %v2531, %v2733
    %v2735 = vpop.f32.mrf.mxu0
    %2736 = vdwg.mxu0
    %2737 = vmatpush.bf16.msra.mxu0 %v2675
    %2738 = vmatpush.bf16.msra.mxu0 %v2674
    %2739 = vmatpush.bf16.msra.mxu0 %v2673
    %2740 = vmatpush.bf16.msra.mxu0 %v2672
    %2741 = vmatpush.bf16.msra.mxu0 %v2671
    %2742 = vmatpush.bf16.msra.mxu0 %v2670
    %2743 = vmatpush.bf16.msra.mxu0 %v2669
    %2744 = vmatpush.bf16.msra.mxu0 %v2668
    %2745 = vmatmul.bf16.gmra.mxu0 %v2464
    %v2746 = vpop.f32.mrf.mxu0
    %v2747 = vadd.f32 %v2734, %v2746
    %v2748 = vpop.f32.mrf.mxu0
    %2749 = vdwg.mxu0
    %2750 = vmatpush.bf16.msra.mxu0 %v2683
    %2751 = vmatpush.bf16.msra.mxu0 %v2682
    %2752 = vmatpush.bf16.msra.mxu0 %v2681
    %2753 = vmatpush.bf16.msra.mxu0 %v2680
    %2754 = vmatpush.bf16.msra.mxu0 %v2679
    %2755 = vmatpush.bf16.msra.mxu0 %v2678
    %2756 = vmatpush.bf16.msra.mxu0 %v2677
    %2757 = vmatpush.bf16.msra.mxu0 %v2676
    %2758 = vmatmul.bf16.gmra.mxu0 %v2465
    %v2759 = vpop.f32.mrf.mxu0
    %v2760 = vadd.f32 %v2747, %v2759
    %v2761 = vpop.f32.mrf.mxu0
    %2762 = vdwg.mxu0
    %2763 = vmatpush.bf16.msra.mxu0 %v2691
    %2764 = vmatpush.bf16.msra.mxu0 %v2690
    %2765 = vmatpush.bf16.msra.mxu0 %v2689
    %2766 = vmatpush.bf16.msra.mxu0 %v2688
    %2767 = vmatpush.bf16.msra.mxu0 %v2687
    %2768 = vmatpush.bf16.msra.mxu0 %v2686
    %2769 = vmatpush.bf16.msra.mxu0 %v2685
    %2770 = vmatpush.bf16.msra.mxu0 %v2684
    %2771 = vmatmul.bf16.gmra.mxu0 %v2466
    %v2772 = vpop.f32.mrf.mxu0
    %v2773 = vadd.f32 %v2760, %v2772
    %v2774 = vpop.f32.mrf.mxu0
    %2775 = vdwg.mxu0
    %v2776 = vtanh.pop %v2773
    %v2777 = vpack.c.bf16 %v2776, %v2776
    %v2778 = vld [vmem:[#allocation14] sm:$0xf]
    %v2779 = vld [vmem:[#allocation14 + $0x4] sm:$0xf]
    %v2780 = vld [vmem:[#allocation14 + $0x8] sm:$0xf]
    %v2781 = vld [vmem:[#allocation14 + $0xc] sm:$0xf]
    %v2782 = vld [vmem:[#allocation14 + $0x10] sm:$0xf]
    %v2783 = vld [vmem:[#allocation14 + $0x14] sm:$0xf]
    %v2784 = vld [vmem:[#allocation14 + $0x18] sm:$0xf]
    %v2785 = vld [vmem:[#allocation14 + $0x1c] sm:$0xf]
    %v2786 = vld [vmem:[#allocation14 + $0x20] sm:$0xf]
    %v2787 = vld [vmem:[#allocation14 + $0x24] sm:$0xf]
    %v2788 = vld [vmem:[#allocation14 + $0x28] sm:$0xf]
    %v2789 = vld [vmem:[#allocation14 + $0x2c] sm:$0xf]
    %v2790 = vld [vmem:[#allocation14 + $0x30] sm:$0xf]
    %v2791 = vld [vmem:[#allocation14 + $0x34] sm:$0xf]
    %v2792 = vld [vmem:[#allocation14 + $0x38] sm:$0xf]
    %v2793 = vld [vmem:[#allocation14 + $0x3c] sm:$0xf]
    %v2810 = vunpack.c.l.b16 %v2778
    %v2811 = vunpack.c.l.b16 %v2779
    %v2812 = vunpack.c.l.b16 %v2780
    %v2813 = vunpack.c.l.b16 %v2781
    %v2814 = vunpack.c.l.b16 %v2782
    %v2815 = vunpack.c.l.b16 %v2783
    %v2816 = vunpack.c.l.b16 %v2784
    %v2817 = vunpack.c.l.b16 %v2785
    %v2818 = vunpack.c.l.b16 %v2786
    %v2819 = vunpack.c.l.b16 %v2787
    %v2820 = vunpack.c.l.b16 %v2788
    %v2821 = vunpack.c.l.b16 %v2789
    %v2822 = vunpack.c.l.b16 %v2790
    %v2823 = vunpack.c.l.b16 %v2791
    %v2824 = vunpack.c.l.b16 %v2792
    %v2825 = vunpack.c.l.b16 %v2793
    %v2826 = vpack.c.b16 %v2811, %v2810
    %v2827 = vpack.c.b16 %v2813, %v2812
    %v2828 = vpack.c.b16 %v2815, %v2814
    %v2829 = vpack.c.b16 %v2817, %v2816
    %v2830 = vpack.c.b16 %v2819, %v2818
    %v2831 = vpack.c.b16 %v2821, %v2820
    %v2832 = vpack.c.b16 %v2823, %v2822
    %v2833 = vpack.c.b16 %v2825, %v2824
    %2842 = vmatpush.bf16.msra.mxu0 %v2833
    %2843 = vmatpush.bf16.msra.mxu0 %v2832
    %2844 = vmatpush.bf16.msra.mxu0 %v2831
    %2845 = vmatpush.bf16.msra.mxu0 %v2830
    %2846 = vmatpush.bf16.msra.mxu0 %v2829
    %2847 = vmatpush.bf16.msra.mxu0 %v2828
    %2848 = vmatpush.bf16.msra.mxu0 %v2827
    %2849 = vmatpush.bf16.msra.mxu0 %v2826
    %2850 = vmatmul.bf16.gmra.mxu0 %v2777
    %v2851 = vpop.f32.mrf.mxu0
    %v2852 = vadd.f32 0.0, %v2851
    %v2853 = vpop.f32.mrf.mxu0
    %2854 = vdwg.mxu0
    %v2855 = vtanh.pop %v2852
    %v2856 = vmul.f32 %v2855, 0.5
    %v2857 = vld [vmem:[#allocation16 + $0x21] ss:$0 sm:$0xff]
    %v2858 = vsub.f32 %v2856, %v2857
    %v2859 = vmul.f32 %v2858, %v2858
    %2860 = vrot.lane.b32.xlu0 %v2859, 120
    %v2861 = vpop.permute.xlu0 %2860
    %v2862 = vadd.f32 %v2859, %v2861
    %2863 = vrot.lane.b32.xlu0 %v2859, 112
    %v2864 = vpop.permute.xlu0 %2863
    %v2865 = vadd.f32 %v2862, %v2864
    %v2866 = vld [vmem:[#allocation16 + $0x22] ss:$0 sm:$0xff]
    %v2867 = vrsqrt.pop %v2865
    %v2868 = vmul.f32 %v2867, %v2865
    %v2869 = vmul.f32 %v2868, %v2867
    %v2870 = vmul.f32 0.5, %v2869
    %v2871 = vsub.f32 1.5, %v2870
    %v2872 = vmul.f32 %v2867, %v2871
    %v2873 = vmul.f32 %v2865, %v2872
    %vm2874 = vcmp.eq.f32.partialorder %v2865, inf
    %v2875 = vsel %vm2874, %v2865, %v2873
    %vm2876 = vcmp.eq.f32.partialorder %v2865, 0.0
    %v2877 = vand.u32 %v2865, 2147483648
    %v2878 = vsel %vm2876, %v2877, %v2875
    %v2879 = vsub.f32 %v2866, %v2878
    %v2880 = vmax.f32 %v2879, 0.0
    %2881 = vrot.lane.b32.xlu0 %v2856, 127
    %v2882 = vpop.permute.xlu0 %2881
    %v2883 = vsub.f32 %v2856, %v2882
    %v2884 = vmul.f32 %v2883, %v2883
    %2885 = vrot.lane.b32.xlu0 %v2884, 120
    %v2886 = vpop.permute.xlu0 %2885
    %v2887 = vadd.f32 %v2884, %v2886
    %2888 = vrot.lane.b32.xlu0 %v2884, 112
    %v2889 = vpop.permute.xlu0 %2888
    %v2890 = vadd.f32 %v2887, %v2889
    %v2891 = vld [vmem:[#allocation16 + $0x43] ss:$0 sm:$0xff]
    %v2892 = vrsqrt.pop %v2890
    %v2893 = vmul.f32 %v2892, %v2890
    %v2894 = vmul.f32 %v2893, %v2892
    %v2895 = vmul.f32 0.5, %v2894
    %v2896 = vsub.f32 1.5, %v2895
    %v2897 = vmul.f32 %v2892, %v2896
    %v2898 = vmul.f32 %v2890, %v2897
    %vm2899 = vcmp.eq.f32.partialorder %v2890, inf
    %v2900 = vsel %vm2899, %v2890, %v2898
    %vm2901 = vcmp.eq.f32.partialorder %v2890, 0.0
    %v2902 = vand.u32 %v2890, 2147483648
    %v2903 = vsel %vm2901, %v2902, %v2900
    %v2904 = vsub.f32 %v2891, %v2903
    %v2905 = vmax.f32 %v2904, -1e+09
    %2906 = vrot.lane.b32.xlu0 %v2856, 126
    %v2907 = vpop.permute.xlu0 %2906
    %v2908 = vsub.f32 %v2856, %v2907
    %v2909 = vmul.f32 %v2908, %v2908
    %2910 = vrot.lane.b32.xlu0 %v2909, 120
    %v2911 = vpop.permute.xlu0 %2910
    %v2912 = vadd.f32 %v2909, %v2911
    %2913 = vrot.lane.b32.xlu0 %v2909, 112
    %v2914 = vpop.permute.xlu0 %2913
    %v2915 = vadd.f32 %v2912, %v2914
    %v2916 = vld [vmem:[#allocation16 + $0x44] ss:$0 sm:$0xff]
    %v2917 = vrsqrt.pop %v2915
    %v2918 = vmul.f32 %v2917, %v2915
    %v2919 = vmul.f32 %v2918, %v2917
    %v2920 = vmul.f32 0.5, %v2919
    %v2921 = vsub.f32 1.5, %v2920
    %v2922 = vmul.f32 %v2917, %v2921
    %v2923 = vmul.f32 %v2915, %v2922
    %vm2924 = vcmp.eq.f32.partialorder %v2915, inf
    %v2925 = vsel %vm2924, %v2915, %v2923
    %vm2926 = vcmp.eq.f32.partialorder %v2915, 0.0
    %v2927 = vand.u32 %v2915, 2147483648
    %v2928 = vsel %vm2926, %v2927, %v2925
    %v2929 = vsub.f32 %v2916, %v2928
    %v2930 = vmax.f32 %v2905, %v2929
    %2931 = vrot.lane.b32.xlu0 %v2856, 125
    %v2932 = vpop.permute.xlu0 %2931
    %v2933 = vsub.f32 %v2856, %v2932
    %v2934 = vmul.f32 %v2933, %v2933
    %2935 = vrot.lane.b32.xlu0 %v2934, 120
    %v2936 = vpop.permute.xlu0 %2935
    %v2937 = vadd.f32 %v2934, %v2936
    %2938 = vrot.lane.b32.xlu0 %v2934, 112
    %v2939 = vpop.permute.xlu0 %2938
    %v2940 = vadd.f32 %v2937, %v2939
    %v2941 = vld [vmem:[#allocation16 + $0x45] ss:$0 sm:$0xff]
    %v2942 = vrsqrt.pop %v2940
    %v2943 = vmul.f32 %v2942, %v2940
    %v2944 = vmul.f32 %v2943, %v2942
    %v2945 = vmul.f32 0.5, %v2944
    %v2946 = vsub.f32 1.5, %v2945
    %v2947 = vmul.f32 %v2942, %v2946
    %v2948 = vmul.f32 %v2940, %v2947
    %vm2949 = vcmp.eq.f32.partialorder %v2940, inf
    %v2950 = vsel %vm2949, %v2940, %v2948
    %vm2951 = vcmp.eq.f32.partialorder %v2940, 0.0
    %v2952 = vand.u32 %v2940, 2147483648
    %v2953 = vsel %vm2951, %v2952, %v2950
    %v2954 = vsub.f32 %v2941, %v2953
    %v2955 = vmax.f32 %v2930, %v2954
    %2956 = vrot.lane.b32.xlu0 %v2856, 124
    %v2957 = vpop.permute.xlu0 %2956
    %v2958 = vsub.f32 %v2856, %v2957
    %v2959 = vmul.f32 %v2958, %v2958
    %2960 = vrot.lane.b32.xlu0 %v2959, 120
    %v2961 = vpop.permute.xlu0 %2960
    %v2962 = vadd.f32 %v2959, %v2961
    %2963 = vrot.lane.b32.xlu0 %v2959, 112
    %v2964 = vpop.permute.xlu0 %2963
    %v2965 = vadd.f32 %v2962, %v2964
    %v2966 = vld [vmem:[#allocation16 + $0x46] ss:$0 sm:$0xff]
    %v2967 = vrsqrt.pop %v2965
    %v2968 = vmul.f32 %v2967, %v2965
    %v2969 = vmul.f32 %v2968, %v2967
    %v2970 = vmul.f32 0.5, %v2969
    %v2971 = vsub.f32 1.5, %v2970
    %v2972 = vmul.f32 %v2967, %v2971
    %v2973 = vmul.f32 %v2965, %v2972
    %vm2974 = vcmp.eq.f32.partialorder %v2965, inf
    %v2975 = vsel %vm2974, %v2965, %v2973
    %vm2976 = vcmp.eq.f32.partialorder %v2965, 0.0
    %v2977 = vand.u32 %v2965, 2147483648
    %v2978 = vsel %vm2976, %v2977, %v2975
    %v2979 = vsub.f32 %v2966, %v2978
    %v2980 = vmax.f32 %v2955, %v2979
    %2981 = vrot.lane.b32.xlu0 %v2856, 123
    %v2982 = vpop.permute.xlu0 %2981
    %v2983 = vsub.f32 %v2856, %v2982
    %v2984 = vmul.f32 %v2983, %v2983
    %2985 = vrot.lane.b32.xlu0 %v2984, 120
    %v2986 = vpop.permute.xlu0 %2985
    %v2987 = vadd.f32 %v2984, %v2986
    %2988 = vrot.lane.b32.xlu0 %v2984, 112
    %v2989 = vpop.permute.xlu0 %2988
    %v2990 = vadd.f32 %v2987, %v2989
    %v2991 = vld [vmem:[#allocation16 + $0x47] ss:$0 sm:$0xff]
    %v2992 = vrsqrt.pop %v2990
    %v2993 = vmul.f32 %v2992, %v2990
    %v2994 = vmul.f32 %v2993, %v2992
    %v2995 = vmul.f32 0.5, %v2994
    %v2996 = vsub.f32 1.5, %v2995
    %v2997 = vmul.f32 %v2992, %v2996
    %v2998 = vmul.f32 %v2990, %v2997
    %vm2999 = vcmp.eq.f32.partialorder %v2990, inf
    %v3000 = vsel %vm2999, %v2990, %v2998
    %vm3001 = vcmp.eq.f32.partialorder %v2990, 0.0
    %v3002 = vand.u32 %v2990, 2147483648
    %v3003 = vsel %vm3001, %v3002, %v3000
    %v3004 = vsub.f32 %v2991, %v3003
    %v3005 = vmax.f32 %v2980, %v3004
    %3006 = vrot.lane.b32.xlu0 %v2856, 122
    %v3007 = vpop.permute.xlu0 %3006
    %v3008 = vsub.f32 %v2856, %v3007
    %v3009 = vmul.f32 %v3008, %v3008
    %3010 = vrot.lane.b32.xlu0 %v3009, 120
    %v3011 = vpop.permute.xlu0 %3010
    %v3012 = vadd.f32 %v3009, %v3011
    %3013 = vrot.lane.b32.xlu0 %v3009, 112
    %v3014 = vpop.permute.xlu0 %3013
    %v3015 = vadd.f32 %v3012, %v3014
    %v3016 = vld [vmem:[#allocation16 + $0x60] ss:$0 sm:$0xff]
    %v3017 = vrsqrt.pop %v3015
    %v3018 = vmul.f32 %v3017, %v3015
    %v3019 = vmul.f32 %v3018, %v3017
    %v3020 = vmul.f32 0.5, %v3019
    %v3021 = vsub.f32 1.5, %v3020
    %v3022 = vmul.f32 %v3017, %v3021
    %v3023 = vmul.f32 %v3015, %v3022
    %vm3024 = vcmp.eq.f32.partialorder %v3015, inf
    %v3025 = vsel %vm3024, %v3015, %v3023
    %vm3026 = vcmp.eq.f32.partialorder %v3015, 0.0
    %v3027 = vand.u32 %v3015, 2147483648
    %v3028 = vsel %vm3026, %v3027, %v3025
    %v3029 = vsub.f32 %v3016, %v3028
    %v3030 = vmax.f32 %v3005, %v3029
    %3031 = vrot.lane.b32.xlu0 %v2856, 121
    %v3032 = vpop.permute.xlu0 %3031
    %v3033 = vsub.f32 %v2856, %v3032
    %v3034 = vmul.f32 %v3033, %v3033
    %3035 = vrot.lane.b32.xlu0 %v3034, 120
    %v3036 = vpop.permute.xlu0 %3035
    %v3037 = vadd.f32 %v3034, %v3036
    %3038 = vrot.lane.b32.xlu0 %v3034, 112
    %v3039 = vpop.permute.xlu0 %3038
    %v3040 = vadd.f32 %v3037, %v3039
    %v3041 = vld [vmem:[#allocation16 + $0x61] ss:$0 sm:$0xff]
    %v3042 = vrsqrt.pop %v3040
    %v3043 = vmul.f32 %v3042, %v3040
    %v3044 = vmul.f32 %v3043, %v3042
    %v3045 = vmul.f32 0.5, %v3044
    %v3046 = vsub.f32 1.5, %v3045
    %v3047 = vmul.f32 %v3042, %v3046
    %v3048 = vmul.f32 %v3040, %v3047
    %vm3049 = vcmp.eq.f32.partialorder %v3040, inf
    %v3050 = vsel %vm3049, %v3040, %v3048
    %vm3051 = vcmp.eq.f32.partialorder %v3040, 0.0
    %v3052 = vand.u32 %v3040, 2147483648
    %v3053 = vsel %vm3051, %v3052, %v3050
    %v3054 = vsub.f32 %v3041, %v3053
    %v3055 = vmax.f32 %v3030, %v3054
    %3056 = vmax.xlane.f32.xlu0 %v3055
    %v3057 = vpop.xlane.xlu0 %3056
    %v3058 = vmax.f32 %v3057, 0.0
    %v3059 = vld [vmem:[#allocation16 + $0x40] ss:$0 sm:$0xff]
    %v3060 = vmul.f32 %v2856, %v3059
    %3061 = vrot.lane.b32.xlu0 %v2852, 101
    %v3062 = vpop.permute.xlu0 %3061
    %v3063 = vld [vmem:[#allocation16 + $0x41] ss:$0 sm:$0xff]
    %v3064 = vmul.f32 %v3062, %v3063
    %v3065 = vld [vmem:[#allocation16 + $0x24] ss:$0 sm:$0xff]
    %v3066 = vadd.f32 %v3064, %v3065
    %v3067 = vmul.f32 %v3066, %v3066
    %3068 = vadd.xlane.f32.xlu0 %v3067
    %v3069 = vpop.xlane.xlu0 %3068
    %v3070 = vadd.f32 %v3069, 1e-12
    %v3071 = vrsqrt.pop %v3070
    %v3072 = vmul.f32 %v3071, %v3070
    %v3073 = vmul.f32 %v3072, %v3071
    %v3074 = vmul.f32 0.5, %v3073
    %v3075 = vsub.f32 1.5, %v3074
    %v3076 = vmul.f32 %v3071, %v3075
    %vm3077 = vweird.f32 %v3070
    %vm3078 = vweird.f32 %v3071
    %vm3079 = vmor %vm3077, %vm3078
    %v3080 = vsel %vm3079, %v3071, %v3076
    %v3081 = vmul.f32 %v3066, %v3080
    %3082 = vrot.lane.b32.xlu0 %v3060, 104
    %v3083 = vpop.permute.xlu0 %3082
    %v3084 = vsub.f32 %v186, %v3083
    %v3085 = vmul.f32 %v3084, %v3084
    %v3086 = vld [vmem:[#allocation16 + $0x42] ss:$0 sm:$0xff]
    %v3087 = vmul.f32 %v3085, %v3086
    %3088 = vadd.xlane.f32.xlu0 %v3087
    %v3089 = vpop.xlane.xlu0 %3088
    %3090 = vrot.lane.b32.xlu0 %v186, 125
    %v3091 = vpop.permute.xlu0 %3090
    %v3092 = vmul.f32 %v3091, %v3081
    %3093 = vadd.xlane.f32.xlu0 %v3092
    %v3094 = vpop.xlane.xlu0 %3093
    %v3095 = vrsqrt.pop %v3089
    %v3096 = vmul.f32 %v3095, %v3089
    %v3097 = vmul.f32 %v3096, %v3095
    %v3098 = vmul.f32 0.5, %v3097
    %v3099 = vsub.f32 1.5, %v3098
    %v3100 = vmul.f32 %v3095, %v3099
    %v3101 = vmul.f32 %v3089, %v3100
    %vm3102 = vcmp.eq.f32.partialorder %v3089, inf
    %v3103 = vsel %vm3102, %v3089, %v3101
    %vm3104 = vcmp.eq.f32.partialorder %v3089, 0.0
    %v3105 = vand.u32 %v3089, 2147483648
    %v3106 = vsel %vm3104, %v3105, %v3103
    %v3107 = vadd.f32 %v3106, 1.0
    %v3108 = vand.u32 2147483647, %v3094
    %v3109 = vsub.f32 %v3107, %v3108
    %v3110 = vld [vmem:[#allocation16 + $0x27] ss:$0 sm:$0xff]
    %v3111 = vmul.f32 %v2856, %v3110
    %3112 = vrot.lane.b32.xlu0 %v2880, 24
    %v3113 = vpop.permute.xlu0 %3112
    %v3114 = vadd.f32 %v3111, %v3113
    %3115 = vrot.lane.b32.xlu0 %v3060, 8
    %v3116 = vpop.permute.xlu0 %3115
    %v3117 = vadd.f32 %v3114, %v3116
    %3118 = vrot.lane.b32.xlu0 %v3081, 35
    %v3119 = vpop.permute.xlu0 %3118
    %v3120 = vadd.f32 %v3117, %v3119
    %v3121 = vld [vmem:[#allocation16 + $0x25] ss:$0 sm:$0xff]
    %v3122 = vmul.f32 %v3058, %v3121
    %v3123 = vadd.f32 %v3120, %v3122
    %v3124 = vld [vmem:[#allocation16 + $0x26] ss:$0 sm:$0xff]
    %v3125 = vmul.f32 %v3109, %v3124
    %v3126 = vadd.f32 %v3123, %v3125
    %3127 = vrot.lane.b32.xlu0 %v186, 41
    %v3128 = vpop.permute.xlu0 %3127
    %v3129 = vadd.f32 %v3126, %v3128
    %v3130 = vld [vmem:[#allocation16 + $0x23] ss:$0 sm:$0xff]
    %v3131 = vadd.f32 %v3129, %v3130
    %v3132 = vpack.c.bf16 %v3131, %v3131
    %v3133 = vld [vmem:[#allocation10] sm:$0xff]
    %v3134 = vld [vmem:[#allocation10 + $0x8] sm:$0xff]
    %v3135 = vld [vmem:[#allocation10 + $0x10] sm:$0xff]
    %v3136 = vld [vmem:[#allocation10 + $0x18] sm:$0xff]
    %v3137 = vld [vmem:[#allocation10 + $0x20] sm:$0xff]
    %v3138 = vld [vmem:[#allocation10 + $0x28] sm:$0xff]
    %v3139 = vld [vmem:[#allocation10 + $0x30] sm:$0xff]
    %v3140 = vld [vmem:[#allocation10 + $0x38] sm:$0xff]
    %v3141 = vld [vmem:[#allocation10 + $0x40] sm:$0xff]
    %v3142 = vld [vmem:[#allocation10 + $0x48] sm:$0xff]
    %v3143 = vld [vmem:[#allocation10 + $0x50] sm:$0xff]
    %v3144 = vld [vmem:[#allocation10 + $0x58] sm:$0xff]
    %v3145 = vld [vmem:[#allocation10 + $0x60] sm:$0xff]
    %v3146 = vld [vmem:[#allocation10 + $0x68] sm:$0xff]
    %v3147 = vld [vmem:[#allocation10 + $0x70] sm:$0xff]
    %v3148 = vld [vmem:[#allocation10 + $0x78] sm:$0xff]
    %s3149 = scalar_lea.vmem [#allocation16], 4
    %v3150 = vld [vmem:[%s3149] ss:$8 sm:$0x3]
    %v3152 = vperm.slane %v3150, 0
    %v3153 = vperm.slane %v3150, 1
    %v3172 = vunpack.c.l.b16 %v3133
    %v3173 = vunpack.c.h.b16 %v3133
    %v3174 = vunpack.c.l.b16 %v3134
    %v3175 = vunpack.c.h.b16 %v3134
    %v3176 = vunpack.c.l.b16 %v3135
    %v3177 = vunpack.c.h.b16 %v3135
    %v3178 = vunpack.c.l.b16 %v3136
    %v3179 = vunpack.c.h.b16 %v3136
    %v3180 = vunpack.c.l.b16 %v3137
    %v3181 = vunpack.c.h.b16 %v3137
    %v3182 = vunpack.c.l.b16 %v3138
    %v3183 = vunpack.c.h.b16 %v3138
    %v3184 = vunpack.c.l.b16 %v3139
    %v3185 = vunpack.c.h.b16 %v3139
    %v3186 = vunpack.c.l.b16 %v3140
    %v3187 = vunpack.c.h.b16 %v3140
    %v3188 = vunpack.c.l.b16 %v3141
    %v3189 = vunpack.c.h.b16 %v3141
    %v3190 = vunpack.c.l.b16 %v3142
    %v3191 = vunpack.c.h.b16 %v3142
    %v3192 = vunpack.c.l.b16 %v3143
    %v3193 = vunpack.c.h.b16 %v3143
    %v3194 = vunpack.c.l.b16 %v3144
    %v3195 = vunpack.c.h.b16 %v3144
    %v3196 = vunpack.c.l.b16 %v3145
    %v3197 = vunpack.c.h.b16 %v3145
    %v3198 = vunpack.c.l.b16 %v3146
    %v3199 = vunpack.c.h.b16 %v3146
    %v3200 = vunpack.c.l.b16 %v3147
    %v3201 = vunpack.c.h.b16 %v3147
    %v3202 = vunpack.c.l.b16 %v3148
    %v3203 = vunpack.c.h.b16 %v3148
    %v3204 = vpack.c.b16 %v3174, %v3172
    %v3205 = vpack.c.b16 %v3175, %v3173
    %v3206 = vpack.c.b16 %v3178, %v3176
    %v3207 = vpack.c.b16 %v3179, %v3177
    %v3208 = vpack.c.b16 %v3182, %v3180
    %v3209 = vpack.c.b16 %v3183, %v3181
    %v3210 = vpack.c.b16 %v3186, %v3184
    %v3211 = vpack.c.b16 %v3187, %v3185
    %v3212 = vpack.c.b16 %v3190, %v3188
    %v3213 = vpack.c.b16 %v3191, %v3189
    %v3214 = vpack.c.b16 %v3194, %v3192
    %v3215 = vpack.c.b16 %v3195, %v3193
    %v3216 = vpack.c.b16 %v3198, %v3196
    %v3217 = vpack.c.b16 %v3199, %v3197
    %v3218 = vpack.c.b16 %v3202, %v3200
    %v3219 = vpack.c.b16 %v3203, %v3201
    %3236 = vmatpush.bf16.msra.mxu0 %v3218
    %3237 = vmatpush.bf16.msra.mxu0 %v3216
    %3238 = vmatpush.bf16.msra.mxu0 %v3214
    %3239 = vmatpush.bf16.msra.mxu0 %v3212
    %3240 = vmatpush.bf16.msra.mxu0 %v3210
    %3241 = vmatpush.bf16.msra.mxu0 %v3208
    %3242 = vmatpush.bf16.msra.mxu0 %v3206
    %3243 = vmatpush.bf16.msra.mxu0 %v3204
    %3244 = vmatmul.bf16.gmra.mxu0 %v3132
    %v3245 = vpop.f32.mrf.mxu0
    %v3246 = vadd.f32 %v3152, %v3245
    %v3247 = vpop.f32.mrf.mxu0
    %3248 = vdwg.mxu0
    %3249 = vmatpush.bf16.msra.mxu0 %v3219
    %3250 = vmatpush.bf16.msra.mxu0 %v3217
    %3251 = vmatpush.bf16.msra.mxu0 %v3215
    %3252 = vmatpush.bf16.msra.mxu0 %v3213
    %3253 = vmatpush.bf16.msra.mxu0 %v3211
    %3254 = vmatpush.bf16.msra.mxu0 %v3209
    %3255 = vmatpush.bf16.msra.mxu0 %v3207
    %3256 = vmatpush.bf16.msra.mxu0 %v3205
    %3257 = vmatmul.bf16.gmra.mxu0 %v3132
    %v3258 = vpop.f32.mrf.mxu0
    %v3259 = vadd.f32 %v3153, %v3258
    %v3260 = vpop.f32.mrf.mxu0
    %3261 = vdwg.mxu0
    %v3262 = vmax.f32 %v3246, 0.0
    %v3263 = vmax.f32 %v3259, 0.0
    %v3264 = vmin.f32 %v3262, 6.0
    %v3265 = vmin.f32 %v3263, 6.0
    // Predicated region
    $region86: #{forward.1} parent=1 // pred_check
      %p3266 = pneg %p141
    $region87: #{forward.1} parent=1 // pred_check_branch
      %3268 = sbr.rel (%p3266) target = $region89
    $region88: #{forward.1} parent=1 // pred_region
      %s3269 = scalar_lea.sflag [#allocation5], 2
      %s3270 = smul.u32 4, 32
      %s3271 = smul.u32 %s3270, 2
      %s3272 = sshll.u32 %s3271, 4
      %3273 = dma.done %s3269, %s3272
    $region89: #{forward.1} parent=1 // pred_fallthru
      _
    %v3274 = vpack.c.bf16 %v3264, %v3264
    %v3275 = vpack.c.bf16 %v3265, %v3265
    %v3276 = vld [vmem:[#allocation4] sm:$0xff]
    %v3277 = vld [vmem:[#allocation4 + $0x8] sm:$0xff]
    %v3278 = vld [vmem:[#allocation4 + $0x10] sm:$0xff]
    %v3279 = vld [vmem:[#allocation4 + $0x18] sm:$0xff]
    %v3280 = vld [vmem:[#allocation4 + $0x20] sm:$0xff]
    %v3281 = vld [vmem:[#allocation4 + $0x28] sm:$0xff]
    %v3282 = vld [vmem:[#allocation4 + $0x30] sm:$0xff]
    %v3283 = vld [vmem:[#allocation4 + $0x38] sm:$0xff]
    %v3284 = vld [vmem:[#allocation4 + $0x40] sm:$0xff]
    %v3285 = vld [vmem:[#allocation4 + $0x48] sm:$0xff]
    %v3286 = vld [vmem:[#allocation4 + $0x50] sm:$0xff]
    %v3287 = vld [vmem:[#allocation4 + $0x58] sm:$0xff]
    %v3288 = vld [vmem:[#allocation4 + $0x60] sm:$0xff]
    %v3289 = vld [vmem:[#allocation4 + $0x68] sm:$0xff]
    %v3290 = vld [vmem:[#allocation4 + $0x70] sm:$0xff]
    %v3291 = vld [vmem:[#allocation4 + $0x78] sm:$0xff]
    %v3292 = vld [vmem:[#allocation4 + $0x80] sm:$0xff]
    %v3293 = vld [vmem:[#allocation4 + $0x88] sm:$0xff]
    %v3294 = vld [vmem:[#allocation4 + $0x90] sm:$0xff]
    %v3295 = vld [vmem:[#allocation4 + $0x98] sm:$0xff]
    %v3296 = vld [vmem:[#allocation4 + $0xa0] sm:$0xff]
    %v3297 = vld [vmem:[#allocation4 + $0xa8] sm:$0xff]
    %v3298 = vld [vmem:[#allocation4 + $0xb0] sm:$0xff]
    %v3299 = vld [vmem:[#allocation4 + $0xb8] sm:$0xff]
    %v3300 = vld [vmem:[#allocation4 + $0xc0] sm:$0xff]
    %v3301 = vld [vmem:[#allocation4 + $0xc8] sm:$0xff]
    %v3302 = vld [vmem:[#allocation4 + $0xd0] sm:$0xff]
    %v3303 = vld [vmem:[#allocation4 + $0xd8] sm:$0xff]
    %v3304 = vld [vmem:[#allocation4 + $0xe0] sm:$0xff]
    %v3305 = vld [vmem:[#allocation4 + $0xe8] sm:$0xff]
    %v3306 = vld [vmem:[#allocation4 + $0xf0] sm:$0xff]
    %v3307 = vld [vmem:[#allocation4 + $0xf8] sm:$0xff]
    %s3308 = scalar_lea.vmem [#allocation16], 5
    %v3309 = vld [vmem:[%s3308] ss:$8 sm:$0x3]
    %v3311 = vperm.slane %v3309, 0
    %v3312 = vperm.slane %v3309, 1
    %v3347 = vunpack.c.l.b16 %v3276
    %v3348 = vunpack.c.h.b16 %v3276
    %v3349 = vunpack.c.l.b16 %v3277
    %v3350 = vunpack.c.h.b16 %v3277
    %v3351 = vunpack.c.l.b16 %v3278
    %v3352 = vunpack.c.h.b16 %v3278
    %v3353 = vunpack.c.l.b16 %v3279
    %v3354 = vunpack.c.h.b16 %v3279
    %v3355 = vunpack.c.l.b16 %v3280
    %v3356 = vunpack.c.h.b16 %v3280
    %v3357 = vunpack.c.l.b16 %v3281
    %v3358 = vunpack.c.h.b16 %v3281
    %v3359 = vunpack.c.l.b16 %v3282
    %v3360 = vunpack.c.h.b16 %v3282
    %v3361 = vunpack.c.l.b16 %v3283
    %v3362 = vunpack.c.h.b16 %v3283
    %v3363 = vunpack.c.l.b16 %v3284
    %v3364 = vunpack.c.h.b16 %v3284
    %v3365 = vunpack.c.l.b16 %v3285
    %v3366 = vunpack.c.h.b16 %v3285
    %v3367 = vunpack.c.l.b16 %v3286
    %v3368 = vunpack.c.h.b16 %v3286
    %v3369 = vunpack.c.l.b16 %v3287
    %v3370 = vunpack.c.h.b16 %v3287
    %v3371 = vunpack.c.l.b16 %v3288
    %v3372 = vunpack.c.h.b16 %v3288
    %v3373 = vunpack.c.l.b16 %v3289
    %v3374 = vunpack.c.h.b16 %v3289
    %v3375 = vunpack.c.l.b16 %v3290
    %v3376 = vunpack.c.h.b16 %v3290
    %v3377 = vunpack.c.l.b16 %v3291
    %v3378 = vunpack.c.h.b16 %v3291
    %v3379 = vunpack.c.l.b16 %v3292
    %v3380 = vunpack.c.h.b16 %v3292
    %v3381 = vunpack.c.l.b16 %v3293
    %v3382 = vunpack.c.h.b16 %v3293
    %v3383 = vunpack.c.l.b16 %v3294
    %v3384 = vunpack.c.h.b16 %v3294
    %v3385 = vunpack.c.l.b16 %v3295
    %v3386 = vunpack.c.h.b16 %v3295
    %v3387 = vunpack.c.l.b16 %v3296
    %v3388 = vunpack.c.h.b16 %v3296
    %v3389 = vunpack.c.l.b16 %v3297
    %v3390 = vunpack.c.h.b16 %v3297
    %v3391 = vunpack.c.l.b16 %v3298
    %v3392 = vunpack.c.h.b16 %v3298
    %v3393 = vunpack.c.l.b16 %v3299
    %v3394 = vunpack.c.h.b16 %v3299
    %v3395 = vunpack.c.l.b16 %v3300
    %v3396 = vunpack.c.h.b16 %v3300
    %v3397 = vunpack.c.l.b16 %v3301
    %v3398 = vunpack.c.h.b16 %v3301
    %v3399 = vunpack.c.l.b16 %v3302
    %v3400 = vunpack.c.h.b16 %v3302
    %v3401 = vunpack.c.l.b16 %v3303
    %v3402 = vunpack.c.h.b16 %v3303
    %v3403 = vunpack.c.l.b16 %v3304
    %v3404 = vunpack.c.h.b16 %v3304
    %v3405 = vunpack.c.l.b16 %v3305
    %v3406 = vunpack.c.h.b16 %v3305
    %v3407 = vunpack.c.l.b16 %v3306
    %v3408 = vunpack.c.h.b16 %v3306
    %v3409 = vunpack.c.l.b16 %v3307
    %v3410 = vunpack.c.h.b16 %v3307
    %v3411 = vpack.c.b16 %v3349, %v3347
    %v3412 = vpack.c.b16 %v3350, %v3348
    %v3413 = vpack.c.b16 %v3353, %v3351
    %v3414 = vpack.c.b16 %v3354, %v3352
    %v3415 = vpack.c.b16 %v3357, %v3355
    %v3416 = vpack.c.b16 %v3358, %v3356
    %v3417 = vpack.c.b16 %v3361, %v3359
    %v3418 = vpack.c.b16 %v3362, %v3360
    %v3419 = vpack.c.b16 %v3365, %v3363
    %v3420 = vpack.c.b16 %v3366, %v3364
    %v3421 = vpack.c.b16 %v3369, %v3367
    %v3422 = vpack.c.b16 %v3370, %v3368
    %v3423 = vpack.c.b16 %v3373, %v3371
    %v3424 = vpack.c.b16 %v3374, %v3372
    %v3425 = vpack.c.b16 %v3377, %v3375
    %v3426 = vpack.c.b16 %v3378, %v3376
    %v3427 = vpack.c.b16 %v3381, %v3379
    %v3428 = vpack.c.b16 %v3382, %v3380
    %v3429 = vpack.c.b16 %v3385, %v3383
    %v3430 = vpack.c.b16 %v3386, %v3384
    %v3431 = vpack.c.b16 %v3389, %v3387
    %v3432 = vpack.c.b16 %v3390, %v3388
    %v3433 = vpack.c.b16 %v3393, %v3391
    %v3434 = vpack.c.b16 %v3394, %v3392
    %v3435 = vpack.c.b16 %v3397, %v3395
    %v3436 = vpack.c.b16 %v3398, %v3396
    %v3437 = vpack.c.b16 %v3401, %v3399
    %v3438 = vpack.c.b16 %v3402, %v3400
    %v3439 = vpack.c.b16 %v3405, %v3403
    %v3440 = vpack.c.b16 %v3406, %v3404
    %v3441 = vpack.c.b16 %v3409, %v3407
    %v3442 = vpack.c.b16 %v3410, %v3408
    %3475 = vmatpush.bf16.msra.mxu0 %v3425
    %3476 = vmatpush.bf16.msra.mxu0 %v3423
    %3477 = vmatpush.bf16.msra.mxu0 %v3421
    %3478 = vmatpush.bf16.msra.mxu0 %v3419
    %3479 = vmatpush.bf16.msra.mxu0 %v3417
    %3480 = vmatpush.bf16.msra.mxu0 %v3415
    %3481 = vmatpush.bf16.msra.mxu0 %v3413
    %3482 = vmatpush.bf16.msra.mxu0 %v3411
    %3483 = vmatmul.bf16.gmra.mxu0 %v3274
    %v3484 = vpop.f32.mrf.mxu0
    %v3485 = vadd.f32 %v3311, %v3484
    %v3486 = vpop.f32.mrf.mxu0
    %3487 = vdwg.mxu0
    %3488 = vmatpush.bf16.msra.mxu0 %v3441
    %3489 = vmatpush.bf16.msra.mxu0 %v3439
    %3490 = vmatpush.bf16.msra.mxu0 %v3437
    %3491 = vmatpush.bf16.msra.mxu0 %v3435
    %3492 = vmatpush.bf16.msra.mxu0 %v3433
    %3493 = vmatpush.bf16.msra.mxu0 %v3431
    %3494 = vmatpush.bf16.msra.mxu0 %v3429
    %3495 = vmatpush.bf16.msra.mxu0 %v3427
    %3496 = vmatmul.bf16.gmra.mxu0 %v3275
    %v3497 = vpop.f32.mrf.mxu0
    %v3498 = vadd.f32 %v3485, %v3497
    %v3499 = vpop.f32.mrf.mxu0
    %3500 = vdwg.mxu0
    %3501 = vmatpush.bf16.msra.mxu0 %v3426
    %3502 = vmatpush.bf16.msra.mxu0 %v3424
    %3503 = vmatpush.bf16.msra.mxu0 %v3422
    %3504 = vmatpush.bf16.msra.mxu0 %v3420
    %3505 = vmatpush.bf16.msra.mxu0 %v3418
    %3506 = vmatpush.bf16.msra.mxu0 %v3416
    %3507 = vmatpush.bf16.msra.mxu0 %v3414
    %3508 = vmatpush.bf16.msra.mxu0 %v3412
    %3509 = vmatmul.bf16.gmra.mxu0 %v3274
    %v3510 = vpop.f32.mrf.mxu0
    %v3511 = vadd.f32 %v3312, %v3510
    %v3512 = vpop.f32.mrf.mxu0
    %3513 = vdwg.mxu0
    %3514 = vmatpush.bf16.msra.mxu0 %v3442
    %3515 = vmatpush.bf16.msra.mxu0 %v3440
    %3516 = vmatpush.bf16.msra.mxu0 %v3438
    %3517 = vmatpush.bf16.msra.mxu0 %v3436
    %3518 = vmatpush.bf16.msra.mxu0 %v3434
    %3519 = vmatpush.bf16.msra.mxu0 %v3432
    %3520 = vmatpush.bf16.msra.mxu0 %v3430
    %3521 = vmatpush.bf16.msra.mxu0 %v3428
    %3522 = vmatmul.bf16.gmra.mxu0 %v3275
    %v3523 = vpop.f32.mrf.mxu0
    %v3524 = vadd.f32 %v3511, %v3523
    %v3525 = vpop.f32.mrf.mxu0
    %3526 = vdwg.mxu0
    %v3527 = vmax.f32 %v3498, 0.0
    %v3528 = vmax.f32 %v3524, 0.0
    %v3529 = vmin.f32 %v3527, 6.0
    %v3530 = vmin.f32 %v3528, 6.0
    %v3531 = vpack.c.bf16 %v3529, %v3529
    %v3532 = vpack.c.bf16 %v3530, %v3530
    %v3533 = vld [vmem:[#allocation11] sm:$0xf]
    %v3534 = vld [vmem:[#allocation11 + $0x4] sm:$0xf]
    %v3535 = vld [vmem:[#allocation11 + $0x8] sm:$0xf]
    %v3536 = vld [vmem:[#allocation11 + $0xc] sm:$0xf]
    %v3537 = vld [vmem:[#allocation11 + $0x10] sm:$0xf]
    %v3538 = vld [vmem:[#allocation11 + $0x14] sm:$0xf]
    %v3539 = vld [vmem:[#allocation11 + $0x18] sm:$0xf]
    %v3540 = vld [vmem:[#allocation11 + $0x1c] sm:$0xf]
    %v3541 = vld [vmem:[#allocation11 + $0x20] sm:$0xf]
    %v3542 = vld [vmem:[#allocation11 + $0x24] sm:$0xf]
    %v3543 = vld [vmem:[#allocation11 + $0x28] sm:$0xf]
    %v3544 = vld [vmem:[#allocation11 + $0x2c] sm:$0xf]
    %v3545 = vld [vmem:[#allocation11 + $0x30] sm:$0xf]
    %v3546 = vld [vmem:[#allocation11 + $0x34] sm:$0xf]
    %v3547 = vld [vmem:[#allocation11 + $0x38] sm:$0xf]
    %v3548 = vld [vmem:[#allocation11 + $0x3c] sm:$0xf]
    %v3549 = vld [vmem:[#allocation11 + $0x40] sm:$0xf]
    %v3550 = vld [vmem:[#allocation11 + $0x44] sm:$0xf]
    %v3551 = vld [vmem:[#allocation11 + $0x48] sm:$0xf]
    %v3552 = vld [vmem:[#allocation11 + $0x4c] sm:$0xf]
    %v3553 = vld [vmem:[#allocation11 + $0x50] sm:$0xf]
    %v3554 = vld [vmem:[#allocation11 + $0x54] sm:$0xf]
    %v3555 = vld [vmem:[#allocation11 + $0x58] sm:$0xf]
    %v3556 = vld [vmem:[#allocation11 + $0x5c] sm:$0xf]
    %v3557 = vld [vmem:[#allocation11 + $0x60] sm:$0xf]
    %v3558 = vld [vmem:[#allocation11 + $0x64] sm:$0xf]
    %v3559 = vld [vmem:[#allocation11 + $0x68] sm:$0xf]
    %v3560 = vld [vmem:[#allocation11 + $0x6c] sm:$0xf]
    %v3561 = vld [vmem:[#allocation11 + $0x70] sm:$0xf]
    %v3562 = vld [vmem:[#allocation11 + $0x74] sm:$0xf]
    %v3563 = vld [vmem:[#allocation11 + $0x78] sm:$0xf]
    %v3564 = vld [vmem:[#allocation11 + $0x7c] sm:$0xf]
    %v3565 = vld [vmem:[#allocation16 + $0x6] ss:$0 sm:$0xff]
    %v3598 = vunpack.c.l.b16 %v3533
    %v3599 = vunpack.c.l.b16 %v3534
    %v3600 = vunpack.c.l.b16 %v3535
    %v3601 = vunpack.c.l.b16 %v3536
    %v3602 = vunpack.c.l.b16 %v3537
    %v3603 = vunpack.c.l.b16 %v3538
    %v3604 = vunpack.c.l.b16 %v3539
    %v3605 = vunpack.c.l.b16 %v3540
    %v3606 = vunpack.c.l.b16 %v3541
    %v3607 = vunpack.c.l.b16 %v3542
    %v3608 = vunpack.c.l.b16 %v3543
    %v3609 = vunpack.c.l.b16 %v3544
    %v3610 = vunpack.c.l.b16 %v3545
    %v3611 = vunpack.c.l.b16 %v3546
    %v3612 = vunpack.c.l.b16 %v3547
    %v3613 = vunpack.c.l.b16 %v3548
    %v3614 = vunpack.c.l.b16 %v3549
    %v3615 = vunpack.c.l.b16 %v3550
    %v3616 = vunpack.c.l.b16 %v3551
    %v3617 = vunpack.c.l.b16 %v3552
    %v3618 = vunpack.c.l.b16 %v3553
    %v3619 = vunpack.c.l.b16 %v3554
    %v3620 = vunpack.c.l.b16 %v3555
    %v3621 = vunpack.c.l.b16 %v3556
    %v3622 = vunpack.c.l.b16 %v3557
    %v3623 = vunpack.c.l.b16 %v3558
    %v3624 = vunpack.c.l.b16 %v3559
    %v3625 = vunpack.c.l.b16 %v3560
    %v3626 = vunpack.c.l.b16 %v3561
    %v3627 = vunpack.c.l.b16 %v3562
    %v3628 = vunpack.c.l.b16 %v3563
    %v3629 = vunpack.c.l.b16 %v3564
    %v3630 = vpack.c.b16 %v3599, %v3598
    %v3631 = vpack.c.b16 %v3601, %v3600
    %v3632 = vpack.c.b16 %v3603, %v3602
    %v3633 = vpack.c.b16 %v3605, %v3604
    %v3634 = vpack.c.b16 %v3607, %v3606
    %v3635 = vpack.c.b16 %v3609, %v3608
    %v3636 = vpack.c.b16 %v3611, %v3610
    %v3637 = vpack.c.b16 %v3613, %v3612
    %v3638 = vpack.c.b16 %v3615, %v3614
    %v3639 = vpack.c.b16 %v3617, %v3616
    %v3640 = vpack.c.b16 %v3619, %v3618
    %v3641 = vpack.c.b16 %v3621, %v3620
    %v3642 = vpack.c.b16 %v3623, %v3622
    %v3643 = vpack.c.b16 %v3625, %v3624
    %v3644 = vpack.c.b16 %v3627, %v3626
    %v3645 = vpack.c.b16 %v3629, %v3628
    %3662 = vmatpush.bf16.msra.mxu0 %v3637
    %3663 = vmatpush.bf16.msra.mxu0 %v3636
    %3664 = vmatpush.bf16.msra.mxu0 %v3635
    %3665 = vmatpush.bf16.msra.mxu0 %v3634
    %3666 = vmatpush.bf16.msra.mxu0 %v3633
    %3667 = vmatpush.bf16.msra.mxu0 %v3632
    %3668 = vmatpush.bf16.msra.mxu0 %v3631
    %3669 = vmatpush.bf16.msra.mxu0 %v3630
    %3670 = vmatmul.bf16.gmra.mxu0 %v3531
    %v3671 = vpop.f32.mrf.mxu0
    %v3672 = vadd.f32 %v3565, %v3671
    %v3673 = vpop.f32.mrf.mxu0
    %3674 = vdwg.mxu0
    %3675 = vmatpush.bf16.msra.mxu0 %v3645
    %3676 = vmatpush.bf16.msra.mxu0 %v3644
    %3677 = vmatpush.bf16.msra.mxu0 %v3643
    %3678 = vmatpush.bf16.msra.mxu0 %v3642
    %3679 = vmatpush.bf16.msra.mxu0 %v3641
    %3680 = vmatpush.bf16.msra.mxu0 %v3640
    %3681 = vmatpush.bf16.msra.mxu0 %v3639
    %3682 = vmatpush.bf16.msra.mxu0 %v3638
    %3683 = vmatmul.bf16.gmra.mxu0 %v3532
    %v3684 = vpop.f32.mrf.mxu0
    %v3685 = vadd.f32 %v3672, %v3684
    %v3686 = vpop.f32.mrf.mxu0
    %3687 = vdwg.mxu0
    %v3688 = vmax.f32 %v3685, 0.0
    %v3689 = vmin.f32 %v3688, 6.0
    %v3690 = vld [vmem:[#allocation16 + $0x20] ss:$0 sm:$0xff]
    %v3691 = vpack.c.bf16 %v3689, %v3689
    %v3692 = vld [vmem:[#allocation13] sm:$0xf]
    %v3693 = vld [vmem:[#allocation13 + $0x4] sm:$0xf]
    %v3694 = vld [vmem:[#allocation13 + $0x8] sm:$0xf]
    %v3695 = vld [vmem:[#allocation13 + $0xc] sm:$0xf]
    %v3696 = vld [vmem:[#allocation13 + $0x10] sm:$0xf]
    %v3697 = vld [vmem:[#allocation13 + $0x14] sm:$0xf]
    %v3698 = vld [vmem:[#allocation13 + $0x18] sm:$0xf]
    %v3699 = vld [vmem:[#allocation13 + $0x1c] sm:$0xf]
    %v3700 = vld [vmem:[#allocation13 + $0x20] sm:$0xf]
    %v3701 = vld [vmem:[#allocation13 + $0x24] sm:$0xf]
    %v3702 = vld [vmem:[#allocation13 + $0x28] sm:$0xf]
    %v3703 = vld [vmem:[#allocation13 + $0x2c] sm:$0xf]
    %v3704 = vld [vmem:[#allocation13 + $0x30] sm:$0xf]
    %v3705 = vld [vmem:[#allocation13 + $0x34] sm:$0xf]
    %v3706 = vld [vmem:[#allocation13 + $0x38] sm:$0xf]
    %v3707 = vld [vmem:[#allocation13 + $0x3c] sm:$0xf]
    %v3708 = vld [vmem:[#allocation16 + $0x7] ss:$0 sm:$0xff]
    %v3725 = vunpack.c.l.b16 %v3692
    %v3726 = vunpack.c.l.b16 %v3693
    %v3727 = vunpack.c.l.b16 %v3694
    %v3728 = vunpack.c.l.b16 %v3695
    %v3729 = vunpack.c.l.b16 %v3696
    %v3730 = vunpack.c.l.b16 %v3697
    %v3731 = vunpack.c.l.b16 %v3698
    %v3732 = vunpack.c.l.b16 %v3699
    %v3733 = vunpack.c.l.b16 %v3700
    %v3734 = vunpack.c.l.b16 %v3701
    %v3735 = vunpack.c.l.b16 %v3702
    %v3736 = vunpack.c.l.b16 %v3703
    %v3737 = vunpack.c.l.b16 %v3704
    %v3738 = vunpack.c.l.b16 %v3705
    %v3739 = vunpack.c.l.b16 %v3706
    %v3740 = vunpack.c.l.b16 %v3707
    %v3741 = vpack.c.b16 %v3726, %v3725
    %v3742 = vpack.c.b16 %v3728, %v3727
    %v3743 = vpack.c.b16 %v3730, %v3729
    %v3744 = vpack.c.b16 %v3732, %v3731
    %v3745 = vpack.c.b16 %v3734, %v3733
    %v3746 = vpack.c.b16 %v3736, %v3735
    %v3747 = vpack.c.b16 %v3738, %v3737
    %v3748 = vpack.c.b16 %v3740, %v3739
    %3757 = vmatpush.bf16.msra.mxu0 %v3748
    %3758 = vmatpush.bf16.msra.mxu0 %v3747
    %3759 = vmatpush.bf16.msra.mxu0 %v3746
    %3760 = vmatpush.bf16.msra.mxu0 %v3745
    %3761 = vmatpush.bf16.msra.mxu0 %v3744
    %3762 = vmatpush.bf16.msra.mxu0 %v3743
    %3763 = vmatpush.bf16.msra.mxu0 %v3742
    %3764 = vmatpush.bf16.msra.mxu0 %v3741
    %3765 = vmatmul.bf16.gmra.mxu0 %v3691
    %v3766 = vpop.f32.mrf.mxu0
    %v3767 = vadd.f32 %v3708, %v3766
    %v3768 = vpop.f32.mrf.mxu0
    %3769 = vdwg.mxu0
    %v3770 = vtanh.pop %v3767
    %v3771 = vmul.f32 %v3690, %v3770
    %3772 = vst [vmem:[%s11] sm:$0xff] %v3771
    // Predicated region
    $region90: #{forward.1} parent=1 // pred_check
      _
    $region91: #{forward.1} parent=1 // pred_check_branch
      %3774 = sbr.rel (0) target = $region93
    $region92: #{forward.1} parent=1 // pred_region
      _
    $region93: #{forward.1} parent=1 // pred_fallthru
      _
    // Predicated region
    $region94: #{forward.1} parent=1 // pred_check
      _
    $region95: #{forward.1} parent=1 // pred_check_branch
      %3776 = sbr.rel (0) target = $region97
    $region96: #{forward.1} parent=1 // pred_region
      _
    $region97: #{forward.1} parent=1 // pred_fallthru
      _
    %3777 = vsyncpa [#allocation7], 1
    %3778 = vsyncpa [#allocation9], 1
    %3779 = vsyncpa [#allocation12], 1
    %3780 = vsyncpa [#allocation15], 1
  %3781 = vsyncmov [#allocation5]
  %s3782 = vpop.sfrf %3781
  %p3783 = scmp.eq.s32.totalorder %s3782, 0
  %p3784 = pneg %p3783
  %3786 = shalt.err (%p3784)
  %s3787 = scalar_lea.sflag [#allocation5], 1
  %3788 = vsyncmov %s3787
  %s3789 = vpop.sfrf %3788
  %p3790 = scmp.eq.s32.totalorder %s3789, 0
  %p3791 = pneg %p3790
  %3793 = shalt.err (%p3791)
  %s3794 = scalar_lea.sflag [#allocation5], 2
  %3795 = vsyncmov %s3794
  %s3796 = vpop.sfrf %3795
  %p3797 = scmp.eq.s32.totalorder %s3796, 0
  %p3798 = pneg %p3797
  %3800 = shalt.err (%p3798)

</llo_original>
